<compile_context>
chip_gen: v7x
topology: tpu7x:2x2x1
jax: 0.10.0
libtpu: 0.0.40
codegen_flags: <defaults>
</compile_context>

<pallas_src>
import numpy as np
import jax
import jax.numpy as jnp
from jax import lax
from jax.experimental import pallas as pl
from jax.experimental.pallas import tpu as pltpu


TILE_M_MAX = 512    # big tiles -> few grid steps; M>512 still splits (feeds 2 TCs on v7x)
TILE_K_MAX = 1024   # tk == Kp (single K step, accumulator bypass) whenever Kp <= 1024
TILE_N = 128        # lane-dense output stores


def _round_up(x, m):
    return (x + m - 1) // m * m


def _cdiv(a, b):
    return -(-a // b)


def _k_tiling(K):
    Kp0 = _round_up(K, 128)
    nk = _cdiv(Kp0, TILE_K_MAX)
    tk = _round_up(_cdiv(Kp0, nk), 128)
    return tk * nk, tk, nk          # (Kp, tk, nk) with Kp == tk * nk


def _m_tiling(M):
    nm = _cdiv(M, TILE_M_MAX)
    tm = _round_up(_cdiv(M, nm), 16)   # 16: bf16 sublane packing for A / out tiles
    return tm * nm, tm, nm


_VMEM_LIMIT = None


def _vmem_limit_bytes():
    """Per-generation VMEM request (v7x has 64 MiB physical vs 128 on v5e/v6e)."""
    global _VMEM_LIMIT
    if _VMEM_LIMIT is None:
        try:
            cap = int(pltpu.get_tpu_info().vmem_capacity_bytes)
        except Exception:   # not queryable: fall back to the smallest (v7x) budget
            cap = 64 * 1024 * 1024
        _VMEM_LIMIT = max(32 * 1024 * 1024, min(cap * 3 // 4, 96 * 1024 * 1024))
    return _VMEM_LIMIT


# ----------------------------- Pallas kernel --------------------------------

def _make_kernel(fuse, softplus_col0, multi_k):
    """Fused (BN+ReLU prologue) -> bf16 MXU matmul (-> softplus on global col 0).

    Grid axes: (phase, m, n, k); k (reduction) is innermost / "arbitrary".
    When multi_k is False (nk == 1) the dot result is stored directly and no
    accumulator scratch exists (saves three full passes over the output tile).
    """

    def _store(o_ref, res):
        if softplus_col0:
            j = pl.program_id(2)
            col0 = lax.broadcasted_iota(jnp.int32, res.shape, 1) == 0

            def sp_of(r):
                return jnp.maximum(r, 0.0) + jnp.log1p(jnp.exp(-jnp.abs(r)))

            if multi_k:
                # already inside a pl.when(finalize); fold tile test into the mask
                o_ref[...] = jnp.where(jnp.logical_and(col0, j == 0),
                                       sp_of(res), res).astype(o_ref.dtype)
            else:
                @pl.when(j == 0)
                def _():
                    o_ref[...] = jnp.where(col0, sp_of(res), res).astype(o_ref.dtype)

                @pl.when(j != 0)
                def _():
                    o_ref[...] = res.astype(o_ref.dtype)
        else:
            o_ref[...] = res.astype(o_ref.dtype)

    def kernel(*refs):
        if fuse:
            a_ref, s_ref, h_ref, b_ref, o_ref = refs[:5]
        else:
            a_ref, b_ref, o_ref = refs[:3]
        acc_ref = refs[-1] if multi_k else None

        a = a_ref[...]
        if fuse:
            # eval-mode BatchNorm (folded scale/shift) + ReLU on the A tile.
            # Kept in f32 (v5e has no bf16 VALU); exactly mul+add+max+cast.
            # TODO(synk): bf16 prologue on v6e/v7x would halve VPU passes.
            a = jnp.maximum(a.astype(jnp.float32) * s_ref[...] + h_ref[...],
                            0.0).astype(jnp.bfloat16)
        part = jnp.dot(a, b_ref[...], preferred_element_type=jnp.float32)

        if multi_k:
            k = pl.program_id(3)

            @pl.when(k == 0)
            def _():
                acc_ref[...] = part

            @pl.when(k > 0)
            def _():
                acc_ref[...] += part

            @pl.when(k == pl.num_programs(3) - 1)
            def _():
                _store(o_ref, acc_ref[...])
        else:
            _store(o_ref, part)

    return kernel


def pallas_conv_matmul(a, b, scale=None, shift=None, *, tk,
                       softplus_col0=False, out_dtype=jnp.bfloat16):
    """out[p] = [relu(a[p]*scale[p] + shift[p])] @ b[p]  (+ softplus on col 0).

    a: [P, M, Kp] bf16 (already K-padded), b: [P, Kp, Np] bf16 (pre-packed),
    scale/shift: [P, 1, Kp] f32 or None.  Returns padded [P, Mp, Np] out_dtype.
    """
    P, M, Kp = a.shape
    Pb, Kpb, Np = b.shape
    assert P == Pb and Kp == Kpb and Kp % tk == 0 and Np % TILE_N == 0
    nk = Kp // tk
    Mp, tm, nm = _m_tiling(M)
    nn = Np // TILE_N
    fuse = scale is not None
    multi_k = nk > 1

    a_p = a if Mp == M else jnp.pad(a, ((0, 0), (0, Mp - M), (0, 0)))

    in_specs = [pl.BlockSpec((None, tm, tk), lambda p, i, j, k: (p, i, k))]
    args = [a_p]
    if fuse:
        in_specs += [pl.BlockSpec((None, 1, tk), lambda p, i, j, k: (p, 0, k)),
                     pl.BlockSpec((None, 1, tk), lambda p, i, j, k: (p, 0, k))]
        args += [scale, shift]
    in_specs.append(pl.BlockSpec((None, tk, TILE_N), lambda p, i, j, k: (p, k, j)))
    args.append(b)

    return pl.pallas_call(
        _make_kernel(fuse, softplus_col0, multi_k),
        out_shape=jax.ShapeDtypeStruct((P, Mp, Np), out_dtype),
        grid=(P, nm, nn, nk),
        in_specs=in_specs,
        out_specs=pl.BlockSpec((None, tm, TILE_N), lambda p, i, j, k: (p, i, j)),
        scratch_shapes=(
            [pltpu.VMEM((tm, TILE_N), jnp.float32)] if multi_k else []),
        compiler_params=pltpu.CompilerParams(
            dimension_semantics=("parallel", "parallel", "parallel", "arbitrary"),
            vmem_limit_bytes=_vmem_limit_bytes()),
    )(*args)


# ------------------------- conv glue (im2col in JAX) ------------------------

def _im2col(xp, kh, kw, stride, Ho, Wo):
    """xp: [N, Hp, Wp, C] -> [N*Ho*Wo, kh*kw*C] in (kh, kw, C) column order."""
    N, _, _, C = xp.shape
    patches = []
    for i in range(kh):
        for j in range(kw):
            patches.append(xp[:, i:i + stride * Ho:stride,
                              j:j + stride * Wo:stride, :])
    P = jnp.stack(patches, axis=3)                  # [N, Ho, Wo, kh*kw, C]
    return P.reshape(N * Ho * Wo, kh * kw * C)
    # TODO(synk): building patches per M-tile inside the kernel (manual DMA)
    # would avoid materializing the im2col matrix in HBM entirely.


def _weight_matrix(w_oihw):
    """[Cout, Cin, kh, kw] -> [kh*kw*Cin, Cout] matching _im2col column order."""
    Cout, Cin, kh, kw = w_oihw.shape
    return jnp.transpose(w_oihw, (2, 3, 1, 0)).reshape(kh * kw * Cin, Cout)


def _bn_pad_value(scale, shift):
    # Per-channel value v with relu(v*scale + shift) ~= 0, so spatial padding
    # (applied AFTER BN+ReLU in PyTorch) passes through the fused prologue.
    # Residual is O(|shift| * bf16 eps).  Fallback 0 if scale == 0 (would then
    # contribute relu(shift); impossible with the init used here).
    safe = jnp.where(scale != 0.0, scale, 1.0)
    return jnp.where(scale != 0.0, -shift / safe, 0.0)


# --------------------------- one-time weight packing -------------------------

def _pack_conv(w_oihw, scale, shift, *, stride, pad):
    """Pre-pack a Conv2d (optionally preceded by BN+ReLU) for the matmul kernel."""
    Cout, Cin, kh, kw = w_oihw.shape
    K = kh * kw * Cin
    Kp, tk, _ = _k_tiling(K)
    Np = _round_up(Cout, TILE_N)
    wm = _weight_matrix(w_oihw.astype(jnp.float32))
    b = jnp.pad(wm, ((0, Kp - K), (0, Np - Cout))).astype(jnp.bfloat16)[None]
    packed = dict(w=b, kh=kh, kw=kw, stride=stride, pad=pad, Cin=Cin, Cout=Cout,
                  K=K, Kp=Kp, Np=Np, tk=tk, scale=None, shift=None, pv=None)
    if scale is not None:
        ntap = kh * kw
        packed['scale'] = jnp.pad(jnp.tile(scale.astype(jnp.float32), ntap),
                                  (0, Kp - K)).reshape(1, 1, Kp)
        packed['shift'] = jnp.pad(jnp.tile(shift.astype(jnp.float32), ntap),
                                  (0, Kp - K)).reshape(1, 1, Kp)
        packed['pv'] = _bn_pad_value(scale, shift).astype(jnp.bfloat16)
    return packed


def _pack_convT(w_iohw, scale, shift, *, stride, pad):
    """Pre-pack BN+ReLU -> ConvTranspose2d via sub-pixel (stride^2) decomposition.

    For output phase (oy%s, ox%s), only kernel taps ky with
    (ry + ky - (k-1-pad)) % s == 0 contribute, and they read the UN-dilated
    input at offset dy = (ry + ky - (k-1-pad)) // s -- i.e. each phase is an
    ordinary small stride-1 conv.  The s*s phases are stacked on a leading
    (squeezed) grid axis of a single pallas_call.
    """
    Cin, Cout, k, _ = w_iohw.shape
    # equivalent direct-conv weight: flip spatially, swap in/out channel axes.
    w_conv = jnp.transpose(w_iohw[:, :, ::-1, ::-1], (1, 0, 2, 3)).astype(jnp.float32)
    p2 = k - 1 - pad
    phases, subws = [], []
    for ry in range(stride):
        for rx in range(stride):
            kys = [ky for ky in range(k) if (ry + ky - p2) % stride == 0]
            kxs = [kx for kx in range(k) if (rx + kx - p2) % stride == 0]
            dys = tuple((ry + ky - p2) // stride for ky in kys)
            dxs = tuple((rx + kx - p2) // stride for kx in kxs)
            subws.append(w_conv[:, :, kys, :][:, :, :, kxs])   # [Cout, Cin, ty, tx]
            phases.append(dict(ry=ry, rx=rx, dys=dys, dxs=dxs))
    Kmax = max(w.shape[2] * w.shape[3] * Cin for w in subws)
    Kp, tk, _ = _k_tiling(Kmax)
    Np = _round_up(Cout, TILE_N)
    bs, ss, hs = [], [], []
    for wsub in subws:
        wm = _weight_matrix(wsub)                              # [ty*tx*Cin, Cout]
        K = wm.shape[0]
        ntap = K // Cin
        bs.append(jnp.pad(wm, ((0, Kp - K), (0, Np - Cout))))
        ss.append(jnp.pad(jnp.tile(scale.astype(jnp.float32), ntap), (0, Kp - K)))
        hs.append(jnp.pad(jnp.tile(shift.astype(jnp.float32), ntap), (0, Kp - K)))
    P = stride * stride
    return dict(w=jnp.stack(bs).astype(jnp.bfloat16),
                scale=jnp.stack(ss).reshape(P, 1, Kp),
                shift=jnp.stack(hs).reshape(P, 1, Kp),
                phases=phases, stride=stride, k=k, pad=pad,
                Cin=Cin, Cout=Cout, Kp=Kp, Np=Np, tk=tk,
                pv=_bn_pad_value(scale, shift).astype(jnp.bfloat16))


# ------------------------------ layer execution ------------------------------

def run_conv(x, p, out_dtype=jnp.bfloat16):
    """[BN+ReLU ->] Conv2d via one fused Pallas matmul."""
    N, H, W, C = x.shape
    kh, kw, s, pad = p['kh'], p['kw'], p['stride'], p['pad']
    Ho = (H + 2 * pad - kh) // s + 1
    Wo = (W + 2 * pad - kw) // s + 1
    if pad > 0:
        if p['pv'] is None:                        # stem conv: plain zero padding
            xp = jnp.pad(x, ((0, 0), (pad, pad), (pad, pad), (0, 0)))
        else:                                      # pad-after-BN+ReLU sentinel
            Hp, Wp = H + 2 * pad, W + 2 * pad
            xp = jnp.broadcast_to(p['pv'].reshape(1, 1, 1, C), (N, Hp, Wp, C))
            xp = xp.at[:, pad:pad + H, pad:pad + W, :].set(x)
    else:
        xp = x
    A = _im2col(xp, kh, kw, s, Ho, Wo)
    A = jnp.pad(A, ((0, 0), (0, p['Kp'] - p['K'])))[None]      # [1, M, Kp] bf16
    out = pallas_conv_matmul(A, p['w'], p['scale'], p['shift'], tk=p['tk'],
                             out_dtype=out_dtype)
    M = N * Ho * Wo
    return out[0, :M, :p['Cout']].reshape(N, Ho, Wo, p['Cout'])


def run_convT(x, p, softplus_col0=False, out_dtype=jnp.bfloat16):
    """BN+ReLU -> ConvTranspose2d via sub-pixel phases, one fused pallas_call."""
    N, H, W, C = x.shape
    s, k, pad, Cout = p['stride'], p['k'], p['pad'], p['Cout']
    Ho = (H - 1) * s - 2 * pad + k
    Wo = (W - 1) * s - 2 * pad + k
    a_list, q_list = [], []
    for ph in p['phases']:
        dys, dxs = ph['dys'], ph['dxs']
        ty, tx = len(dys), len(dxs)
        Qy = len(range(ph['ry'], Ho, s))
        Qx = len(range(ph['rx'], Wo, s))
        padt = max(0, -dys[0])
        padb = max(0, Qy - 1 + dys[-1] - (H - 1))
        padl = max(0, -dxs[0])
        padr = max(0, Qx - 1 + dxs[-1] - (W - 1))
        Hp, Wp = H + padt + padb, W + padl + padr
        xp = jnp.broadcast_to(p['pv'].reshape(1, 1, 1, C), (N, Hp, Wp, C))
        xp = xp.at[:, padt:padt + H, padl:padl + W, :].set(x)
        oy, ox = padt + dys[0], padl + dxs[0]
        xs = xp[:, oy:oy + ty - 1 + Qy, ox:ox + tx - 1 + Qx, :]
        a = _im2col(xs, ty, tx, 1, Qy, Qx)                     # [N*Qy*Qx, ty*tx*C]
        a = jnp.pad(a, ((0, 0), (0, p['Kp'] - a.shape[1])))
        a_list.append(a)
        q_list.append((Qy, Qx))
    Mmax = max(a.shape[0] for a in a_list)
    A = jnp.stack([jnp.pad(a, ((0, Mmax - a.shape[0]), (0, 0))) for a in a_list])
    out = pallas_conv_matmul(A, p['w'], p['scale'], p['shift'], tk=p['tk'],
                             softplus_col0=softplus_col0, out_dtype=out_dtype)
    y = jnp.zeros((N, Ho, Wo, Cout), out_dtype)
    for i, ph in enumerate(p['phases']):
        Qy, Qx = q_list[i]
        blk = out[i, :N * Qy * Qx, :Cout].reshape(N, Qy, Qx, Cout)
        y = y.at[:, ph['ry']::s, ph['rx']::s, :].set(blk)
    return y


# ----------------------------- parameter handling ----------------------------

def init_params(key, in_channels, out_channels, blocks, growth_rate,
                num_init_features, outsize_even=True):
    keys = jax.random.split(key, 256)
    kidx = [0]

    def nk():
        k = keys[kidx[0]]
        kidx[0] += 1
        return k

    def conv_w(cout, cin, kh, kw):
        fan = cin * kh * kw
        return (jax.random.normal(nk(), (cout, cin, kh, kw), jnp.float32)
                / np.sqrt(fan))

    def convT_w(cin, cout, kh, kw):
        fan = cin * kh * kw
        return (jax.random.normal(nk(), (cin, cout, kh, kw), jnp.float32)
                / np.sqrt(fan))

    def bn(c):
        gamma = 1.0 + 0.1 * jax.random.normal(nk(), (c,), jnp.float32)
        beta = 0.1 * jax.random.normal(nk(), (c,), jnp.float32)
        mean = 0.1 * jax.random.normal(nk(), (c,), jnp.float32)
        var = 1.0 + 0.1 * jax.random.uniform(nk(), (c,), jnp.float32)
        eps = 1e-5
        scale = gamma / jnp.sqrt(var + eps)
        shift = beta - mean * scale
        return (scale, shift)

    enc_layers = blocks[:len(blocks) // 2]
    dec_layers = blocks[len(blocks) // 2:]

    params = {'in_conv': conv_w(num_init_features, in_channels, 7, 7)}
    nf = num_init_features

    enc = []
    for num_l in enc_layers:
        blk = []
        for i in range(num_l):
            cin = nf + i * growth_rate
            blk.append({'bn': bn(cin), 'conv': conv_w(growth_rate, cin, 3, 3)})
        nf = nf + num_l * growth_rate
        trans = {'bn1': bn(nf), 'conv1': conv_w(nf // 2, nf, 1, 1),
                 'bn2': bn(nf // 2), 'conv2': conv_w(nf // 2, nf // 2, 3, 3)}
        nf = nf // 2
        enc.append({'block': blk, 'trans': trans})

    dec = []
    for bi, num_l in enumerate(dec_layers):
        blk = []
        for i in range(num_l):
            cin = nf + i * growth_rate
            blk.append({'bn': bn(cin), 'conv': conv_w(growth_rate, cin, 3, 3)})
        nf = nf + num_l * growth_rate
        last = (bi == len(dec_layers) - 1)
        if last:
            ks = 6 if outsize_even else 3
            convT = convT_w(nf // 2, out_channels, ks, ks)
        else:
            convT = convT_w(nf // 2, nf // 2, 3, 3)
        trans = {'bn1': bn(nf), 'conv1': conv_w(nf // 2, nf, 1, 1),
                 'bn2': bn(nf // 2), 'convT': convT}
        nf = nf // 2
        dec.append({'block': blk, 'trans': trans})

    params['enc'] = enc
    params['dec'] = dec
    return params


def prepare_plan(params):
    """One-time packing: matmul-ready [Kp, Np] bf16 weights, tiled BN rows,
    convT sub-pixel decomposition (no per-forward transpose/pad/cast chains)."""
    plan = {'in_conv': _pack_conv(params['in_conv'], None, None, stride=2, pad=3)}
    enc = []
    for blk in params['enc']:
        layers = [_pack_conv(lp['conv'], *lp['bn'], stride=1, pad=1)
                  for lp in blk['block']]
        t = blk['trans']
        enc.append({'block': layers, 'trans': {
            'conv1': _pack_conv(t['conv1'], *t['bn1'], stride=1, pad=0),
            'conv2': _pack_conv(t['conv2'], *t['bn2'], stride=2, pad=1)}})
    dec = []
    for blk in params['dec']:
        layers = [_pack_conv(lp['conv'], *lp['bn'], stride=1, pad=1)
                  for lp in blk['block']]
        t = blk['trans']
        dec.append({'block': layers, 'trans': {
            'conv1': _pack_conv(t['conv1'], *t['bn1'], stride=1, pad=0),
            'convT': _pack_convT(t['convT'], *t['bn2'], stride=2, pad=1)}})
    plan['enc'] = enc
    plan['dec'] = dec
    return plan


# ---------------------------------- forward ----------------------------------

def dense_ed_forward(plan, x_nchw):
    x = jnp.transpose(x_nchw, (0, 2, 3, 1)).astype(jnp.bfloat16)   # NCHW -> NHWC
    x = run_conv(x, plan['in_conv'])                               # 7x7 s2 stem

    for blk in plan['enc']:                        # dense block + down transition
        for lp in blk['block']:
            y = run_conv(x, lp)
            # TODO(synk): write growth channels into a preallocated channel slab
            # (input_output_aliases) instead of concatenating every layer.
            x = jnp.concatenate([x, y], axis=-1)
        x = run_conv(x, blk['trans']['conv1'])
        x = run_conv(x, blk['trans']['conv2'])

    n_dec = len(plan['dec'])
    for bi, blk in enumerate(plan['dec']):         # dense block + up transition
        for lp in blk['block']:
            y = run_conv(x, lp)
            x = jnp.concatenate([x, y], axis=-1)
        x = run_conv(x, blk['trans']['conv1'])
        last = bi == n_dec - 1
        # final softplus on output channel 0 is fused into the convT matmul
        x = run_convT(x, blk['trans']['convT'], softplus_col0=last,
                      out_dtype=jnp.float32 if last else jnp.bfloat16)

    return jnp.transpose(x, (0, 3, 1, 2))                          # NHWC -> NCHW


# ---------------------- pure-JAX f32 reference (checking) --------------------

def _ref_bn_relu(x, bn):
    scale, shift = bn
    return jnp.maximum(x * scale + shift, 0.0)


def _ref_conv(x, w_oihw, stride, pad):
    return lax.conv_general_dilated(
        x, jnp.transpose(w_oihw, (2, 3, 1, 0)), (stride, stride),
        [(pad, pad), (pad, pad)], dimension_numbers=('NHWC', 'HWIO', 'NHWC'))


def _ref_convT(x, w_iohw, stride, pad):
    _, _, k, _ = w_iohw.shape
    w_conv = jnp.transpose(w_iohw[:, :, ::-1, ::-1], (1, 0, 2, 3))
    p2 = k - 1 - pad
    return lax.conv_general_dilated(
        x, jnp.transpose(w_conv, (2, 3, 1, 0)), (1, 1), [(p2, p2), (p2, p2)],
        lhs_dilation=(stride, stride),
        dimension_numbers=('NHWC', 'HWIO', 'NHWC'))


def dense_ed_reference(params, x_nchw):
    x = jnp.transpose(x_nchw, (0, 2, 3, 1)).astype(jnp.float32)
    x = _ref_conv(x, params['in_conv'], 2, 3)
    for blk in params['enc']:
        for lp in blk['block']:
            y = _ref_conv(_ref_bn_relu(x, lp['bn']), lp['conv'], 1, 1)
            x = jnp.concatenate([x, y], axis=-1)
        t = blk['trans']
        x = _ref_conv(_ref_bn_relu(x, t['bn1']), t['conv1'], 1, 0)
        x = _ref_conv(_ref_bn_relu(x, t['bn2']), t['conv2'], 2, 1)
    for blk in params['dec']:
        for lp in blk['block']:
            y = _ref_conv(_ref_bn_relu(x, lp['bn']), lp['conv'], 1, 1)
            x = jnp.concatenate([x, y], axis=-1)
        t = blk['trans']
        x = _ref_conv(_ref_bn_relu(x, t['bn1']), t['conv1'], 1, 0)
        x = _ref_convT(_ref_bn_relu(x, t['bn2']), t['convT'], 2, 1)
    y = jnp.transpose(x, (0, 3, 1, 2))
    return y.at[:, 0].set(jnp.logaddexp(0.0, y[:, 0]))


# ------------------------------------ main -----------------------------------

if __name__ == "__main__":
    key = jax.random.PRNGKey(0)
    kx, kp = jax.random.split(key)

    # small config consistent with the module: blocks has odd length (1 enc, 2 dec)
    in_channels, out_channels = 4, 3
    blocks = (2, 2, 2)
    growth_rate, num_init_features = 8, 16

    x = jax.random.normal(kx, (2, in_channels, 16, 16), jnp.float32)
    params = init_params(kp, in_channels, out_channels, blocks,
                         growth_rate, num_init_features, outsize_even=True)
    plan = prepare_plan(params)          # one-time bf16 weight packing

    fwd = jax.jit(lambda inp: dense_ed_forward(plan, inp))
    y = jax.block_until_ready(fwd(x))

    assert y.shape == (2, out_channels, 16, 16), y.shape
    assert y.dtype == jnp.float32
    assert bool(jnp.all(jnp.isfinite(y)))
    assert bool(jnp.all(y[:, 0] > 0.0))          # softplus channel is positive

    # tolerance check vs a pure-JAX f32 reference (bf16 MXU operands and bf16
    # intermediate activations give small, bounded differences).
    y_ref = jax.block_until_ready(
        jax.jit(lambda inp: dense_ed_reference(params, inp))(x))
    err = float(jnp.max(jnp.abs(y - y_ref)))
    ref_mag = float(jnp.max(jnp.abs(y_ref)))
    assert err <= 0.1 * ref_mag + 0.05, (err, ref_mag)

    print("KERNEL_OK")
</pallas_src>

<mosaic_0001>
module attributes {stable_mosaic.version = 11 : i64} {
  func.func @kernel(%arg0: i32, %arg1: i32, %arg2: i32, %arg3: i32, %arg4: memref<1x128x256xbf16, #tpu.memory_space<vmem>>, %arg5: memref<1x256x128xbf16, #tpu.memory_space<vmem>>, %arg6: memref<1x128x128xbf16, #tpu.memory_space<vmem>>) attributes {dimension_semantics = [#tpu.dimension_semantics<parallel>, #tpu.dimension_semantics<parallel>, #tpu.dimension_semantics<parallel>, #tpu.dimension_semantics<arbitrary>], iteration_bounds = array<i64: 1, 1, 1, 1>, scalar_prefetch = 0 : i64, scratch_operands = 0 : i64, tpu.core_type = #tpu.core_type<tc>, window_params = [{transform_indices = @transform_0, window_bounds = array<i64: 1, 128, 256>}, {transform_indices = @transform_1, window_bounds = array<i64: 1, 256, 128>}, {transform_indices = @transform_2, window_bounds = array<i64: 1, 128, 128>}]} {
    %c0 = arith.constant 0 : index
    %c0_0 = arith.constant 0 : index
    %c0_1 = arith.constant 0 : index
    %0 = vector.load %arg4[%c0, %c0_0, %c0_1] : memref<1x128x256xbf16, #tpu.memory_space<vmem>>, vector<1x128x256xbf16>
    %1 = vector.shape_cast %0 : vector<1x128x256xbf16> to vector<128x256xbf16>
    %c0_2 = arith.constant 0 : index
    %c0_3 = arith.constant 0 : index
    %c0_4 = arith.constant 0 : index
    %2 = vector.load %arg5[%c0_2, %c0_3, %c0_4] : memref<1x256x128xbf16, #tpu.memory_space<vmem>>, vector<1x256x128xbf16>
    %3 = vector.shape_cast %2 : vector<1x256x128xbf16> to vector<256x128xbf16>
    %cst = arith.constant dense<0.000000e+00> : vector<128x128xf32>
    %4 = tpu.matmul %1, %3, %cst {dimension_numbers = #tpu.dot_dimension_numbers<[1], [0], [0], [1], [0, 0, 1, 1], [], []>} : vector<128x256xbf16>, vector<256x128xbf16>, vector<128x128xf32> -> vector<128x128xf32>
    %5 = arith.truncf %4 : vector<128x128xf32> to vector<128x128xbf16>
    %c0_5 = arith.constant 0 : index
    %c0_6 = arith.constant 0 : index
    %c0_7 = arith.constant 0 : index
    %6 = vector.load %arg6[%c0_5, %c0_6, %c0_7] : memref<1x128x128xbf16, #tpu.memory_space<vmem>>, vector<1x128x128xbf16>
    %7 = vector.shape_cast %6 : vector<1x128x128xbf16> to vector<128x128xbf16>
    %8 = vector.shape_cast %5 : vector<128x128xbf16> to vector<1x128x128xbf16>
    tpu.vector_store %arg6[%c0_5, %c0_6, %c0_7], %8 {strides = array<i32>} : memref<1x128x128xbf16, #tpu.memory_space<vmem>>, vector<1x128x128xbf16>,
    return
  }
  func.func @transform_0(%arg0: i32, %arg1: i32, %arg2: i32, %arg3: i32) -> (i32, i32, i32) {
    %c0_i32 = arith.constant 0 : i32
    return %arg0, %arg1, %arg3 : i32, i32, i32
  }
  func.func @transform_1(%arg0: i32, %arg1: i32, %arg2: i32, %arg3: i32) -> (i32, i32, i32) {
    %c0_i32 = arith.constant 0 : i32
    return %arg0, %arg3, %arg2 : i32, i32, i32
  }
  func.func @transform_2(%arg0: i32, %arg1: i32, %arg2: i32, %arg3: i32) -> (i32, i32, i32) {
    %c0_i32 = arith.constant 0 : i32
    return %arg0, %arg1, %arg2 : i32, i32, i32
  }
}

module attributes {stable_mosaic.version = 11 : i64} {
  func.func @kernel(%arg0: i32, %arg1: i32, %arg2: i32, %arg3: i32, %arg4: memref<1x128x256xbf16, #tpu.memory_space<vmem>>, %arg5: memref<1x1x256xf32, #tpu.memory_space<vmem>>, %arg6: memref<1x1x256xf32, #tpu.memory_space<vmem>>, %arg7: memref<1x256x128xbf16, #tpu.memory_space<vmem>>, %arg8: memref<1x128x128xbf16, #tpu.memory_space<vmem>>) attributes {dimension_semantics = [#tpu.dimension_semantics<parallel>, #tpu.dimension_semantics<parallel>, #tpu.dimension_semantics<parallel>, #tpu.dimension_semantics<arbitrary>], iteration_bounds = array<i64: 1, 1, 1, 1>, scalar_prefetch = 0 : i64, scratch_operands = 0 : i64, tpu.core_type = #tpu.core_type<tc>, window_params = [{transform_indices = @transform_0, window_bounds = array<i64: 1, 128, 256>}, {transform_indices = @transform_1, window_bounds = array<i64: 1, 1, 256>}, {transform_indices = @transform_2, window_bounds = array<i64: 1, 1, 256>}, {transform_indices = @transform_3, window_bounds = array<i64: 1, 256, 128>}, {transform_indices = @transform_4, window_bounds = array<i64: 1, 128, 128>}]} {
    %c0 = arith.constant 0 : index
    %c0_0 = arith.constant 0 : index
    %c0_1 = arith.constant 0 : index
    %0 = vector.load %arg4[%c0, %c0_0, %c0_1] : memref<1x128x256xbf16, #tpu.memory_space<vmem>>, vector<1x128x256xbf16>
    %1 = vector.shape_cast %0 : vector<1x128x256xbf16> to vector<128x256xbf16>
    %2 = arith.extf %1 : vector<128x256xbf16> to vector<128x256xf32>
    %c0_2 = arith.constant 0 : index
    %c0_3 = arith.constant 0 : index
    %c0_4 = arith.constant 0 : index
    %3 = vector.load %arg5[%c0_2, %c0_3, %c0_4] : memref<1x1x256xf32, #tpu.memory_space<vmem>>, vector<1x1x256xf32>
    %4 = vector.shape_cast %3 : vector<1x1x256xf32> to vector<1x256xf32>
    %5 = vector.broadcast %4 : vector<1x256xf32> to vector<128x256xf32>
    %6 = arith.mulf %2, %5 : vector<128x256xf32>
    %c0_5 = arith.constant 0 : index
    %c0_6 = arith.constant 0 : index
    %c0_7 = arith.constant 0 : index
    %7 = vector.load %arg6[%c0_5, %c0_6, %c0_7] : memref<1x1x256xf32, #tpu.memory_space<vmem>>, vector<1x1x256xf32>
    %8 = vector.shape_cast %7 : vector<1x1x256xf32> to vector<1x256xf32>
    %9 = vector.broadcast %8 : vector<1x256xf32> to vector<128x256xf32>
    %10 = arith.addf %6, %9 : vector<128x256xf32>
    %cst = arith.constant 0.000000e+00 : f32
    %11 = vector.broadcast %cst : f32 to vector<128x256xf32>
    %12 = arith.maximumf %10, %11 : vector<128x256xf32>
    %13 = arith.truncf %12 : vector<128x256xf32> to vector<128x256xbf16>
    %c0_8 = arith.constant 0 : index
    %c0_9 = arith.constant 0 : index
    %c0_10 = arith.constant 0 : index
    %14 = vector.load %arg7[%c0_8, %c0_9, %c0_10] : memref<1x256x128xbf16, #tpu.memory_space<vmem>>, vector<1x256x128xbf16>
    %15 = vector.shape_cast %14 : vector<1x256x128xbf16> to vector<256x128xbf16>
    %cst_11 = arith.constant dense<0.000000e+00> : vector<128x128xf32>
    %16 = tpu.matmul %13, %15, %cst_11 {dimension_numbers = #tpu.dot_dimension_numbers<[1], [0], [0], [1], [0, 0, 1, 1], [], []>} : vector<128x256xbf16>, vector<256x128xbf16>, vector<128x128xf32> -> vector<128x128xf32>
    %17 = arith.truncf %16 : vector<128x128xf32> to vector<128x128xbf16>
    %c0_12 = arith.constant 0 : index
    %c0_13 = arith.constant 0 : index
    %c0_14 = arith.constant 0 : index
    %18 = vector.load %arg8[%c0_12, %c0_13, %c0_14] : memref<1x128x128xbf16, #tpu.memory_space<vmem>>, vector<1x128x128xbf16>
    %19 = vector.shape_cast %18 : vector<1x128x128xbf16> to vector<128x128xbf16>
    %20 = vector.shape_cast %17 : vector<128x128xbf16> to vector<1x128x128xbf16>
    tpu.vector_store %arg8[%c0_12, %c0_13, %c0_14], %20 {strides = array<i32>} : memref<1x128x128xbf16, #tpu.memory_space<vmem>>, vector<1x128x128xbf16>,
    return
  }
  func.func @transform_0(%arg0: i32, %arg1: i32, %arg2: i32, %arg3: i32) -> (i32, i32, i32) {
    %c0_i32 = arith.constant 0 : i32
    return %arg0, %arg1, %arg3 : i32, i32, i32
  }
  func.func @transform_1(%arg0: i32, %arg1: i32, %arg2: i32, %arg3: i32) -> (i32, i32, i32) {
    %c0_i32 = arith.constant 0 : i32
    %c0_i32_0 = arith.constant 0 : i32
    return %arg0, %c0_i32, %arg3 : i32, i32, i32
  }
  func.func @transform_2(%arg0: i32, %arg1: i32, %arg2: i32, %arg3: i32) -> (i32, i32, i32) {
    %c0_i32 = arith.constant 0 : i32
    %c0_i32_0 = arith.constant 0 : i32
    return %arg0, %c0_i32, %arg3 : i32, i32, i32
  }
  func.func @transform_3(%arg0: i32, %arg1: i32, %arg2: i32, %arg3: i32) -> (i32, i32, i32) {
    %c0_i32 = arith.constant 0 : i32
    return %arg0, %arg3, %arg2 : i32, i32, i32
  }
  func.func @transform_4(%arg0: i32, %arg1: i32, %arg2: i32, %arg3: i32) -> (i32, i32, i32) {
    %c0_i32 = arith.constant 0 : i32
    return %arg0, %arg1, %arg2 : i32, i32, i32
  }
}

module attributes {stable_mosaic.version = 11 : i64} {
  func.func @kernel(%arg0: i32, %arg1: i32, %arg2: i32, %arg3: i32, %arg4: memref<1x128x128xbf16, #tpu.memory_space<vmem>>, %arg5: memref<1x1x128xf32, #tpu.memory_space<vmem>>, %arg6: memref<1x1x128xf32, #tpu.memory_space<vmem>>, %arg7: memref<1x128x128xbf16, #tpu.memory_space<vmem>>, %arg8: memref<1x128x128xbf16, #tpu.memory_space<vmem>>) attributes {dimension_semantics = [#tpu.dimension_semantics<parallel>, #tpu.dimension_semantics<parallel>, #tpu.dimension_semantics<parallel>, #tpu.dimension_semantics<arbitrary>], iteration_bounds = array<i64: 1, 1, 1, 1>, scalar_prefetch = 0 : i64, scratch_operands = 0 : i64, tpu.core_type = #tpu.core_type<tc>, window_params = [{transform_indices = @transform_0, window_bounds = array<i64: 1, 128, 128>}, {transform_indices = @transform_1, window_bounds = array<i64: 1, 1, 128>}, {transform_indices = @transform_2, window_bounds = array<i64: 1, 1, 128>}, {transform_indices = @transform_3, window_bounds = array<i64: 1, 128, 128>}, {transform_indices = @transform_4, window_bounds = array<i64: 1, 128, 128>}]} {
    %c0 = arith.constant 0 : index
    %c0_0 = arith.constant 0 : index
    %c0_1 = arith.constant 0 : index
    %0 = vector.load %arg4[%c0, %c0_0, %c0_1] : memref<1x128x128xbf16, #tpu.memory_space<vmem>>, vector<1x128x128xbf16>
    %1 = vector.shape_cast %0 : vector<1x128x128xbf16> to vector<128x128xbf16>
    %2 = arith.extf %1 : vector<128x128xbf16> to vector<128x128xf32>
    %c0_2 = arith.constant 0 : index
    %c0_3 = arith.constant 0 : index
    %c0_4 = arith.constant 0 : index
    %3 = vector.load %arg5[%c0_2, %c0_3, %c0_4] : memref<1x1x128xf32, #tpu.memory_space<vmem>>, vector<1x1x128xf32>
    %4 = vector.shape_cast %3 : vector<1x1x128xf32> to vector<1x128xf32>
    %5 = vector.broadcast %4 : vector<1x128xf32> to vector<128x128xf32>
    %6 = arith.mulf %2, %5 : vector<128x128xf32>
    %c0_5 = arith.constant 0 : index
    %c0_6 = arith.constant 0 : index
    %c0_7 = arith.constant 0 : index
    %7 = vector.load %arg6[%c0_5, %c0_6, %c0_7] : memref<1x1x128xf32, #tpu.memory_space<vmem>>, vector<1x1x128xf32>
    %8 = vector.shape_cast %7 : vector<1x1x128xf32> to vector<1x128xf32>
    %9 = vector.broadcast %8 : vector<1x128xf32> to vector<128x128xf32>
    %10 = arith.addf %6, %9 : vector<128x128xf32>
    %cst = arith.constant 0.000000e+00 : f32
    %11 = vector.broadcast %cst : f32 to vector<128x128xf32>
    %12 = arith.maximumf %10, %11 : vector<128x128xf32>
    %13 = arith.truncf %12 : vector<128x128xf32> to vector<128x128xbf16>
    %c0_8 = arith.constant 0 : index
    %c0_9 = arith.constant 0 : index
    %c0_10 = arith.constant 0 : index
    %14 = vector.load %arg7[%c0_8, %c0_9, %c0_10] : memref<1x128x128xbf16, #tpu.memory_space<vmem>>, vector<1x128x128xbf16>
    %15 = vector.shape_cast %14 : vector<1x128x128xbf16> to vector<128x128xbf16>
    %cst_11 = arith.constant dense<0.000000e+00> : vector<128x128xf32>
    %16 = tpu.matmul %13, %15, %cst_11 {dimension_numbers = #tpu.dot_dimension_numbers<[1], [0], [0], [1], [0, 0, 1, 1], [], []>} : vector<128x128xbf16>, vector<128x128xbf16>, vector<128x128xf32> -> vector<128x128xf32>
    %17 = arith.truncf %16 : vector<128x128xf32> to vector<128x128xbf16>
    %c0_12 = arith.constant 0 : index
    %c0_13 = arith.constant 0 : index
    %c0_14 = arith.constant 0 : index
    %18 = vector.load %arg8[%c0_12, %c0_13, %c0_14] : memref<1x128x128xbf16, #tpu.memory_space<vmem>>, vector<1x128x128xbf16>
    %19 = vector.shape_cast %18 : vector<1x128x128xbf16> to vector<128x128xbf16>
    %20 = vector.shape_cast %17 : vector<128x128xbf16> to vector<1x128x128xbf16>
    tpu.vector_store %arg8[%c0_12, %c0_13, %c0_14], %20 {strides = array<i32>} : memref<1x128x128xbf16, #tpu.memory_space<vmem>>, vector<1x128x128xbf16>,
    return
  }
  func.func @transform_0(%arg0: i32, %arg1: i32, %arg2: i32, %arg3: i32) -> (i32, i32, i32) {
    %c0_i32 = arith.constant 0 : i32
    return %arg0, %arg1, %arg3 : i32, i32, i32
  }
  func.func @transform_1(%arg0: i32, %arg1: i32, %arg2: i32, %arg3: i32) -> (i32, i32, i32) {
    %c0_i32 = arith.constant 0 : i32
    %c0_i32_0 = arith.constant 0 : i32
    return %arg0, %c0_i32, %arg3 : i32, i32, i32
  }
  func.func @transform_2(%arg0: i32, %arg1: i32, %arg2: i32, %arg3: i32) -> (i32, i32, i32) {
    %c0_i32 = arith.constant 0 : i32
    %c0_i32_0 = arith.constant 0 : i32
    return %arg0, %c0_i32, %arg3 : i32, i32, i32
  }
  func.func @transform_3(%arg0: i32, %arg1: i32, %arg2: i32, %arg3: i32) -> (i32, i32, i32) {
    %c0_i32 = arith.constant 0 : i32
    return %arg0, %arg3, %arg2 : i32, i32, i32
  }
  func.func @transform_4(%arg0: i32, %arg1: i32, %arg2: i32, %arg3: i32) -> (i32, i32, i32) {
    %c0_i32 = arith.constant 0 : i32
    return %arg0, %arg1, %arg2 : i32, i32, i32
  }
}

module attributes {stable_mosaic.version = 11 : i64} {
  func.func @kernel(%arg0: i32, %arg1: i32, %arg2: i32, %arg3: i32, %arg4: memref<1x32x256xbf16, #tpu.memory_space<vmem>>, %arg5: memref<1x1x256xf32, #tpu.memory_space<vmem>>, %arg6: memref<1x1x256xf32, #tpu.memory_space<vmem>>, %arg7: memref<1x256x128xbf16, #tpu.memory_space<vmem>>, %arg8: memref<1x32x128xbf16, #tpu.memory_space<vmem>>) attributes {dimension_semantics = [#tpu.dimension_semantics<parallel>, #tpu.dimension_semantics<parallel>, #tpu.dimension_semantics<parallel>, #tpu.dimension_semantics<arbitrary>], iteration_bounds = array<i64: 1, 1, 1, 1>, scalar_prefetch = 0 : i64, scratch_operands = 0 : i64, tpu.core_type = #tpu.core_type<tc>, window_params = [{transform_indices = @transform_0, window_bounds = array<i64: 1, 32, 256>}, {transform_indices = @transform_1, window_bounds = array<i64: 1, 1, 256>}, {transform_indices = @transform_2, window_bounds = array<i64: 1, 1, 256>}, {transform_indices = @transform_3, window_bounds = array<i64: 1, 256, 128>}, {transform_indices = @transform_4, window_bounds = array<i64: 1, 32, 128>}]} {
    %c0 = arith.constant 0 : index
    %c0_0 = arith.constant 0 : index
    %c0_1 = arith.constant 0 : index
    %0 = vector.load %arg4[%c0, %c0_0, %c0_1] : memref<1x32x256xbf16, #tpu.memory_space<vmem>>, vector<1x32x256xbf16>
    %1 = vector.shape_cast %0 : vector<1x32x256xbf16> to vector<32x256xbf16>
    %2 = arith.extf %1 : vector<32x256xbf16> to vector<32x256xf32>
    %c0_2 = arith.constant 0 : index
    %c0_3 = arith.constant 0 : index
    %c0_4 = arith.constant 0 : index
    %3 = vector.load %arg5[%c0_2, %c0_3, %c0_4] : memref<1x1x256xf32, #tpu.memory_space<vmem>>, vector<1x1x256xf32>
    %4 = vector.shape_cast %3 : vector<1x1x256xf32> to vector<1x256xf32>
    %5 = vector.broadcast %4 : vector<1x256xf32> to vector<32x256xf32>
    %6 = arith.mulf %2, %5 : vector<32x256xf32>
    %c0_5 = arith.constant 0 : index
    %c0_6 = arith.constant 0 : index
    %c0_7 = arith.constant 0 : index
    %7 = vector.load %arg6[%c0_5, %c0_6, %c0_7] : memref<1x1x256xf32, #tpu.memory_space<vmem>>, vector<1x1x256xf32>
    %8 = vector.shape_cast %7 : vector<1x1x256xf32> to vector<1x256xf32>
    %9 = vector.broadcast %8 : vector<1x256xf32> to vector<32x256xf32>
    %10 = arith.addf %6, %9 : vector<32x256xf32>
    %cst = arith.constant 0.000000e+00 : f32
    %11 = vector.broadcast %cst : f32 to vector<32x256xf32>
    %12 = arith.maximumf %10, %11 : vector<32x256xf32>
    %13 = arith.truncf %12 : vector<32x256xf32> to vector<32x256xbf16>
    %c0_8 = arith.constant 0 : index
    %c0_9 = arith.constant 0 : index
    %c0_10 = arith.constant 0 : index
    %14 = vector.load %arg7[%c0_8, %c0_9, %c0_10] : memref<1x256x128xbf16, #tpu.memory_space<vmem>>, vector<1x256x128xbf16>
    %15 = vector.shape_cast %14 : vector<1x256x128xbf16> to vector<256x128xbf16>
    %cst_11 = arith.constant dense<0.000000e+00> : vector<32x128xf32>
    %16 = tpu.matmul %13, %15, %cst_11 {dimension_numbers = #tpu.dot_dimension_numbers<[1], [0], [0], [1], [0, 0, 1, 1], [], []>} : vector<32x256xbf16>, vector<256x128xbf16>, vector<32x128xf32> -> vector<32x128xf32>
    %17 = arith.truncf %16 : vector<32x128xf32> to vector<32x128xbf16>
    %c0_12 = arith.constant 0 : index
    %c0_13 = arith.constant 0 : index
    %c0_14 = arith.constant 0 : index
    %18 = vector.load %arg8[%c0_12, %c0_13, %c0_14] : memref<1x32x128xbf16, #tpu.memory_space<vmem>>, vector<1x32x128xbf16>
    %19 = vector.shape_cast %18 : vector<1x32x128xbf16> to vector<32x128xbf16>
    %20 = vector.shape_cast %17 : vector<32x128xbf16> to vector<1x32x128xbf16>
    tpu.vector_store %arg8[%c0_12, %c0_13, %c0_14], %20 {strides = array<i32>} : memref<1x32x128xbf16, #tpu.memory_space<vmem>>, vector<1x32x128xbf16>,
    return
  }
  func.func @transform_0(%arg0: i32, %arg1: i32, %arg2: i32, %arg3: i32) -> (i32, i32, i32) {
    %c0_i32 = arith.constant 0 : i32
    return %arg0, %arg1, %arg3 : i32, i32, i32
  }
  func.func @transform_1(%arg0: i32, %arg1: i32, %arg2: i32, %arg3: i32) -> (i32, i32, i32) {
    %c0_i32 = arith.constant 0 : i32
    %c0_i32_0 = arith.constant 0 : i32
    return %arg0, %c0_i32, %arg3 : i32, i32, i32
  }
  func.func @transform_2(%arg0: i32, %arg1: i32, %arg2: i32, %arg3: i32) -> (i32, i32, i32) {
    %c0_i32 = arith.constant 0 : i32
    %c0_i32_0 = arith.constant 0 : i32
    return %arg0, %c0_i32, %arg3 : i32, i32, i32
  }
  func.func @transform_3(%arg0: i32, %arg1: i32, %arg2: i32, %arg3: i32) -> (i32, i32, i32) {
    %c0_i32 = arith.constant 0 : i32
    return %arg0, %arg3, %arg2 : i32, i32, i32
  }
  func.func @transform_4(%arg0: i32, %arg1: i32, %arg2: i32, %arg3: i32) -> (i32, i32, i32) {
    %c0_i32 = arith.constant 0 : i32
    return %arg0, %arg1, %arg2 : i32, i32, i32
  }
}

module attributes {stable_mosaic.version = 11 : i64} {
  func.func @kernel(%arg0: i32, %arg1: i32, %arg2: i32, %arg3: i32, %arg4: memref<1x32x128xbf16, #tpu.memory_space<vmem>>, %arg5: memref<1x1x128xf32, #tpu.memory_space<vmem>>, %arg6: memref<1x1x128xf32, #tpu.memory_space<vmem>>, %arg7: memref<1x128x128xbf16, #tpu.memory_space<vmem>>, %arg8: memref<1x32x128xbf16, #tpu.memory_space<vmem>>) attributes {dimension_semantics = [#tpu.dimension_semantics<parallel>, #tpu.dimension_semantics<parallel>, #tpu.dimension_semantics<parallel>, #tpu.dimension_semantics<arbitrary>], iteration_bounds = array<i64: 1, 1, 1, 1>, scalar_prefetch = 0 : i64, scratch_operands = 0 : i64, tpu.core_type = #tpu.core_type<tc>, window_params = [{transform_indices = @transform_0, window_bounds = array<i64: 1, 32, 128>}, {transform_indices = @transform_1, window_bounds = array<i64: 1, 1, 128>}, {transform_indices = @transform_2, window_bounds = array<i64: 1, 1, 128>}, {transform_indices = @transform_3, window_bounds = array<i64: 1, 128, 128>}, {transform_indices = @transform_4, window_bounds = array<i64: 1, 32, 128>}]} {
    %c0 = arith.constant 0 : index
    %c0_0 = arith.constant 0 : index
    %c0_1 = arith.constant 0 : index
    %0 = vector.load %arg4[%c0, %c0_0, %c0_1] : memref<1x32x128xbf16, #tpu.memory_space<vmem>>, vector<1x32x128xbf16>
    %1 = vector.shape_cast %0 : vector<1x32x128xbf16> to vector<32x128xbf16>
    %2 = arith.extf %1 : vector<32x128xbf16> to vector<32x128xf32>
    %c0_2 = arith.constant 0 : index
    %c0_3 = arith.constant 0 : index
    %c0_4 = arith.constant 0 : index
    %3 = vector.load %arg5[%c0_2, %c0_3, %c0_4] : memref<1x1x128xf32, #tpu.memory_space<vmem>>, vector<1x1x128xf32>
    %4 = vector.shape_cast %3 : vector<1x1x128xf32> to vector<1x128xf32>
    %5 = vector.broadcast %4 : vector<1x128xf32> to vector<32x128xf32>
    %6 = arith.mulf %2, %5 : vector<32x128xf32>
    %c0_5 = arith.constant 0 : index
    %c0_6 = arith.constant 0 : index
    %c0_7 = arith.constant 0 : index
    %7 = vector.load %arg6[%c0_5, %c0_6, %c0_7] : memref<1x1x128xf32, #tpu.memory_space<vmem>>, vector<1x1x128xf32>
    %8 = vector.shape_cast %7 : vector<1x1x128xf32> to vector<1x128xf32>
    %9 = vector.broadcast %8 : vector<1x128xf32> to vector<32x128xf32>
    %10 = arith.addf %6, %9 : vector<32x128xf32>
    %cst = arith.constant 0.000000e+00 : f32
    %11 = vector.broadcast %cst : f32 to vector<32x128xf32>
    %12 = arith.maximumf %10, %11 : vector<32x128xf32>
    %13 = arith.truncf %12 : vector<32x128xf32> to vector<32x128xbf16>
    %c0_8 = arith.constant 0 : index
    %c0_9 = arith.constant 0 : index
    %c0_10 = arith.constant 0 : index
    %14 = vector.load %arg7[%c0_8, %c0_9, %c0_10] : memref<1x128x128xbf16, #tpu.memory_space<vmem>>, vector<1x128x128xbf16>
    %15 = vector.shape_cast %14 : vector<1x128x128xbf16> to vector<128x128xbf16>
    %cst_11 = arith.constant dense<0.000000e+00> : vector<32x128xf32>
    %16 = tpu.matmul %13, %15, %cst_11 {dimension_numbers = #tpu.dot_dimension_numbers<[1], [0], [0], [1], [0, 0, 1, 1], [], []>} : vector<32x128xbf16>, vector<128x128xbf16>, vector<32x128xf32> -> vector<32x128xf32>
    %17 = arith.truncf %16 : vector<32x128xf32> to vector<32x128xbf16>
    %c0_12 = arith.constant 0 : index
    %c0_13 = arith.constant 0 : index
    %c0_14 = arith.constant 0 : index
    %18 = vector.load %arg8[%c0_12, %c0_13, %c0_14] : memref<1x32x128xbf16, #tpu.memory_space<vmem>>, vector<1x32x128xbf16>
    %19 = vector.shape_cast %18 : vector<1x32x128xbf16> to vector<32x128xbf16>
    %20 = vector.shape_cast %17 : vector<32x128xbf16> to vector<1x32x128xbf16>
    tpu.vector_store %arg8[%c0_12, %c0_13, %c0_14], %20 {strides = array<i32>} : memref<1x32x128xbf16, #tpu.memory_space<vmem>>, vector<1x32x128xbf16>,
    return
  }
  func.func @transform_0(%arg0: i32, %arg1: i32, %arg2: i32, %arg3: i32) -> (i32, i32, i32) {
    %c0_i32 = arith.constant 0 : i32
    return %arg0, %arg1, %arg3 : i32, i32, i32
  }
  func.func @transform_1(%arg0: i32, %arg1: i32, %arg2: i32, %arg3: i32) -> (i32, i32, i32) {
    %c0_i32 = arith.constant 0 : i32
    %c0_i32_0 = arith.constant 0 : i32
    return %arg0, %c0_i32, %arg3 : i32, i32, i32
  }
  func.func @transform_2(%arg0: i32, %arg1: i32, %arg2: i32, %arg3: i32) -> (i32, i32, i32) {
    %c0_i32 = arith.constant 0 : i32
    %c0_i32_0 = arith.constant 0 : i32
    return %arg0, %c0_i32, %arg3 : i32, i32, i32
  }
  func.func @transform_3(%arg0: i32, %arg1: i32, %arg2: i32, %arg3: i32) -> (i32, i32, i32) {
    %c0_i32 = arith.constant 0 : i32
    return %arg0, %arg3, %arg2 : i32, i32, i32
  }
  func.func @transform_4(%arg0: i32, %arg1: i32, %arg2: i32, %arg3: i32) -> (i32, i32, i32) {
    %c0_i32 = arith.constant 0 : i32
    return %arg0, %arg1, %arg2 : i32, i32, i32
  }
}

module attributes {stable_mosaic.version = 11 : i64} {
  func.func @kernel(%arg0: i32, %arg1: i32, %arg2: i32, %arg3: i32, %arg4: memref<1x32x128xbf16, #tpu.memory_space<vmem>>, %arg5: memref<1x1x128xf32, #tpu.memory_space<vmem>>, %arg6: memref<1x1x128xf32, #tpu.memory_space<vmem>>, %arg7: memref<1x128x128xbf16, #tpu.memory_space<vmem>>, %arg8: memref<1x32x128xbf16, #tpu.memory_space<vmem>>) attributes {dimension_semantics = [#tpu.dimension_semantics<parallel>, #tpu.dimension_semantics<parallel>, #tpu.dimension_semantics<parallel>, #tpu.dimension_semantics<arbitrary>], iteration_bounds = array<i64: 4, 1, 1, 1>, scalar_prefetch = 0 : i64, scratch_operands = 0 : i64, tpu.core_type = #tpu.core_type<tc>, window_params = [{transform_indices = @transform_0, window_bounds = array<i64: 1, 32, 128>}, {transform_indices = @transform_1, window_bounds = array<i64: 1, 1, 128>}, {transform_indices = @transform_2, window_bounds = array<i64: 1, 1, 128>}, {transform_indices = @transform_3, window_bounds = array<i64: 1, 128, 128>}, {transform_indices = @transform_4, window_bounds = array<i64: 1, 32, 128>}]} {
    %c0 = arith.constant 0 : index
    %c0_0 = arith.constant 0 : index
    %c0_1 = arith.constant 0 : index
    %0 = vector.load %arg4[%c0, %c0_0, %c0_1] : memref<1x32x128xbf16, #tpu.memory_space<vmem>>, vector<1x32x128xbf16>
    %1 = vector.shape_cast %0 : vector<1x32x128xbf16> to vector<32x128xbf16>
    %2 = arith.extf %1 : vector<32x128xbf16> to vector<32x128xf32>
    %c0_2 = arith.constant 0 : index
    %c0_3 = arith.constant 0 : index
    %c0_4 = arith.constant 0 : index
    %3 = vector.load %arg5[%c0_2, %c0_3, %c0_4] : memref<1x1x128xf32, #tpu.memory_space<vmem>>, vector<1x1x128xf32>
    %4 = vector.shape_cast %3 : vector<1x1x128xf32> to vector<1x128xf32>
    %5 = vector.broadcast %4 : vector<1x128xf32> to vector<32x128xf32>
    %6 = arith.mulf %2, %5 : vector<32x128xf32>
    %c0_5 = arith.constant 0 : index
    %c0_6 = arith.constant 0 : index
    %c0_7 = arith.constant 0 : index
    %7 = vector.load %arg6[%c0_5, %c0_6, %c0_7] : memref<1x1x128xf32, #tpu.memory_space<vmem>>, vector<1x1x128xf32>
    %8 = vector.shape_cast %7 : vector<1x1x128xf32> to vector<1x128xf32>
    %9 = vector.broadcast %8 : vector<1x128xf32> to vector<32x128xf32>
    %10 = arith.addf %6, %9 : vector<32x128xf32>
    %cst = arith.constant 0.000000e+00 : f32
    %11 = vector.broadcast %cst : f32 to vector<32x128xf32>
    %12 = arith.maximumf %10, %11 : vector<32x128xf32>
    %13 = arith.truncf %12 : vector<32x128xf32> to vector<32x128xbf16>
    %c0_8 = arith.constant 0 : index
    %c0_9 = arith.constant 0 : index
    %c0_10 = arith.constant 0 : index
    %14 = vector.load %arg7[%c0_8, %c0_9, %c0_10] : memref<1x128x128xbf16, #tpu.memory_space<vmem>>, vector<1x128x128xbf16>
    %15 = vector.shape_cast %14 : vector<1x128x128xbf16> to vector<128x128xbf16>
    %cst_11 = arith.constant dense<0.000000e+00> : vector<32x128xf32>
    %16 = tpu.matmul %13, %15, %cst_11 {dimension_numbers = #tpu.dot_dimension_numbers<[1], [0], [0], [1], [0, 0, 1, 1], [], []>} : vector<32x128xbf16>, vector<128x128xbf16>, vector<32x128xf32> -> vector<32x128xf32>
    %17 = arith.truncf %16 : vector<32x128xf32> to vector<32x128xbf16>
    %c0_12 = arith.constant 0 : index
    %c0_13 = arith.constant 0 : index
    %c0_14 = arith.constant 0 : index
    %18 = vector.load %arg8[%c0_12, %c0_13, %c0_14] : memref<1x32x128xbf16, #tpu.memory_space<vmem>>, vector<1x32x128xbf16>
    %19 = vector.shape_cast %18 : vector<1x32x128xbf16> to vector<32x128xbf16>
    %20 = vector.shape_cast %17 : vector<32x128xbf16> to vector<1x32x128xbf16>
    tpu.vector_store %arg8[%c0_12, %c0_13, %c0_14], %20 {strides = array<i32>} : memref<1x32x128xbf16, #tpu.memory_space<vmem>>, vector<1x32x128xbf16>,
    return
  }
  func.func @transform_0(%arg0: i32, %arg1: i32, %arg2: i32, %arg3: i32) -> (i32, i32, i32) {
    %c0_i32 = arith.constant 0 : i32
    return %arg0, %arg1, %arg3 : i32, i32, i32
  }
  func.func @transform_1(%arg0: i32, %arg1: i32, %arg2: i32, %arg3: i32) -> (i32, i32, i32) {
    %c0_i32 = arith.constant 0 : i32
    %c0_i32_0 = arith.constant 0 : i32
    return %arg0, %c0_i32, %arg3 : i32, i32, i32
  }
  func.func @transform_2(%arg0: i32, %arg1: i32, %arg2: i32, %arg3: i32) -> (i32, i32, i32) {
    %c0_i32 = arith.constant 0 : i32
    %c0_i32_0 = arith.constant 0 : i32
    return %arg0, %c0_i32, %arg3 : i32, i32, i32
  }
  func.func @transform_3(%arg0: i32, %arg1: i32, %arg2: i32, %arg3: i32) -> (i32, i32, i32) {
    %c0_i32 = arith.constant 0 : i32
    return %arg0, %arg3, %arg2 : i32, i32, i32
  }
  func.func @transform_4(%arg0: i32, %arg1: i32, %arg2: i32, %arg3: i32) -> (i32, i32, i32) {
    %c0_i32 = arith.constant 0 : i32
    return %arg0, %arg1, %arg2 : i32, i32, i32
  }
}

module attributes {stable_mosaic.version = 11 : i64} {
  func.func @kernel(%arg0: i32, %arg1: i32, %arg2: i32, %arg3: i32, %arg4: memref<1x112x256xbf16, #tpu.memory_space<vmem>>, %arg5: memref<1x1x256xf32, #tpu.memory_space<vmem>>, %arg6: memref<1x1x256xf32, #tpu.memory_space<vmem>>, %arg7: memref<1x256x128xbf16, #tpu.memory_space<vmem>>, %arg8: memref<1x112x128xbf16, #tpu.memory_space<vmem>>) attributes {dimension_semantics = [#tpu.dimension_semantics<parallel>, #tpu.dimension_semantics<parallel>, #tpu.dimension_semantics<parallel>, #tpu.dimension_semantics<arbitrary>], iteration_bounds = array<i64: 1, 1, 1, 1>, scalar_prefetch = 0 : i64, scratch_operands = 0 : i64, tpu.core_type = #tpu.core_type<tc>, window_params = [{transform_indices = @transform_0, window_bounds = array<i64: 1, 112, 256>}, {transform_indices = @transform_1, window_bounds = array<i64: 1, 1, 256>}, {transform_indices = @transform_2, window_bounds = array<i64: 1, 1, 256>}, {transform_indices = @transform_3, window_bounds = array<i64: 1, 256, 128>}, {transform_indices = @transform_4, window_bounds = array<i64: 1, 112, 128>}]} {
    %c0 = arith.constant 0 : index
    %c0_0 = arith.constant 0 : index
    %c0_1 = arith.constant 0 : index
    %0 = vector.load %arg4[%c0, %c0_0, %c0_1] : memref<1x112x256xbf16, #tpu.memory_space<vmem>>, vector<1x112x256xbf16>
    %1 = vector.shape_cast %0 : vector<1x112x256xbf16> to vector<112x256xbf16>
    %2 = arith.extf %1 : vector<112x256xbf16> to vector<112x256xf32>
    %c0_2 = arith.constant 0 : index
    %c0_3 = arith.constant 0 : index
    %c0_4 = arith.constant 0 : index
    %3 = vector.load %arg5[%c0_2, %c0_3, %c0_4] : memref<1x1x256xf32, #tpu.memory_space<vmem>>, vector<1x1x256xf32>
    %4 = vector.shape_cast %3 : vector<1x1x256xf32> to vector<1x256xf32>
    %5 = vector.broadcast %4 : vector<1x256xf32> to vector<112x256xf32>
    %6 = arith.mulf %2, %5 : vector<112x256xf32>
    %c0_5 = arith.constant 0 : index
    %c0_6 = arith.constant 0 : index
    %c0_7 = arith.constant 0 : index
    %7 = vector.load %arg6[%c0_5, %c0_6, %c0_7] : memref<1x1x256xf32, #tpu.memory_space<vmem>>, vector<1x1x256xf32>
    %8 = vector.shape_cast %7 : vector<1x1x256xf32> to vector<1x256xf32>
    %9 = vector.broadcast %8 : vector<1x256xf32> to vector<112x256xf32>
    %10 = arith.addf %6, %9 : vector<112x256xf32>
    %cst = arith.constant 0.000000e+00 : f32
    %11 = vector.broadcast %cst : f32 to vector<112x256xf32>
    %12 = arith.maximumf %10, %11 : vector<112x256xf32>
    %13 = arith.truncf %12 : vector<112x256xf32> to vector<112x256xbf16>
    %c0_8 = arith.constant 0 : index
    %c0_9 = arith.constant 0 : index
    %c0_10 = arith.constant 0 : index
    %14 = vector.load %arg7[%c0_8, %c0_9, %c0_10] : memref<1x256x128xbf16, #tpu.memory_space<vmem>>, vector<1x256x128xbf16>
    %15 = vector.shape_cast %14 : vector<1x256x128xbf16> to vector<256x128xbf16>
    %cst_11 = arith.constant dense<0.000000e+00> : vector<112x128xf32>
    %16 = tpu.matmul %13, %15, %cst_11 {dimension_numbers = #tpu.dot_dimension_numbers<[1], [0], [0], [1], [0, 0, 1, 1], [], []>} : vector<112x256xbf16>, vector<256x128xbf16>, vector<112x128xf32> -> vector<112x128xf32>
    %17 = arith.truncf %16 : vector<112x128xf32> to vector<112x128xbf16>
    %c0_12 = arith.constant 0 : index
    %c0_13 = arith.constant 0 : index
    %c0_14 = arith.constant 0 : index
    %18 = vector.load %arg8[%c0_12, %c0_13, %c0_14] : memref<1x112x128xbf16, #tpu.memory_space<vmem>>, vector<1x112x128xbf16>
    %19 = vector.shape_cast %18 : vector<1x112x128xbf16> to vector<112x128xbf16>
    %20 = vector.shape_cast %17 : vector<112x128xbf16> to vector<1x112x128xbf16>
    tpu.vector_store %arg8[%c0_12, %c0_13, %c0_14], %20 {strides = array<i32>} : memref<1x112x128xbf16, #tpu.memory_space<vmem>>, vector<1x112x128xbf16>,
    return
  }
  func.func @transform_0(%arg0: i32, %arg1: i32, %arg2: i32, %arg3: i32) -> (i32, i32, i32) {
    %c0_i32 = arith.constant 0 : i32
    return %arg0, %arg1, %arg3 : i32, i32, i32
  }
  func.func @transform_1(%arg0: i32, %arg1: i32, %arg2: i32, %arg3: i32) -> (i32, i32, i32) {
    %c0_i32 = arith.constant 0 : i32
    %c0_i32_0 = arith.constant 0 : i32
    return %arg0, %c0_i32, %arg3 : i32, i32, i32
  }
  func.func @transform_2(%arg0: i32, %arg1: i32, %arg2: i32, %arg3: i32) -> (i32, i32, i32) {
    %c0_i32 = arith.constant 0 : i32
    %c0_i32_0 = arith.constant 0 : i32
    return %arg0, %c0_i32, %arg3 : i32, i32, i32
  }
  func.func @transform_3(%arg0: i32, %arg1: i32, %arg2: i32, %arg3: i32) -> (i32, i32, i32) {
    %c0_i32 = arith.constant 0 : i32
    return %arg0, %arg3, %arg2 : i32, i32, i32
  }
  func.func @transform_4(%arg0: i32, %arg1: i32, %arg2: i32, %arg3: i32) -> (i32, i32, i32) {
    %c0_i32 = arith.constant 0 : i32
    return %arg0, %arg1, %arg2 : i32, i32, i32
  }
}

module attributes {stable_mosaic.version = 11 : i64} {
  func.func @kernel(%arg0: i32, %arg1: i32, %arg2: i32, %arg3: i32, %arg4: memref<1x112x128xbf16, #tpu.memory_space<vmem>>, %arg5: memref<1x1x128xf32, #tpu.memory_space<vmem>>, %arg6: memref<1x1x128xf32, #tpu.memory_space<vmem>>, %arg7: memref<1x128x128xbf16, #tpu.memory_space<vmem>>, %arg8: memref<1x112x128xbf16, #tpu.memory_space<vmem>>) attributes {dimension_semantics = [#tpu.dimension_semantics<parallel>, #tpu.dimension_semantics<parallel>, #tpu.dimension_semantics<parallel>, #tpu.dimension_semantics<arbitrary>], iteration_bounds = array<i64: 1, 1, 1, 1>, scalar_prefetch = 0 : i64, scratch_operands = 0 : i64, tpu.core_type = #tpu.core_type<tc>, window_params = [{transform_indices = @transform_0, window_bounds = array<i64: 1, 112, 128>}, {transform_indices = @transform_1, window_bounds = array<i64: 1, 1, 128>}, {transform_indices = @transform_2, window_bounds = array<i64: 1, 1, 128>}, {transform_indices = @transform_3, window_bounds = array<i64: 1, 128, 128>}, {transform_indices = @transform_4, window_bounds = array<i64: 1, 112, 128>}]} {
    %c0 = arith.constant 0 : index
    %c0_0 = arith.constant 0 : index
    %c0_1 = arith.constant 0 : index
    %0 = vector.load %arg4[%c0, %c0_0, %c0_1] : memref<1x112x128xbf16, #tpu.memory_space<vmem>>, vector<1x112x128xbf16>
    %1 = vector.shape_cast %0 : vector<1x112x128xbf16> to vector<112x128xbf16>
    %2 = arith.extf %1 : vector<112x128xbf16> to vector<112x128xf32>
    %c0_2 = arith.constant 0 : index
    %c0_3 = arith.constant 0 : index
    %c0_4 = arith.constant 0 : index
    %3 = vector.load %arg5[%c0_2, %c0_3, %c0_4] : memref<1x1x128xf32, #tpu.memory_space<vmem>>, vector<1x1x128xf32>
    %4 = vector.shape_cast %3 : vector<1x1x128xf32> to vector<1x128xf32>
    %5 = vector.broadcast %4 : vector<1x128xf32> to vector<112x128xf32>
    %6 = arith.mulf %2, %5 : vector<112x128xf32>
    %c0_5 = arith.constant 0 : index
    %c0_6 = arith.constant 0 : index
    %c0_7 = arith.constant 0 : index
    %7 = vector.load %arg6[%c0_5, %c0_6, %c0_7] : memref<1x1x128xf32, #tpu.memory_space<vmem>>, vector<1x1x128xf32>
    %8 = vector.shape_cast %7 : vector<1x1x128xf32> to vector<1x128xf32>
    %9 = vector.broadcast %8 : vector<1x128xf32> to vector<112x128xf32>
    %10 = arith.addf %6, %9 : vector<112x128xf32>
    %cst = arith.constant 0.000000e+00 : f32
    %11 = vector.broadcast %cst : f32 to vector<112x128xf32>
    %12 = arith.maximumf %10, %11 : vector<112x128xf32>
    %13 = arith.truncf %12 : vector<112x128xf32> to vector<112x128xbf16>
    %c0_8 = arith.constant 0 : index
    %c0_9 = arith.constant 0 : index
    %c0_10 = arith.constant 0 : index
    %14 = vector.load %arg7[%c0_8, %c0_9, %c0_10] : memref<1x128x128xbf16, #tpu.memory_space<vmem>>, vector<1x128x128xbf16>
    %15 = vector.shape_cast %14 : vector<1x128x128xbf16> to vector<128x128xbf16>
    %cst_11 = arith.constant dense<0.000000e+00> : vector<112x128xf32>
    %16 = tpu.matmul %13, %15, %cst_11 {dimension_numbers = #tpu.dot_dimension_numbers<[1], [0], [0], [1], [0, 0, 1, 1], [], []>} : vector<112x128xbf16>, vector<128x128xbf16>, vector<112x128xf32> -> vector<112x128xf32>
    %17 = arith.truncf %16 : vector<112x128xf32> to vector<112x128xbf16>
    %c0_12 = arith.constant 0 : index
    %c0_13 = arith.constant 0 : index
    %c0_14 = arith.constant 0 : index
    %18 = vector.load %arg8[%c0_12, %c0_13, %c0_14] : memref<1x112x128xbf16, #tpu.memory_space<vmem>>, vector<1x112x128xbf16>
    %19 = vector.shape_cast %18 : vector<1x112x128xbf16> to vector<112x128xbf16>
    %20 = vector.shape_cast %17 : vector<112x128xbf16> to vector<1x112x128xbf16>
    tpu.vector_store %arg8[%c0_12, %c0_13, %c0_14], %20 {strides = array<i32>} : memref<1x112x128xbf16, #tpu.memory_space<vmem>>, vector<1x112x128xbf16>,
    return
  }
  func.func @transform_0(%arg0: i32, %arg1: i32, %arg2: i32, %arg3: i32) -> (i32, i32, i32) {
    %c0_i32 = arith.constant 0 : i32
    return %arg0, %arg1, %arg3 : i32, i32, i32
  }
  func.func @transform_1(%arg0: i32, %arg1: i32, %arg2: i32, %arg3: i32) -> (i32, i32, i32) {
    %c0_i32 = arith.constant 0 : i32
    %c0_i32_0 = arith.constant 0 : i32
    return %arg0, %c0_i32, %arg3 : i32, i32, i32
  }
  func.func @transform_2(%arg0: i32, %arg1: i32, %arg2: i32, %arg3: i32) -> (i32, i32, i32) {
    %c0_i32 = arith.constant 0 : i32
    %c0_i32_0 = arith.constant 0 : i32
    return %arg0, %c0_i32, %arg3 : i32, i32, i32
  }
  func.func @transform_3(%arg0: i32, %arg1: i32, %arg2: i32, %arg3: i32) -> (i32, i32, i32) {
    %c0_i32 = arith.constant 0 : i32
    return %arg0, %arg3, %arg2 : i32, i32, i32
  }
  func.func @transform_4(%arg0: i32, %arg1: i32, %arg2: i32, %arg3: i32) -> (i32, i32, i32) {
    %c0_i32 = arith.constant 0 : i32
    return %arg0, %arg1, %arg2 : i32, i32, i32
  }
}

module attributes {stable_mosaic.version = 11 : i64} {
  func.func @kernel(%arg0: i32, %arg1: i32, %arg2: i32, %arg3: i32, %arg4: memref<1x128x256xbf16, #tpu.memory_space<vmem>>, %arg5: memref<1x1x256xf32, #tpu.memory_space<vmem>>, %arg6: memref<1x1x256xf32, #tpu.memory_space<vmem>>, %arg7: memref<1x256x128xbf16, #tpu.memory_space<vmem>>, %arg8: memref<1x128x128xf32, #tpu.memory_space<vmem>>) attributes {dimension_semantics = [#tpu.dimension_semantics<parallel>, #tpu.dimension_semantics<parallel>, #tpu.dimension_semantics<parallel>, #tpu.dimension_semantics<arbitrary>], iteration_bounds = array<i64: 4, 1, 1, 1>, scalar_prefetch = 0 : i64, scratch_operands = 0 : i64, tpu.core_type = #tpu.core_type<tc>, window_params = [{transform_indices = @transform_0, window_bounds = array<i64: 1, 128, 256>}, {transform_indices = @transform_1, window_bounds = array<i64: 1, 1, 256>}, {transform_indices = @transform_2, window_bounds = array<i64: 1, 1, 256>}, {transform_indices = @transform_3, window_bounds = array<i64: 1, 256, 128>}, {transform_indices = @transform_4, window_bounds = array<i64: 1, 128, 128>}]} {
    %c0 = arith.constant 0 : index
    %c0_0 = arith.constant 0 : index
    %c0_1 = arith.constant 0 : index
    %0 = vector.load %arg4[%c0, %c0_0, %c0_1] : memref<1x128x256xbf16, #tpu.memory_space<vmem>>, vector<1x128x256xbf16>
    %1 = vector.shape_cast %0 : vector<1x128x256xbf16> to vector<128x256xbf16>
    %2 = arith.extf %1 : vector<128x256xbf16> to vector<128x256xf32>
    %c0_2 = arith.constant 0 : index
    %c0_3 = arith.constant 0 : index
    %c0_4 = arith.constant 0 : index
    %3 = vector.load %arg5[%c0_2, %c0_3, %c0_4] : memref<1x1x256xf32, #tpu.memory_space<vmem>>, vector<1x1x256xf32>
    %4 = vector.shape_cast %3 : vector<1x1x256xf32> to vector<1x256xf32>
    %5 = vector.broadcast %4 : vector<1x256xf32> to vector<128x256xf32>
    %6 = arith.mulf %2, %5 : vector<128x256xf32>
    %c0_5 = arith.constant 0 : index
    %c0_6 = arith.constant 0 : index
    %c0_7 = arith.constant 0 : index
    %7 = vector.load %arg6[%c0_5, %c0_6, %c0_7] : memref<1x1x256xf32, #tpu.memory_space<vmem>>, vector<1x1x256xf32>
    %8 = vector.shape_cast %7 : vector<1x1x256xf32> to vector<1x256xf32>
    %9 = vector.broadcast %8 : vector<1x256xf32> to vector<128x256xf32>
    %10 = arith.addf %6, %9 : vector<128x256xf32>
    %cst = arith.constant 0.000000e+00 : f32
    %11 = vector.broadcast %cst : f32 to vector<128x256xf32>
    %12 = arith.maximumf %10, %11 : vector<128x256xf32>
    %13 = arith.truncf %12 : vector<128x256xf32> to vector<128x256xbf16>
    %c0_8 = arith.constant 0 : index
    %c0_9 = arith.constant 0 : index
    %c0_10 = arith.constant 0 : index
    %14 = vector.load %arg7[%c0_8, %c0_9, %c0_10] : memref<1x256x128xbf16, #tpu.memory_space<vmem>>, vector<1x256x128xbf16>
    %15 = vector.shape_cast %14 : vector<1x256x128xbf16> to vector<256x128xbf16>
    %cst_11 = arith.constant dense<0.000000e+00> : vector<128x128xf32>
    %16 = tpu.matmul %13, %15, %cst_11 {dimension_numbers = #tpu.dot_dimension_numbers<[1], [0], [0], [1], [0, 0, 1, 1], [], []>} : vector<128x256xbf16>, vector<256x128xbf16>, vector<128x128xf32> -> vector<128x128xf32>
    %17 = tpu.iota {dimensions = array<i32: 1>} : vector<128x128xi32>
    %c0_i32 = arith.constant 0 : i32
    %18 = vector.broadcast %c0_i32 : i32 to vector<128x128xi32>
    %19 = arith.cmpi eq, %17, %18 : vector<128x128xi32>
    %c0_i32_12 = arith.constant 0 : i32
    %20 = arith.cmpi eq, %arg2, %c0_i32_12 : i32
    %21 = arith.extui %20 : i1 to i32
    %c0_i32_13 = arith.constant 0 : i32
    %22 = arith.cmpi ne, %21, %c0_i32_13 : i32
    scf.if %22 {
      %cst_16 = arith.constant 0.000000e+00 : f32
      %26 = vector.broadcast %cst_16 : f32 to vector<128x128xf32>
      %27 = arith.maximumf %16, %26 : vector<128x128xf32>
      %28 = math.absf %16 : vector<128x128xf32>
      %cst_17 = arith.constant 0.000000e+00 : f32
      %29 = vector.broadcast %cst_17 : f32 to vector<128x128xf32>
      %30 = arith.subf %29, %28 : vector<128x128xf32>
      %31 = math.exp %30 : vector<128x128xf32>
      %32 = math.log1p %31 : vector<128x128xf32>
      %33 = arith.addf %27, %32 : vector<128x128xf32>
      %34 = arith.select %19, %33, %16 : vector<128x128xi1>, vector<128x128xf32>
      %c0_18 = arith.constant 0 : index
      %c0_19 = arith.constant 0 : index
      %c0_20 = arith.constant 0 : index
      %35 = vector.load %arg8[%c0_18, %c0_19, %c0_20] : memref<1x128x128xf32, #tpu.memory_space<vmem>>, vector<1x128x128xf32>
      %36 = vector.shape_cast %35 : vector<1x128x128xf32> to vector<128x128xf32>
      %37 = vector.shape_cast %34 : vector<128x128xf32> to vector<1x128x128xf32>
      tpu.vector_store %arg8[%c0_18, %c0_19, %c0_20], %37 {strides = array<i32>} : memref<1x128x128xf32, #tpu.memory_space<vmem>>, vector<1x128x128xf32>,
    } else {
    }
    %c0_i32_14 = arith.constant 0 : i32
    %23 = arith.cmpi ne, %arg2, %c0_i32_14 : i32
    %24 = arith.extui %23 : i1 to i32
    %c0_i32_15 = arith.constant 0 : i32
    %25 = arith.cmpi ne, %24, %c0_i32_15 : i32
    scf.if %25 {
      %c0_16 = arith.constant 0 : index
      %c0_17 = arith.constant 0 : index
      %c0_18 = arith.constant 0 : index
      %26 = vector.load %arg8[%c0_16, %c0_17, %c0_18] : memref<1x128x128xf32, #tpu.memory_space<vmem>>, vector<1x128x128xf32>
      %27 = vector.shape_cast %26 : vector<1x128x128xf32> to vector<128x128xf32>
      %28 = vector.shape_cast %16 : vector<128x128xf32> to vector<1x128x128xf32>
      tpu.vector_store %arg8[%c0_16, %c0_17, %c0_18], %28 {strides = array<i32>} : memref<1x128x128xf32, #tpu.memory_space<vmem>>, vector<1x128x128xf32>,
    } else {
    }
    return
  }
  func.func @transform_0(%arg0: i32, %arg1: i32, %arg2: i32, %arg3: i32) -> (i32, i32, i32) {
    %c0_i32 = arith.constant 0 : i32
    return %arg0, %arg1, %arg3 : i32, i32, i32
  }
  func.func @transform_1(%arg0: i32, %arg1: i32, %arg2: i32, %arg3: i32) -> (i32, i32, i32) {
    %c0_i32 = arith.constant 0 : i32
    %c0_i32_0 = arith.constant 0 : i32
    return %arg0, %c0_i32, %arg3 : i32, i32, i32
  }
  func.func @transform_2(%arg0: i32, %arg1: i32, %arg2: i32, %arg3: i32) -> (i32, i32, i32) {
    %c0_i32 = arith.constant 0 : i32
    %c0_i32_0 = arith.constant 0 : i32
    return %arg0, %c0_i32, %arg3 : i32, i32, i32
  }
  func.func @transform_3(%arg0: i32, %arg1: i32, %arg2: i32, %arg3: i32) -> (i32, i32, i32) {
    %c0_i32 = arith.constant 0 : i32
    return %arg0, %arg3, %arg2 : i32, i32, i32
  }
  func.func @transform_4(%arg0: i32, %arg1: i32, %arg2: i32, %arg3: i32) -> (i32, i32, i32) {
    %c0_i32 = arith.constant 0 : i32
    return %arg0, %arg1, %arg2 : i32, i32, i32
  }
}

</mosaic_0001>

<llo_original>
// kernel: _lambda_.13
$region0: #{_lambda_.13}
  #allocation0 [shape = 'u32[]', space=smem, size = 0x4, offset = 0x4, fixed_abs, tag = 'smem constant byte address 0x4 - core index']
  #allocation1 [shape = 'u32[144,128]{1,0:T(1,128)}', space=vmem, size = 0x12000, scoped, tag = 'internal scratch']
  %s0 = inlined_call_operand.vmem [shape: bf16[1,128,256], index: 0, kind: input, shape index: {}]
  %s1 = inlined_call_operand.vmem [shape: bf16[1,256,128], index: 1, kind: input, shape index: {}]
  %s2 = inlined_call_operand.vmem [shape: bf16[1,128,128], index: 2, kind: output, shape index: {}]
  %s3 = sld [smem:[#allocation0]]
  $region18: #{_lambda_.13} parent=0
    _
  %s5 = ssub.s32 1, %s3
  %s6 = scalar_select 0, %s5, %s3
  // Predicated region
  $region2: #{_lambda_.13} parent=0 // pred_check
    _
  $region3: #{_lambda_.13} parent=0 // pred_check_branch
    %8 = sbr.rel (0) target = $region5
  $region4: #{_lambda_.13} parent=0 // pred_region
    _
  $region5: #{_lambda_.13} parent=0 // pred_fallthru
    _
  // Predicated region
  $region6: #{_lambda_.13} parent=0 // pred_check
    _
  $region7: #{_lambda_.13} parent=0 // pred_check_branch
    %10 = sbr.rel (0) target = $region9
  $region8: #{_lambda_.13} parent=0 // pred_region
    _
  $region9: #{_lambda_.13} parent=0 // pred_fallthru
    _
  %v12 = vld [vmem:[%s0] sm:$0xff]
  %v13 = vld [vmem:[%s0 + $0x8] sm:$0xff]
  %v14 = vld [vmem:[%s0 + $0x10] sm:$0xff]
  %v15 = vld [vmem:[%s0 + $0x18] sm:$0xff]
  %v16 = vld [vmem:[%s0 + $0x20] sm:$0xff]
  %v17 = vld [vmem:[%s0 + $0x28] sm:$0xff]
  %v18 = vld [vmem:[%s0 + $0x30] sm:$0xff]
  %v19 = vld [vmem:[%s0 + $0x38] sm:$0xff]
  %v20 = vld [vmem:[%s0 + $0x40] sm:$0xff]
  %v21 = vld [vmem:[%s0 + $0x48] sm:$0xff]
  %v22 = vld [vmem:[%s0 + $0x50] sm:$0xff]
  %v23 = vld [vmem:[%s0 + $0x58] sm:$0xff]
  %v24 = vld [vmem:[%s0 + $0x60] sm:$0xff]
  %v25 = vld [vmem:[%s0 + $0x68] sm:$0xff]
  %v26 = vld [vmem:[%s0 + $0x70] sm:$0xff]
  %v27 = vld [vmem:[%s0 + $0x78] sm:$0xff]
  %v28 = vld [vmem:[%s1] sm:$0xf]
  %v29 = vld [vmem:[%s1 + $0x4] sm:$0xf]
  %v30 = vld [vmem:[%s1 + $0x8] sm:$0xf]
  %v31 = vld [vmem:[%s1 + $0xc] sm:$0xf]
  %v32 = vld [vmem:[%s1 + $0x10] sm:$0xf]
  %v33 = vld [vmem:[%s1 + $0x14] sm:$0xf]
  %v34 = vld [vmem:[%s1 + $0x18] sm:$0xf]
  %v35 = vld [vmem:[%s1 + $0x1c] sm:$0xf]
  %v36 = vld [vmem:[%s1 + $0x20] sm:$0xf]
  %v37 = vld [vmem:[%s1 + $0x24] sm:$0xf]
  %v38 = vld [vmem:[%s1 + $0x28] sm:$0xf]
  %v39 = vld [vmem:[%s1 + $0x2c] sm:$0xf]
  %v40 = vld [vmem:[%s1 + $0x30] sm:$0xf]
  %v41 = vld [vmem:[%s1 + $0x34] sm:$0xf]
  %v42 = vld [vmem:[%s1 + $0x38] sm:$0xf]
  %v43 = vld [vmem:[%s1 + $0x3c] sm:$0xf]
  %v44 = vld [vmem:[%s1 + $0x40] sm:$0xf]
  %v45 = vld [vmem:[%s1 + $0x44] sm:$0xf]
  %v46 = vld [vmem:[%s1 + $0x48] sm:$0xf]
  %v47 = vld [vmem:[%s1 + $0x4c] sm:$0xf]
  %v48 = vld [vmem:[%s1 + $0x50] sm:$0xf]
  %v49 = vld [vmem:[%s1 + $0x54] sm:$0xf]
  %v50 = vld [vmem:[%s1 + $0x58] sm:$0xf]
  %v51 = vld [vmem:[%s1 + $0x5c] sm:$0xf]
  %v52 = vld [vmem:[%s1 + $0x60] sm:$0xf]
  %v53 = vld [vmem:[%s1 + $0x64] sm:$0xf]
  %v54 = vld [vmem:[%s1 + $0x68] sm:$0xf]
  %v55 = vld [vmem:[%s1 + $0x6c] sm:$0xf]
  %v56 = vld [vmem:[%s1 + $0x70] sm:$0xf]
  %v57 = vld [vmem:[%s1 + $0x74] sm:$0xf]
  %v58 = vld [vmem:[%s1 + $0x78] sm:$0xf]
  %v59 = vld [vmem:[%s1 + $0x7c] sm:$0xf]
  %v76 = vunpack.c.l.b16 %v12
  %v77 = vunpack.c.h.b16 %v12
  %v78 = vunpack.c.l.b16 %v13
  %v79 = vunpack.c.h.b16 %v13
  %v80 = vunpack.c.l.b16 %v14
  %v81 = vunpack.c.h.b16 %v14
  %v82 = vunpack.c.l.b16 %v15
  %v83 = vunpack.c.h.b16 %v15
  %v84 = vunpack.c.l.b16 %v16
  %v85 = vunpack.c.h.b16 %v16
  %v86 = vunpack.c.l.b16 %v17
  %v87 = vunpack.c.h.b16 %v17
  %v88 = vunpack.c.l.b16 %v18
  %v89 = vunpack.c.h.b16 %v18
  %v90 = vunpack.c.l.b16 %v19
  %v91 = vunpack.c.h.b16 %v19
  %v92 = vunpack.c.l.b16 %v20
  %v93 = vunpack.c.h.b16 %v20
  %v94 = vunpack.c.l.b16 %v21
  %v95 = vunpack.c.h.b16 %v21
  %v96 = vunpack.c.l.b16 %v22
  %v97 = vunpack.c.h.b16 %v22
  %v98 = vunpack.c.l.b16 %v23
  %v99 = vunpack.c.h.b16 %v23
  %v100 = vunpack.c.l.b16 %v24
  %v101 = vunpack.c.h.b16 %v24
  %v102 = vunpack.c.l.b16 %v25
  %v103 = vunpack.c.h.b16 %v25
  %v104 = vunpack.c.l.b16 %v26
  %v105 = vunpack.c.h.b16 %v26
  %v106 = vunpack.c.l.b16 %v27
  %v107 = vunpack.c.h.b16 %v27
  %v108 = vpack.c.b16 %v78, %v76
  %v109 = vpack.c.b16 %v79, %v77
  %v110 = vpack.c.b16 %v82, %v80
  %v111 = vpack.c.b16 %v83, %v81
  %v112 = vpack.c.b16 %v86, %v84
  %v113 = vpack.c.b16 %v87, %v85
  %v114 = vpack.c.b16 %v90, %v88
  %v115 = vpack.c.b16 %v91, %v89
  %v116 = vpack.c.b16 %v94, %v92
  %v117 = vpack.c.b16 %v95, %v93
  %v118 = vpack.c.b16 %v98, %v96
  %v119 = vpack.c.b16 %v99, %v97
  %v120 = vpack.c.b16 %v102, %v100
  %v121 = vpack.c.b16 %v103, %v101
  %v122 = vpack.c.b16 %v106, %v104
  %v123 = vpack.c.b16 %v107, %v105
  %v172 = vunpack.c.l.b16 %v28
  %v173 = vunpack.c.l.b16 %v29
  %v174 = vunpack.c.l.b16 %v30
  %v175 = vunpack.c.l.b16 %v31
  %v176 = vunpack.c.l.b16 %v32
  %v177 = vunpack.c.l.b16 %v33
  %v178 = vunpack.c.l.b16 %v34
  %v179 = vunpack.c.l.b16 %v35
  %v180 = vunpack.c.l.b16 %v36
  %v181 = vunpack.c.l.b16 %v37
  %v182 = vunpack.c.l.b16 %v38
  %v183 = vunpack.c.l.b16 %v39
  %v184 = vunpack.c.l.b16 %v40
  %v185 = vunpack.c.l.b16 %v41
  %v186 = vunpack.c.l.b16 %v42
  %v187 = vunpack.c.l.b16 %v43
  %v188 = vunpack.c.l.b16 %v44
  %v189 = vunpack.c.l.b16 %v45
  %v190 = vunpack.c.l.b16 %v46
  %v191 = vunpack.c.l.b16 %v47
  %v192 = vunpack.c.l.b16 %v48
  %v193 = vunpack.c.l.b16 %v49
  %v194 = vunpack.c.l.b16 %v50
  %v195 = vunpack.c.l.b16 %v51
  %v196 = vunpack.c.l.b16 %v52
  %v197 = vunpack.c.l.b16 %v53
  %v198 = vunpack.c.l.b16 %v54
  %v199 = vunpack.c.l.b16 %v55
  %v200 = vunpack.c.l.b16 %v56
  %v201 = vunpack.c.l.b16 %v57
  %v202 = vunpack.c.l.b16 %v58
  %v203 = vunpack.c.l.b16 %v59
  %v204 = vpack.c.b16 %v173, %v172
  %v205 = vpack.c.b16 %v175, %v174
  %v206 = vpack.c.b16 %v177, %v176
  %v207 = vpack.c.b16 %v179, %v178
  %v208 = vpack.c.b16 %v181, %v180
  %v209 = vpack.c.b16 %v183, %v182
  %v210 = vpack.c.b16 %v185, %v184
  %v211 = vpack.c.b16 %v187, %v186
  %v212 = vpack.c.b16 %v189, %v188
  %v213 = vpack.c.b16 %v191, %v190
  %v214 = vpack.c.b16 %v193, %v192
  %v215 = vpack.c.b16 %v195, %v194
  %v216 = vpack.c.b16 %v197, %v196
  %v217 = vpack.c.b16 %v199, %v198
  %v218 = vpack.c.b16 %v201, %v200
  %v219 = vpack.c.b16 %v203, %v202
  %236 = vmatprep.subr.bf16.mxu0 0
  %237 = vmatpush1.bf16.msra.mxu0 %v204
  %238 = vmatprep.subr.bf16.mxu0 0
  %239 = vmatpush1.bf16.msra.mxu0 %v205
  %240 = vmatprep.subr.bf16.mxu0 0
  %241 = vmatpush1.bf16.msra.mxu0 %v206
  %242 = vmatprep.subr.bf16.mxu0 0
  %243 = vmatpush1.bf16.msra.mxu0 %v207
  %244 = vmatprep.subr.bf16.mxu0 0
  %245 = vmatpush1.bf16.msra.mxu0 %v208
  %246 = vmatprep.subr.bf16.mxu0 0
  %247 = vmatpush1.bf16.msra.mxu0 %v209
  %248 = vmatprep.subr.bf16.mxu0 0
  %249 = vmatpush1.bf16.msra.mxu0 %v210
  %250 = vmatprep.subr.bf16.mxu0 0
  %251 = vmatpush1.bf16.msra.mxu0 %v211
  %252 = vmatprep.subr.bf16.mxu0 0
  %253 = vmatpush1.bf16.msra.mxu0 %v212
  %254 = vmatprep.subr.bf16.mxu0 0
  %255 = vmatpush1.bf16.msra.mxu0 %v213
  %256 = vmatprep.subr.bf16.mxu0 0
  %257 = vmatpush1.bf16.msra.mxu0 %v214
  %258 = vmatprep.subr.bf16.mxu0 0
  %259 = vmatpush1.bf16.msra.mxu0 %v215
  %260 = vmatprep.subr.bf16.mxu0 0
  %261 = vmatpush1.bf16.msra.mxu0 %v216
  %262 = vmatprep.subr.bf16.mxu0 0
  %263 = vmatpush1.bf16.msra.mxu0 %v217
  %264 = vmatprep.subr.bf16.mxu0 0
  %265 = vmatpush1.bf16.msra.mxu0 %v218
  %266 = vmatprep.subr.bf16.mxu0 0
  %267 = vmatpush1.bf16.msra.mxu0 %v219
  %268 = vmatprep.mubr.bf16.mxu0 %v109
  %269 = vmatmul.mubr.bf16.gmra.mrb[0].mxu0 %v108
  %v270 = vpop.f32.mrb[0].mxu0
  %v271 = vadd.f32 0.0, %v270
  %v272 = vpop.f32.mrb[0].mxu0
  %v273 = vpop.f32.mrb[0].mxu0
  %v274 = vadd.f32 0.0, %v273
  %v275 = vpop.f32.mrb[0].mxu0
  %276 = vmatprep.mubr.bf16.mxu0 %v111
  %277 = vmatmul.mubr.bf16.gmra.mrb[0].mxu0 %v110
  %v278 = vpop.f32.mrb[0].mxu0
  %v279 = vadd.f32 0.0, %v278
  %v280 = vpop.f32.mrb[0].mxu0
  %v281 = vpop.f32.mrb[0].mxu0
  %v282 = vadd.f32 0.0, %v281
  %v283 = vpop.f32.mrb[0].mxu0
  %284 = vmatprep.mubr.bf16.mxu0 %v113
  %285 = vmatmul.mubr.bf16.gmra.mrb[0].mxu0 %v112
  %v286 = vpop.f32.mrb[0].mxu0
  %v287 = vadd.f32 0.0, %v286
  %v288 = vpop.f32.mrb[0].mxu0
  %v289 = vpop.f32.mrb[0].mxu0
  %v290 = vadd.f32 0.0, %v289
  %v291 = vpop.f32.mrb[0].mxu0
  %292 = vmatprep.mubr.bf16.mxu0 %v115
  %293 = vmatmul.mubr.bf16.gmra.mrb[0].mxu0 %v114
  %v294 = vpop.f32.mrb[0].mxu0
  %v295 = vadd.f32 0.0, %v294
  %v296 = vpop.f32.mrb[0].mxu0
  %v297 = vpop.f32.mrb[0].mxu0
  %v298 = vadd.f32 0.0, %v297
  %v299 = vpop.f32.mrb[0].mxu0
  %300 = vmatprep.mubr.bf16.mxu0 %v117
  %301 = vmatmul.mubr.bf16.gmra.mrb[0].mxu0 %v116
  %v302 = vpop.f32.mrb[0].mxu0
  %v303 = vadd.f32 0.0, %v302
  %v304 = vpop.f32.mrb[0].mxu0
  %v305 = vpop.f32.mrb[0].mxu0
  %v306 = vadd.f32 0.0, %v305
  %v307 = vpop.f32.mrb[0].mxu0
  %308 = vmatprep.mubr.bf16.mxu0 %v119
  %309 = vmatmul.mubr.bf16.gmra.mrb[0].mxu0 %v118
  %v310 = vpop.f32.mrb[0].mxu0
  %v311 = vadd.f32 0.0, %v310
  %v312 = vpop.f32.mrb[0].mxu0
  %v313 = vpop.f32.mrb[0].mxu0
  %v314 = vadd.f32 0.0, %v313
  %v315 = vpop.f32.mrb[0].mxu0
  %316 = vmatprep.mubr.bf16.mxu0 %v121
  %317 = vmatmul.mubr.bf16.gmra.mrb[0].mxu0 %v120
  %v318 = vpop.f32.mrb[0].mxu0
  %v319 = vadd.f32 0.0, %v318
  %v320 = vpop.f32.mrb[0].mxu0
  %v321 = vpop.f32.mrb[0].mxu0
  %v322 = vadd.f32 0.0, %v321
  %v323 = vpop.f32.mrb[0].mxu0
  %324 = vmatprep.mubr.bf16.mxu0 %v123
  %325 = vmatmul.mubr.bf16.gmra.mrb[0].mxu0 %v122
  %v326 = vpop.f32.mrb[0].mxu0
  %v327 = vadd.f32 0.0, %v326
  %v328 = vpop.f32.mrb[0].mxu0
  %v329 = vpop.f32.mrb[0].mxu0
  %v330 = vadd.f32 0.0, %v329
  %v331 = vpop.f32.mrb[0].mxu0
  %332 = vdwg.mxu0
  %v333 = vpack.c.bf16 %v274, %v271
  %v334 = vpack.c.bf16 %v282, %v279
  %v335 = vpack.c.bf16 %v290, %v287
  %v336 = vpack.c.bf16 %v298, %v295
  %v337 = vpack.c.bf16 %v306, %v303
  %v338 = vpack.c.bf16 %v314, %v311
  %v339 = vpack.c.bf16 %v322, %v319
  %v340 = vpack.c.bf16 %v330, %v327
  %v349 = vunpack.c.l.b16 %v333
  %v350 = vunpack.c.h.b16 %v333
  %v351 = vunpack.c.l.b16 %v334
  %v352 = vunpack.c.h.b16 %v334
  %v353 = vunpack.c.l.b16 %v335
  %v354 = vunpack.c.h.b16 %v335
  %v355 = vunpack.c.l.b16 %v336
  %v356 = vunpack.c.h.b16 %v336
  %v357 = vunpack.c.l.b16 %v337
  %v358 = vunpack.c.h.b16 %v337
  %v359 = vunpack.c.l.b16 %v338
  %v360 = vunpack.c.h.b16 %v338
  %v361 = vunpack.c.l.b16 %v339
  %v362 = vunpack.c.h.b16 %v339
  %v363 = vunpack.c.l.b16 %v340
  %v364 = vunpack.c.h.b16 %v340
  %v365 = vpack.c.b16 %v349, %v349
  %v366 = vpack.c.b16 %v350, %v350
  %v367 = vpack.c.b16 %v351, %v351
  %v368 = vpack.c.b16 %v352, %v352
  %v369 = vpack.c.b16 %v353, %v353
  %v370 = vpack.c.b16 %v354, %v354
  %v371 = vpack.c.b16 %v355, %v355
  %v372 = vpack.c.b16 %v356, %v356
  %v373 = vpack.c.b16 %v357, %v357
  %v374 = vpack.c.b16 %v358, %v358
  %v375 = vpack.c.b16 %v359, %v359
  %v376 = vpack.c.b16 %v360, %v360
  %v377 = vpack.c.b16 %v361, %v361
  %v378 = vpack.c.b16 %v362, %v362
  %v379 = vpack.c.b16 %v363, %v363
  %v380 = vpack.c.b16 %v364, %v364
  %397 = vst [vmem:[%s2] sm:$0xf] %v365
  %398 = vst [vmem:[%s2 + $0x4] sm:$0xf] %v366
  %399 = vst [vmem:[%s2 + $0x8] sm:$0xf] %v367
  %400 = vst [vmem:[%s2 + $0xc] sm:$0xf] %v368
  %401 = vst [vmem:[%s2 + $0x10] sm:$0xf] %v369
  %402 = vst [vmem:[%s2 + $0x14] sm:$0xf] %v370
  %403 = vst [vmem:[%s2 + $0x18] sm:$0xf] %v371
  %404 = vst [vmem:[%s2 + $0x1c] sm:$0xf] %v372
  %405 = vst [vmem:[%s2 + $0x20] sm:$0xf] %v373
  %406 = vst [vmem:[%s2 + $0x24] sm:$0xf] %v374
  %407 = vst [vmem:[%s2 + $0x28] sm:$0xf] %v375
  %408 = vst [vmem:[%s2 + $0x2c] sm:$0xf] %v376
  %409 = vst [vmem:[%s2 + $0x30] sm:$0xf] %v377
  %410 = vst [vmem:[%s2 + $0x34] sm:$0xf] %v378
  %411 = vst [vmem:[%s2 + $0x38] sm:$0xf] %v379
  %412 = vst [vmem:[%s2 + $0x3c] sm:$0xf] %v380
  // Predicated region
  $region10: #{_lambda_.13} parent=0 // pred_check
    _
  $region11: #{_lambda_.13} parent=0 // pred_check_branch
    %414 = sbr.rel (0) target = $region13
  $region12: #{_lambda_.13} parent=0 // pred_region
    _
  $region13: #{_lambda_.13} parent=0 // pred_fallthru
    _
  // Predicated region
  $region14: #{_lambda_.13} parent=0 // pred_check
    _
  $region15: #{_lambda_.13} parent=0 // pred_check_branch
    %416 = sbr.rel (0) target = $region17
  $region16: #{_lambda_.13} parent=0 // pred_region
    _
  $region17: #{_lambda_.13} parent=0 // pred_fallthru
    _

// kernel: _lambda_.14
$region0: #{_lambda_.14}
  #allocation0 [shape = 'u32[]', space=smem, size = 0x4, offset = 0x4, fixed_abs, tag = 'smem constant byte address 0x4 - core index']
  #allocation1 [shape = 'u32[144,128]{1,0:T(1,128)}', space=vmem, size = 0x12000, scoped, tag = 'internal scratch']
  %s0 = inlined_call_operand.vmem [shape: bf16[1,128,256], index: 0, kind: input, shape index: {}]
  %s1 = inlined_call_operand.vmem [shape: f32[1,1,256], index: 1, kind: input, shape index: {}]
  %s2 = inlined_call_operand.vmem [shape: f32[1,1,256], index: 2, kind: input, shape index: {}]
  %s3 = inlined_call_operand.vmem [shape: bf16[1,256,128], index: 3, kind: input, shape index: {}]
  %s4 = inlined_call_operand.vmem [shape: bf16[1,128,128], index: 4, kind: output, shape index: {}]
  %s5 = sld [smem:[#allocation0]]
  $region26: #{_lambda_.14} parent=0
    _
  %s7 = ssub.s32 1, %s5
  %s8 = scalar_select 0, %s7, %s5
  // Predicated region
  $region2: #{_lambda_.14} parent=0 // pred_check
    _
  $region3: #{_lambda_.14} parent=0 // pred_check_branch
    %10 = sbr.rel (0) target = $region5
  $region4: #{_lambda_.14} parent=0 // pred_region
    _
  $region5: #{_lambda_.14} parent=0 // pred_fallthru
    _
  // Predicated region
  $region6: #{_lambda_.14} parent=0 // pred_check
    _
  $region7: #{_lambda_.14} parent=0 // pred_check_branch
    %12 = sbr.rel (0) target = $region9
  $region8: #{_lambda_.14} parent=0 // pred_region
    _
  $region9: #{_lambda_.14} parent=0 // pred_fallthru
    _
  // Predicated region
  $region10: #{_lambda_.14} parent=0 // pred_check
    _
  $region11: #{_lambda_.14} parent=0 // pred_check_branch
    %14 = sbr.rel (0) target = $region13
  $region12: #{_lambda_.14} parent=0 // pred_region
    _
  $region13: #{_lambda_.14} parent=0 // pred_fallthru
    _
  // Predicated region
  $region14: #{_lambda_.14} parent=0 // pred_check
    _
  $region15: #{_lambda_.14} parent=0 // pred_check_branch
    %16 = sbr.rel (0) target = $region17
  $region16: #{_lambda_.14} parent=0 // pred_region
    _
  $region17: #{_lambda_.14} parent=0 // pred_fallthru
    _
  %v18 = vld [vmem:[%s0] sm:$0xff]
  %v19 = vld [vmem:[%s0 + $0x8] sm:$0xff]
  %v20 = vld [vmem:[%s0 + $0x10] sm:$0xff]
  %v21 = vld [vmem:[%s0 + $0x18] sm:$0xff]
  %v22 = vld [vmem:[%s0 + $0x20] sm:$0xff]
  %v23 = vld [vmem:[%s0 + $0x28] sm:$0xff]
  %v24 = vld [vmem:[%s0 + $0x30] sm:$0xff]
  %v25 = vld [vmem:[%s0 + $0x38] sm:$0xff]
  %v26 = vld [vmem:[%s0 + $0x40] sm:$0xff]
  %v27 = vld [vmem:[%s0 + $0x48] sm:$0xff]
  %v28 = vld [vmem:[%s0 + $0x50] sm:$0xff]
  %v29 = vld [vmem:[%s0 + $0x58] sm:$0xff]
  %v30 = vld [vmem:[%s0 + $0x60] sm:$0xff]
  %v31 = vld [vmem:[%s0 + $0x68] sm:$0xff]
  %v32 = vld [vmem:[%s0 + $0x70] sm:$0xff]
  %v33 = vld [vmem:[%s0 + $0x78] sm:$0xff]
  %v34 = vunpack.c.l.bf16 %v18
  %v35 = vunpack.c.h.bf16 %v18
  %v36 = vunpack.c.l.bf16 %v19
  %v37 = vunpack.c.h.bf16 %v19
  %v38 = vunpack.c.l.bf16 %v20
  %v39 = vunpack.c.h.bf16 %v20
  %v40 = vunpack.c.l.bf16 %v21
  %v41 = vunpack.c.h.bf16 %v21
  %v42 = vunpack.c.l.bf16 %v22
  %v43 = vunpack.c.h.bf16 %v22
  %v44 = vunpack.c.l.bf16 %v23
  %v45 = vunpack.c.h.bf16 %v23
  %v46 = vunpack.c.l.bf16 %v24
  %v47 = vunpack.c.h.bf16 %v24
  %v48 = vunpack.c.l.bf16 %v25
  %v49 = vunpack.c.h.bf16 %v25
  %v50 = vunpack.c.l.bf16 %v26
  %v51 = vunpack.c.h.bf16 %v26
  %v52 = vunpack.c.l.bf16 %v27
  %v53 = vunpack.c.h.bf16 %v27
  %v54 = vunpack.c.l.bf16 %v28
  %v55 = vunpack.c.h.bf16 %v28
  %v56 = vunpack.c.l.bf16 %v29
  %v57 = vunpack.c.h.bf16 %v29
  %v58 = vunpack.c.l.bf16 %v30
  %v59 = vunpack.c.h.bf16 %v30
  %v60 = vunpack.c.l.bf16 %v31
  %v61 = vunpack.c.h.bf16 %v31
  %v62 = vunpack.c.l.bf16 %v32
  %v63 = vunpack.c.h.bf16 %v32
  %v64 = vunpack.c.l.bf16 %v33
  %v65 = vunpack.c.h.bf16 %v33
  %v66 = vld [vmem:[%s1] sm:$0x3]
  %v68 = vlaneseq
  %v69 = vshrl.u32 %v68, 7
  %v70 = vsub.s32 0, %v69
  %v71 = vrot.slane %v66, %v70
  %v72 = vlaneseq
  %v73 = vshrl.u32 %v72, 7
  %v74 = vsub.s32 1, %v73
  %v75 = vrot.slane %v66, %v74
  %v78 = vmul.f32 %v34, %v71
  %v79 = vmul.f32 %v35, %v75
  %v80 = vmul.f32 %v36, %v71
  %v81 = vmul.f32 %v37, %v75
  %v82 = vmul.f32 %v38, %v71
  %v83 = vmul.f32 %v39, %v75
  %v84 = vmul.f32 %v40, %v71
  %v85 = vmul.f32 %v41, %v75
  %v86 = vmul.f32 %v42, %v71
  %v87 = vmul.f32 %v43, %v75
  %v88 = vmul.f32 %v44, %v71
  %v89 = vmul.f32 %v45, %v75
  %v90 = vmul.f32 %v46, %v71
  %v91 = vmul.f32 %v47, %v75
  %v92 = vmul.f32 %v48, %v71
  %v93 = vmul.f32 %v49, %v75
  %v94 = vmul.f32 %v50, %v71
  %v95 = vmul.f32 %v51, %v75
  %v96 = vmul.f32 %v52, %v71
  %v97 = vmul.f32 %v53, %v75
  %v98 = vmul.f32 %v54, %v71
  %v99 = vmul.f32 %v55, %v75
  %v100 = vmul.f32 %v56, %v71
  %v101 = vmul.f32 %v57, %v75
  %v102 = vmul.f32 %v58, %v71
  %v103 = vmul.f32 %v59, %v75
  %v104 = vmul.f32 %v60, %v71
  %v105 = vmul.f32 %v61, %v75
  %v106 = vmul.f32 %v62, %v71
  %v107 = vmul.f32 %v63, %v75
  %v108 = vmul.f32 %v64, %v71
  %v109 = vmul.f32 %v65, %v75
  %v110 = vld [vmem:[%s2] sm:$0x3]
  %v112 = vlaneseq
  %v113 = vshrl.u32 %v112, 7
  %v114 = vsub.s32 0, %v113
  %v115 = vrot.slane %v110, %v114
  %v116 = vlaneseq
  %v117 = vshrl.u32 %v116, 7
  %v118 = vsub.s32 1, %v117
  %v119 = vrot.slane %v110, %v118
  %v122 = vadd.f32 %v78, %v115
  %v123 = vadd.f32 %v79, %v119
  %v124 = vadd.f32 %v80, %v115
  %v125 = vadd.f32 %v81, %v119
  %v126 = vadd.f32 %v82, %v115
  %v127 = vadd.f32 %v83, %v119
  %v128 = vadd.f32 %v84, %v115
  %v129 = vadd.f32 %v85, %v119
  %v130 = vadd.f32 %v86, %v115
  %v131 = vadd.f32 %v87, %v119
  %v132 = vadd.f32 %v88, %v115
  %v133 = vadd.f32 %v89, %v119
  %v134 = vadd.f32 %v90, %v115
  %v135 = vadd.f32 %v91, %v119
  %v136 = vadd.f32 %v92, %v115
  %v137 = vadd.f32 %v93, %v119
  %v138 = vadd.f32 %v94, %v115
  %v139 = vadd.f32 %v95, %v119
  %v140 = vadd.f32 %v96, %v115
  %v141 = vadd.f32 %v97, %v119
  %v142 = vadd.f32 %v98, %v115
  %v143 = vadd.f32 %v99, %v119
  %v144 = vadd.f32 %v100, %v115
  %v145 = vadd.f32 %v101, %v119
  %v146 = vadd.f32 %v102, %v115
  %v147 = vadd.f32 %v103, %v119
  %v148 = vadd.f32 %v104, %v115
  %v149 = vadd.f32 %v105, %v119
  %v150 = vadd.f32 %v106, %v115
  %v151 = vadd.f32 %v107, %v119
  %v152 = vadd.f32 %v108, %v115
  %v153 = vadd.f32 %v109, %v119
  %v154 = vmax.f32 %v122, 0.0
  %v155 = vmax.f32 %v123, 0.0
  %v156 = vmax.f32 %v124, 0.0
  %v157 = vmax.f32 %v125, 0.0
  %v158 = vmax.f32 %v126, 0.0
  %v159 = vmax.f32 %v127, 0.0
  %v160 = vmax.f32 %v128, 0.0
  %v161 = vmax.f32 %v129, 0.0
  %v162 = vmax.f32 %v130, 0.0
  %v163 = vmax.f32 %v131, 0.0
  %v164 = vmax.f32 %v132, 0.0
  %v165 = vmax.f32 %v133, 0.0
  %v166 = vmax.f32 %v134, 0.0
  %v167 = vmax.f32 %v135, 0.0
  %v168 = vmax.f32 %v136, 0.0
  %v169 = vmax.f32 %v137, 0.0
  %v170 = vmax.f32 %v138, 0.0
  %v171 = vmax.f32 %v139, 0.0
  %v172 = vmax.f32 %v140, 0.0
  %v173 = vmax.f32 %v141, 0.0
  %v174 = vmax.f32 %v142, 0.0
  %v175 = vmax.f32 %v143, 0.0
  %v176 = vmax.f32 %v144, 0.0
  %v177 = vmax.f32 %v145, 0.0
  %v178 = vmax.f32 %v146, 0.0
  %v179 = vmax.f32 %v147, 0.0
  %v180 = vmax.f32 %v148, 0.0
  %v181 = vmax.f32 %v149, 0.0
  %v182 = vmax.f32 %v150, 0.0
  %v183 = vmax.f32 %v151, 0.0
  %v184 = vmax.f32 %v152, 0.0
  %v185 = vmax.f32 %v153, 0.0
  %v186 = vpack.c.bf16 %v156, %v154
  %v187 = vpack.c.bf16 %v157, %v155
  %v188 = vpack.c.bf16 %v160, %v158
  %v189 = vpack.c.bf16 %v161, %v159
  %v190 = vpack.c.bf16 %v164, %v162
  %v191 = vpack.c.bf16 %v165, %v163
  %v192 = vpack.c.bf16 %v168, %v166
  %v193 = vpack.c.bf16 %v169, %v167
  %v194 = vpack.c.bf16 %v172, %v170
  %v195 = vpack.c.bf16 %v173, %v171
  %v196 = vpack.c.bf16 %v176, %v174
  %v197 = vpack.c.bf16 %v177, %v175
  %v198 = vpack.c.bf16 %v180, %v178
  %v199 = vpack.c.bf16 %v181, %v179
  %v200 = vpack.c.bf16 %v184, %v182
  %v201 = vpack.c.bf16 %v185, %v183
  %v202 = vld [vmem:[%s3] sm:$0xf]
  %v203 = vld [vmem:[%s3 + $0x4] sm:$0xf]
  %v204 = vld [vmem:[%s3 + $0x8] sm:$0xf]
  %v205 = vld [vmem:[%s3 + $0xc] sm:$0xf]
  %v206 = vld [vmem:[%s3 + $0x10] sm:$0xf]
  %v207 = vld [vmem:[%s3 + $0x14] sm:$0xf]
  %v208 = vld [vmem:[%s3 + $0x18] sm:$0xf]
  %v209 = vld [vmem:[%s3 + $0x1c] sm:$0xf]
  %v210 = vld [vmem:[%s3 + $0x20] sm:$0xf]
  %v211 = vld [vmem:[%s3 + $0x24] sm:$0xf]
  %v212 = vld [vmem:[%s3 + $0x28] sm:$0xf]
  %v213 = vld [vmem:[%s3 + $0x2c] sm:$0xf]
  %v214 = vld [vmem:[%s3 + $0x30] sm:$0xf]
  %v215 = vld [vmem:[%s3 + $0x34] sm:$0xf]
  %v216 = vld [vmem:[%s3 + $0x38] sm:$0xf]
  %v217 = vld [vmem:[%s3 + $0x3c] sm:$0xf]
  %v218 = vld [vmem:[%s3 + $0x40] sm:$0xf]
  %v219 = vld [vmem:[%s3 + $0x44] sm:$0xf]
  %v220 = vld [vmem:[%s3 + $0x48] sm:$0xf]
  %v221 = vld [vmem:[%s3 + $0x4c] sm:$0xf]
  %v222 = vld [vmem:[%s3 + $0x50] sm:$0xf]
  %v223 = vld [vmem:[%s3 + $0x54] sm:$0xf]
  %v224 = vld [vmem:[%s3 + $0x58] sm:$0xf]
  %v225 = vld [vmem:[%s3 + $0x5c] sm:$0xf]
  %v226 = vld [vmem:[%s3 + $0x60] sm:$0xf]
  %v227 = vld [vmem:[%s3 + $0x64] sm:$0xf]
  %v228 = vld [vmem:[%s3 + $0x68] sm:$0xf]
  %v229 = vld [vmem:[%s3 + $0x6c] sm:$0xf]
  %v230 = vld [vmem:[%s3 + $0x70] sm:$0xf]
  %v231 = vld [vmem:[%s3 + $0x74] sm:$0xf]
  %v232 = vld [vmem:[%s3 + $0x78] sm:$0xf]
  %v233 = vld [vmem:[%s3 + $0x7c] sm:$0xf]
  %v266 = vunpack.c.l.b16 %v202
  %v267 = vunpack.c.l.b16 %v203
  %v268 = vunpack.c.l.b16 %v204
  %v269 = vunpack.c.l.b16 %v205
  %v270 = vunpack.c.l.b16 %v206
  %v271 = vunpack.c.l.b16 %v207
  %v272 = vunpack.c.l.b16 %v208
  %v273 = vunpack.c.l.b16 %v209
  %v274 = vunpack.c.l.b16 %v210
  %v275 = vunpack.c.l.b16 %v211
  %v276 = vunpack.c.l.b16 %v212
  %v277 = vunpack.c.l.b16 %v213
  %v278 = vunpack.c.l.b16 %v214
  %v279 = vunpack.c.l.b16 %v215
  %v280 = vunpack.c.l.b16 %v216
  %v281 = vunpack.c.l.b16 %v217
  %v282 = vunpack.c.l.b16 %v218
  %v283 = vunpack.c.l.b16 %v219
  %v284 = vunpack.c.l.b16 %v220
  %v285 = vunpack.c.l.b16 %v221
  %v286 = vunpack.c.l.b16 %v222
  %v287 = vunpack.c.l.b16 %v223
  %v288 = vunpack.c.l.b16 %v224
  %v289 = vunpack.c.l.b16 %v225
  %v290 = vunpack.c.l.b16 %v226
  %v291 = vunpack.c.l.b16 %v227
  %v292 = vunpack.c.l.b16 %v228
  %v293 = vunpack.c.l.b16 %v229
  %v294 = vunpack.c.l.b16 %v230
  %v295 = vunpack.c.l.b16 %v231
  %v296 = vunpack.c.l.b16 %v232
  %v297 = vunpack.c.l.b16 %v233
  %v298 = vpack.c.b16 %v267, %v266
  %v299 = vpack.c.b16 %v269, %v268
  %v300 = vpack.c.b16 %v271, %v270
  %v301 = vpack.c.b16 %v273, %v272
  %v302 = vpack.c.b16 %v275, %v274
  %v303 = vpack.c.b16 %v277, %v276
  %v304 = vpack.c.b16 %v279, %v278
  %v305 = vpack.c.b16 %v281, %v280
  %v306 = vpack.c.b16 %v283, %v282
  %v307 = vpack.c.b16 %v285, %v284
  %v308 = vpack.c.b16 %v287, %v286
  %v309 = vpack.c.b16 %v289, %v288
  %v310 = vpack.c.b16 %v291, %v290
  %v311 = vpack.c.b16 %v293, %v292
  %v312 = vpack.c.b16 %v295, %v294
  %v313 = vpack.c.b16 %v297, %v296
  %330 = vmatprep.subr.bf16.mxu0 0
  %331 = vmatpush1.bf16.msra.mxu0 %v298
  %332 = vmatprep.subr.bf16.mxu0 0
  %333 = vmatpush1.bf16.msra.mxu0 %v299
  %334 = vmatprep.subr.bf16.mxu0 0
  %335 = vmatpush1.bf16.msra.mxu0 %v300
  %336 = vmatprep.subr.bf16.mxu0 0
  %337 = vmatpush1.bf16.msra.mxu0 %v301
  %338 = vmatprep.subr.bf16.mxu0 0
  %339 = vmatpush1.bf16.msra.mxu0 %v302
  %340 = vmatprep.subr.bf16.mxu0 0
  %341 = vmatpush1.bf16.msra.mxu0 %v303
  %342 = vmatprep.subr.bf16.mxu0 0
  %343 = vmatpush1.bf16.msra.mxu0 %v304
  %344 = vmatprep.subr.bf16.mxu0 0
  %345 = vmatpush1.bf16.msra.mxu0 %v305
  %346 = vmatprep.subr.bf16.mxu0 0
  %347 = vmatpush1.bf16.msra.mxu0 %v306
  %348 = vmatprep.subr.bf16.mxu0 0
  %349 = vmatpush1.bf16.msra.mxu0 %v307
  %350 = vmatprep.subr.bf16.mxu0 0
  %351 = vmatpush1.bf16.msra.mxu0 %v308
  %352 = vmatprep.subr.bf16.mxu0 0
  %353 = vmatpush1.bf16.msra.mxu0 %v309
  %354 = vmatprep.subr.bf16.mxu0 0
  %355 = vmatpush1.bf16.msra.mxu0 %v310
  %356 = vmatprep.subr.bf16.mxu0 0
  %357 = vmatpush1.bf16.msra.mxu0 %v311
  %358 = vmatprep.subr.bf16.mxu0 0
  %359 = vmatpush1.bf16.msra.mxu0 %v312
  %360 = vmatprep.subr.bf16.mxu0 0
  %361 = vmatpush1.bf16.msra.mxu0 %v313
  %362 = vmatprep.mubr.bf16.mxu0 %v187
  %363 = vmatmul.mubr.bf16.gmra.mrb[0].mxu0 %v186
  %v364 = vpop.f32.mrb[0].mxu0
  %v365 = vadd.f32 0.0, %v364
  %v366 = vpop.f32.mrb[0].mxu0
  %v367 = vpop.f32.mrb[0].mxu0
  %v368 = vadd.f32 0.0, %v367
  %v369 = vpop.f32.mrb[0].mxu0
  %370 = vmatprep.mubr.bf16.mxu0 %v189
  %371 = vmatmul.mubr.bf16.gmra.mrb[0].mxu0 %v188
  %v372 = vpop.f32.mrb[0].mxu0
  %v373 = vadd.f32 0.0, %v372
  %v374 = vpop.f32.mrb[0].mxu0
  %v375 = vpop.f32.mrb[0].mxu0
  %v376 = vadd.f32 0.0, %v375
  %v377 = vpop.f32.mrb[0].mxu0
  %378 = vmatprep.mubr.bf16.mxu0 %v191
  %379 = vmatmul.mubr.bf16.gmra.mrb[0].mxu0 %v190
  %v380 = vpop.f32.mrb[0].mxu0
  %v381 = vadd.f32 0.0, %v380
  %v382 = vpop.f32.mrb[0].mxu0
  %v383 = vpop.f32.mrb[0].mxu0
  %v384 = vadd.f32 0.0, %v383
  %v385 = vpop.f32.mrb[0].mxu0
  %386 = vmatprep.mubr.bf16.mxu0 %v193
  %387 = vmatmul.mubr.bf16.gmra.mrb[0].mxu0 %v192
  %v388 = vpop.f32.mrb[0].mxu0
  %v389 = vadd.f32 0.0, %v388
  %v390 = vpop.f32.mrb[0].mxu0
  %v391 = vpop.f32.mrb[0].mxu0
  %v392 = vadd.f32 0.0, %v391
  %v393 = vpop.f32.mrb[0].mxu0
  %394 = vmatprep.mubr.bf16.mxu0 %v195
  %395 = vmatmul.mubr.bf16.gmra.mrb[0].mxu0 %v194
  %v396 = vpop.f32.mrb[0].mxu0
  %v397 = vadd.f32 0.0, %v396
  %v398 = vpop.f32.mrb[0].mxu0
  %v399 = vpop.f32.mrb[0].mxu0
  %v400 = vadd.f32 0.0, %v399
  %v401 = vpop.f32.mrb[0].mxu0
  %402 = vmatprep.mubr.bf16.mxu0 %v197
  %403 = vmatmul.mubr.bf16.gmra.mrb[0].mxu0 %v196
  %v404 = vpop.f32.mrb[0].mxu0
  %v405 = vadd.f32 0.0, %v404
  %v406 = vpop.f32.mrb[0].mxu0
  %v407 = vpop.f32.mrb[0].mxu0
  %v408 = vadd.f32 0.0, %v407
  %v409 = vpop.f32.mrb[0].mxu0
  %410 = vmatprep.mubr.bf16.mxu0 %v199
  %411 = vmatmul.mubr.bf16.gmra.mrb[0].mxu0 %v198
  %v412 = vpop.f32.mrb[0].mxu0
  %v413 = vadd.f32 0.0, %v412
  %v414 = vpop.f32.mrb[0].mxu0
  %v415 = vpop.f32.mrb[0].mxu0
  %v416 = vadd.f32 0.0, %v415
  %v417 = vpop.f32.mrb[0].mxu0
  %418 = vmatprep.mubr.bf16.mxu0 %v201
  %419 = vmatmul.mubr.bf16.gmra.mrb[0].mxu0 %v200
  %v420 = vpop.f32.mrb[0].mxu0
  %v421 = vadd.f32 0.0, %v420
  %v422 = vpop.f32.mrb[0].mxu0
  %v423 = vpop.f32.mrb[0].mxu0
  %v424 = vadd.f32 0.0, %v423
  %v425 = vpop.f32.mrb[0].mxu0
  %426 = vdwg.mxu0
  %v427 = vpack.c.bf16 %v368, %v365
  %v428 = vpack.c.bf16 %v376, %v373
  %v429 = vpack.c.bf16 %v384, %v381
  %v430 = vpack.c.bf16 %v392, %v389
  %v431 = vpack.c.bf16 %v400, %v397
  %v432 = vpack.c.bf16 %v408, %v405
  %v433 = vpack.c.bf16 %v416, %v413
  %v434 = vpack.c.bf16 %v424, %v421
  %v443 = vunpack.c.l.b16 %v427
  %v444 = vunpack.c.h.b16 %v427
  %v445 = vunpack.c.l.b16 %v428
  %v446 = vunpack.c.h.b16 %v428
  %v447 = vunpack.c.l.b16 %v429
  %v448 = vunpack.c.h.b16 %v429
  %v449 = vunpack.c.l.b16 %v430
  %v450 = vunpack.c.h.b16 %v430
  %v451 = vunpack.c.l.b16 %v431
  %v452 = vunpack.c.h.b16 %v431
  %v453 = vunpack.c.l.b16 %v432
  %v454 = vunpack.c.h.b16 %v432
  %v455 = vunpack.c.l.b16 %v433
  %v456 = vunpack.c.h.b16 %v433
  %v457 = vunpack.c.l.b16 %v434
  %v458 = vunpack.c.h.b16 %v434
  %v459 = vpack.c.b16 %v443, %v443
  %v460 = vpack.c.b16 %v444, %v444
  %v461 = vpack.c.b16 %v445, %v445
  %v462 = vpack.c.b16 %v446, %v446
  %v463 = vpack.c.b16 %v447, %v447
  %v464 = vpack.c.b16 %v448, %v448
  %v465 = vpack.c.b16 %v449, %v449
  %v466 = vpack.c.b16 %v450, %v450
  %v467 = vpack.c.b16 %v451, %v451
  %v468 = vpack.c.b16 %v452, %v452
  %v469 = vpack.c.b16 %v453, %v453
  %v470 = vpack.c.b16 %v454, %v454
  %v471 = vpack.c.b16 %v455, %v455
  %v472 = vpack.c.b16 %v456, %v456
  %v473 = vpack.c.b16 %v457, %v457
  %v474 = vpack.c.b16 %v458, %v458
  %491 = vst [vmem:[%s4] sm:$0xf] %v459
  %492 = vst [vmem:[%s4 + $0x4] sm:$0xf] %v460
  %493 = vst [vmem:[%s4 + $0x8] sm:$0xf] %v461
  %494 = vst [vmem:[%s4 + $0xc] sm:$0xf] %v462
  %495 = vst [vmem:[%s4 + $0x10] sm:$0xf] %v463
  %496 = vst [vmem:[%s4 + $0x14] sm:$0xf] %v464
  %497 = vst [vmem:[%s4 + $0x18] sm:$0xf] %v465
  %498 = vst [vmem:[%s4 + $0x1c] sm:$0xf] %v466
  %499 = vst [vmem:[%s4 + $0x20] sm:$0xf] %v467
  %500 = vst [vmem:[%s4 + $0x24] sm:$0xf] %v468
  %501 = vst [vmem:[%s4 + $0x28] sm:$0xf] %v469
  %502 = vst [vmem:[%s4 + $0x2c] sm:$0xf] %v470
  %503 = vst [vmem:[%s4 + $0x30] sm:$0xf] %v471
  %504 = vst [vmem:[%s4 + $0x34] sm:$0xf] %v472
  %505 = vst [vmem:[%s4 + $0x38] sm:$0xf] %v473
  %506 = vst [vmem:[%s4 + $0x3c] sm:$0xf] %v474
  // Predicated region
  $region18: #{_lambda_.14} parent=0 // pred_check
    _
  $region19: #{_lambda_.14} parent=0 // pred_check_branch
    %508 = sbr.rel (0) target = $region21
  $region20: #{_lambda_.14} parent=0 // pred_region
    _
  $region21: #{_lambda_.14} parent=0 // pred_fallthru
    _
  // Predicated region
  $region22: #{_lambda_.14} parent=0 // pred_check
    _
  $region23: #{_lambda_.14} parent=0 // pred_check_branch
    %510 = sbr.rel (0) target = $region25
  $region24: #{_lambda_.14} parent=0 // pred_region
    _
  $region25: #{_lambda_.14} parent=0 // pred_fallthru
    _

// kernel: _lambda_.16
$region0: #{_lambda_.16}
  #allocation0 [shape = 'u32[]', space=smem, size = 0x4, offset = 0x4, fixed_abs, tag = 'smem constant byte address 0x4 - core index']
  #allocation1 [shape = 'u32[144,128]{1,0:T(1,128)}', space=vmem, size = 0x12000, scoped, tag = 'internal scratch']
  %s0 = inlined_call_operand.vmem [shape: bf16[1,128,128], index: 0, kind: input, shape index: {}]
  %s1 = inlined_call_operand.vmem [shape: f32[1,1,128], index: 1, kind: input, shape index: {}]
  %s2 = inlined_call_operand.vmem [shape: f32[1,1,128], index: 2, kind: input, shape index: {}]
  %s3 = inlined_call_operand.vmem [shape: bf16[1,128,128], index: 3, kind: input, shape index: {}]
  %s4 = inlined_call_operand.vmem [shape: bf16[1,128,128], index: 4, kind: output, shape index: {}]
  %s5 = sld [smem:[#allocation0]]
  $region26: #{_lambda_.16} parent=0
    _
  %s7 = ssub.s32 1, %s5
  %s8 = scalar_select 0, %s7, %s5
  // Predicated region
  $region2: #{_lambda_.16} parent=0 // pred_check
    _
  $region3: #{_lambda_.16} parent=0 // pred_check_branch
    %10 = sbr.rel (0) target = $region5
  $region4: #{_lambda_.16} parent=0 // pred_region
    _
  $region5: #{_lambda_.16} parent=0 // pred_fallthru
    _
  // Predicated region
  $region6: #{_lambda_.16} parent=0 // pred_check
    _
  $region7: #{_lambda_.16} parent=0 // pred_check_branch
    %12 = sbr.rel (0) target = $region9
  $region8: #{_lambda_.16} parent=0 // pred_region
    _
  $region9: #{_lambda_.16} parent=0 // pred_fallthru
    _
  // Predicated region
  $region10: #{_lambda_.16} parent=0 // pred_check
    _
  $region11: #{_lambda_.16} parent=0 // pred_check_branch
    %14 = sbr.rel (0) target = $region13
  $region12: #{_lambda_.16} parent=0 // pred_region
    _
  $region13: #{_lambda_.16} parent=0 // pred_fallthru
    _
  // Predicated region
  $region14: #{_lambda_.16} parent=0 // pred_check
    _
  $region15: #{_lambda_.16} parent=0 // pred_check_branch
    %16 = sbr.rel (0) target = $region17
  $region16: #{_lambda_.16} parent=0 // pred_region
    _
  $region17: #{_lambda_.16} parent=0 // pred_fallthru
    _
  %v18 = vld [vmem:[%s0] sm:$0xf]
  %v19 = vld [vmem:[%s0 + $0x4] sm:$0xf]
  %v20 = vld [vmem:[%s0 + $0x8] sm:$0xf]
  %v21 = vld [vmem:[%s0 + $0xc] sm:$0xf]
  %v22 = vld [vmem:[%s0 + $0x10] sm:$0xf]
  %v23 = vld [vmem:[%s0 + $0x14] sm:$0xf]
  %v24 = vld [vmem:[%s0 + $0x18] sm:$0xf]
  %v25 = vld [vmem:[%s0 + $0x1c] sm:$0xf]
  %v26 = vld [vmem:[%s0 + $0x20] sm:$0xf]
  %v27 = vld [vmem:[%s0 + $0x24] sm:$0xf]
  %v28 = vld [vmem:[%s0 + $0x28] sm:$0xf]
  %v29 = vld [vmem:[%s0 + $0x2c] sm:$0xf]
  %v30 = vld [vmem:[%s0 + $0x30] sm:$0xf]
  %v31 = vld [vmem:[%s0 + $0x34] sm:$0xf]
  %v32 = vld [vmem:[%s0 + $0x38] sm:$0xf]
  %v33 = vld [vmem:[%s0 + $0x3c] sm:$0xf]
  %v34 = vunpack.c.l.bf16 %v18
  %v35 = vunpack.c.l.bf16 %v19
  %v36 = vunpack.c.l.bf16 %v20
  %v37 = vunpack.c.l.bf16 %v21
  %v38 = vunpack.c.l.bf16 %v22
  %v39 = vunpack.c.l.bf16 %v23
  %v40 = vunpack.c.l.bf16 %v24
  %v41 = vunpack.c.l.bf16 %v25
  %v42 = vunpack.c.l.bf16 %v26
  %v43 = vunpack.c.l.bf16 %v27
  %v44 = vunpack.c.l.bf16 %v28
  %v45 = vunpack.c.l.bf16 %v29
  %v46 = vunpack.c.l.bf16 %v30
  %v47 = vunpack.c.l.bf16 %v31
  %v48 = vunpack.c.l.bf16 %v32
  %v49 = vunpack.c.l.bf16 %v33
  %v50 = vld [vmem:[%s1] sm:$0x1]
  %v52 = vlaneseq
  %v53 = vshrl.u32 %v52, 7
  %v54 = vsub.s32 0, %v53
  %v55 = vrot.slane %v50, %v54
  %v57 = vmul.f32 %v34, %v55
  %v58 = vmul.f32 %v35, %v55
  %v59 = vmul.f32 %v36, %v55
  %v60 = vmul.f32 %v37, %v55
  %v61 = vmul.f32 %v38, %v55
  %v62 = vmul.f32 %v39, %v55
  %v63 = vmul.f32 %v40, %v55
  %v64 = vmul.f32 %v41, %v55
  %v65 = vmul.f32 %v42, %v55
  %v66 = vmul.f32 %v43, %v55
  %v67 = vmul.f32 %v44, %v55
  %v68 = vmul.f32 %v45, %v55
  %v69 = vmul.f32 %v46, %v55
  %v70 = vmul.f32 %v47, %v55
  %v71 = vmul.f32 %v48, %v55
  %v72 = vmul.f32 %v49, %v55
  %v73 = vld [vmem:[%s2] sm:$0x1]
  %v75 = vlaneseq
  %v76 = vshrl.u32 %v75, 7
  %v77 = vsub.s32 0, %v76
  %v78 = vrot.slane %v73, %v77
  %v80 = vadd.f32 %v57, %v78
  %v81 = vadd.f32 %v58, %v78
  %v82 = vadd.f32 %v59, %v78
  %v83 = vadd.f32 %v60, %v78
  %v84 = vadd.f32 %v61, %v78
  %v85 = vadd.f32 %v62, %v78
  %v86 = vadd.f32 %v63, %v78
  %v87 = vadd.f32 %v64, %v78
  %v88 = vadd.f32 %v65, %v78
  %v89 = vadd.f32 %v66, %v78
  %v90 = vadd.f32 %v67, %v78
  %v91 = vadd.f32 %v68, %v78
  %v92 = vadd.f32 %v69, %v78
  %v93 = vadd.f32 %v70, %v78
  %v94 = vadd.f32 %v71, %v78
  %v95 = vadd.f32 %v72, %v78
  %v96 = vmax.f32 %v80, 0.0
  %v97 = vmax.f32 %v81, 0.0
  %v98 = vmax.f32 %v82, 0.0
  %v99 = vmax.f32 %v83, 0.0
  %v100 = vmax.f32 %v84, 0.0
  %v101 = vmax.f32 %v85, 0.0
  %v102 = vmax.f32 %v86, 0.0
  %v103 = vmax.f32 %v87, 0.0
  %v104 = vmax.f32 %v88, 0.0
  %v105 = vmax.f32 %v89, 0.0
  %v106 = vmax.f32 %v90, 0.0
  %v107 = vmax.f32 %v91, 0.0
  %v108 = vmax.f32 %v92, 0.0
  %v109 = vmax.f32 %v93, 0.0
  %v110 = vmax.f32 %v94, 0.0
  %v111 = vmax.f32 %v95, 0.0
  %v112 = vpack.c.bf16 %v97, %v96
  %v113 = vpack.c.bf16 %v99, %v98
  %v114 = vpack.c.bf16 %v101, %v100
  %v115 = vpack.c.bf16 %v103, %v102
  %v116 = vpack.c.bf16 %v105, %v104
  %v117 = vpack.c.bf16 %v107, %v106
  %v118 = vpack.c.bf16 %v109, %v108
  %v119 = vpack.c.bf16 %v111, %v110
  %v120 = vld [vmem:[%s3] sm:$0xf]
  %v121 = vld [vmem:[%s3 + $0x4] sm:$0xf]
  %v122 = vld [vmem:[%s3 + $0x8] sm:$0xf]
  %v123 = vld [vmem:[%s3 + $0xc] sm:$0xf]
  %v124 = vld [vmem:[%s3 + $0x10] sm:$0xf]
  %v125 = vld [vmem:[%s3 + $0x14] sm:$0xf]
  %v126 = vld [vmem:[%s3 + $0x18] sm:$0xf]
  %v127 = vld [vmem:[%s3 + $0x1c] sm:$0xf]
  %v128 = vld [vmem:[%s3 + $0x20] sm:$0xf]
  %v129 = vld [vmem:[%s3 + $0x24] sm:$0xf]
  %v130 = vld [vmem:[%s3 + $0x28] sm:$0xf]
  %v131 = vld [vmem:[%s3 + $0x2c] sm:$0xf]
  %v132 = vld [vmem:[%s3 + $0x30] sm:$0xf]
  %v133 = vld [vmem:[%s3 + $0x34] sm:$0xf]
  %v134 = vld [vmem:[%s3 + $0x38] sm:$0xf]
  %v135 = vld [vmem:[%s3 + $0x3c] sm:$0xf]
  %v152 = vunpack.c.l.b16 %v120
  %v153 = vunpack.c.l.b16 %v121
  %v154 = vunpack.c.l.b16 %v122
  %v155 = vunpack.c.l.b16 %v123
  %v156 = vunpack.c.l.b16 %v124
  %v157 = vunpack.c.l.b16 %v125
  %v158 = vunpack.c.l.b16 %v126
  %v159 = vunpack.c.l.b16 %v127
  %v160 = vunpack.c.l.b16 %v128
  %v161 = vunpack.c.l.b16 %v129
  %v162 = vunpack.c.l.b16 %v130
  %v163 = vunpack.c.l.b16 %v131
  %v164 = vunpack.c.l.b16 %v132
  %v165 = vunpack.c.l.b16 %v133
  %v166 = vunpack.c.l.b16 %v134
  %v167 = vunpack.c.l.b16 %v135
  %v168 = vpack.c.b16 %v153, %v152
  %v169 = vpack.c.b16 %v155, %v154
  %v170 = vpack.c.b16 %v157, %v156
  %v171 = vpack.c.b16 %v159, %v158
  %v172 = vpack.c.b16 %v161, %v160
  %v173 = vpack.c.b16 %v163, %v162
  %v174 = vpack.c.b16 %v165, %v164
  %v175 = vpack.c.b16 %v167, %v166
  %184 = vmatprep.subr.bf16.mxu0 0
  %185 = vmatpush1.bf16.msra.mxu0 %v168
  %186 = vmatprep.subr.bf16.mxu0 0
  %187 = vmatpush1.bf16.msra.mxu0 %v169
  %188 = vmatprep.subr.bf16.mxu0 0
  %189 = vmatpush1.bf16.msra.mxu0 %v170
  %190 = vmatprep.subr.bf16.mxu0 0
  %191 = vmatpush1.bf16.msra.mxu0 %v171
  %192 = vmatprep.subr.bf16.mxu0 0
  %193 = vmatpush1.bf16.msra.mxu0 %v172
  %194 = vmatprep.subr.bf16.mxu0 0
  %195 = vmatpush1.bf16.msra.mxu0 %v173
  %196 = vmatprep.subr.bf16.mxu0 0
  %197 = vmatpush1.bf16.msra.mxu0 %v174
  %198 = vmatprep.subr.bf16.mxu0 0
  %199 = vmatpush1.bf16.msra.mxu0 %v175
  %200 = vmatprep.subr.bf16.mxu0 0
  %201 = vmatpush1.bf16.msra.mxu0 0
  %202 = vmatprep.subr.bf16.mxu0 0
  %203 = vmatpush1.bf16.msra.mxu0 0
  %204 = vmatprep.subr.bf16.mxu0 0
  %205 = vmatpush1.bf16.msra.mxu0 0
  %206 = vmatprep.subr.bf16.mxu0 0
  %207 = vmatpush1.bf16.msra.mxu0 0
  %208 = vmatprep.subr.bf16.mxu0 0
  %209 = vmatpush1.bf16.msra.mxu0 0
  %210 = vmatprep.subr.bf16.mxu0 0
  %211 = vmatpush1.bf16.msra.mxu0 0
  %212 = vmatprep.subr.bf16.mxu0 0
  %213 = vmatpush1.bf16.msra.mxu0 0
  %214 = vmatprep.subr.bf16.mxu0 0
  %215 = vmatpush1.bf16.msra.mxu0 0
  %216 = vmatprep.mubr.bf16.mxu0 0
  %217 = vmatmul.mubr.bf16.gmra.mrb[0].mxu0 %v112
  %v218 = vpop.f32.mrb[0].mxu0
  %v219 = vadd.f32 0.0, %v218
  %v220 = vpop.f32.mrb[0].mxu0
  %v221 = vpop.f32.mrb[0].mxu0
  %v222 = vadd.f32 0.0, %v221
  %v223 = vpop.f32.mrb[0].mxu0
  %224 = vmatprep.mubr.bf16.mxu0 0
  %225 = vmatmul.mubr.bf16.gmra.mrb[0].mxu0 %v113
  %v226 = vpop.f32.mrb[0].mxu0
  %v227 = vadd.f32 0.0, %v226
  %v228 = vpop.f32.mrb[0].mxu0
  %v229 = vpop.f32.mrb[0].mxu0
  %v230 = vadd.f32 0.0, %v229
  %v231 = vpop.f32.mrb[0].mxu0
  %232 = vmatprep.mubr.bf16.mxu0 0
  %233 = vmatmul.mubr.bf16.gmra.mrb[0].mxu0 %v114
  %v234 = vpop.f32.mrb[0].mxu0
  %v235 = vadd.f32 0.0, %v234
  %v236 = vpop.f32.mrb[0].mxu0
  %v237 = vpop.f32.mrb[0].mxu0
  %v238 = vadd.f32 0.0, %v237
  %v239 = vpop.f32.mrb[0].mxu0
  %240 = vmatprep.mubr.bf16.mxu0 0
  %241 = vmatmul.mubr.bf16.gmra.mrb[0].mxu0 %v115
  %v242 = vpop.f32.mrb[0].mxu0
  %v243 = vadd.f32 0.0, %v242
  %v244 = vpop.f32.mrb[0].mxu0
  %v245 = vpop.f32.mrb[0].mxu0
  %v246 = vadd.f32 0.0, %v245
  %v247 = vpop.f32.mrb[0].mxu0
  %248 = vmatprep.mubr.bf16.mxu0 0
  %249 = vmatmul.mubr.bf16.gmra.mrb[0].mxu0 %v116
  %v250 = vpop.f32.mrb[0].mxu0
  %v251 = vadd.f32 0.0, %v250
  %v252 = vpop.f32.mrb[0].mxu0
  %v253 = vpop.f32.mrb[0].mxu0
  %v254 = vadd.f32 0.0, %v253
  %v255 = vpop.f32.mrb[0].mxu0
  %256 = vmatprep.mubr.bf16.mxu0 0
  %257 = vmatmul.mubr.bf16.gmra.mrb[0].mxu0 %v117
  %v258 = vpop.f32.mrb[0].mxu0
  %v259 = vadd.f32 0.0, %v258
  %v260 = vpop.f32.mrb[0].mxu0
  %v261 = vpop.f32.mrb[0].mxu0
  %v262 = vadd.f32 0.0, %v261
  %v263 = vpop.f32.mrb[0].mxu0
  %264 = vmatprep.mubr.bf16.mxu0 0
  %265 = vmatmul.mubr.bf16.gmra.mrb[0].mxu0 %v118
  %v266 = vpop.f32.mrb[0].mxu0
  %v267 = vadd.f32 0.0, %v266
  %v268 = vpop.f32.mrb[0].mxu0
  %v269 = vpop.f32.mrb[0].mxu0
  %v270 = vadd.f32 0.0, %v269
  %v271 = vpop.f32.mrb[0].mxu0
  %272 = vmatprep.mubr.bf16.mxu0 0
  %273 = vmatmul.mubr.bf16.gmra.mrb[0].mxu0 %v119
  %v274 = vpop.f32.mrb[0].mxu0
  %v275 = vadd.f32 0.0, %v274
  %v276 = vpop.f32.mrb[0].mxu0
  %v277 = vpop.f32.mrb[0].mxu0
  %v278 = vadd.f32 0.0, %v277
  %v279 = vpop.f32.mrb[0].mxu0
  %280 = vdwg.mxu0
  %v281 = vpack.c.bf16 %v222, %v219
  %v282 = vpack.c.bf16 %v230, %v227
  %v283 = vpack.c.bf16 %v238, %v235
  %v284 = vpack.c.bf16 %v246, %v243
  %v285 = vpack.c.bf16 %v254, %v251
  %v286 = vpack.c.bf16 %v262, %v259
  %v287 = vpack.c.bf16 %v270, %v267
  %v288 = vpack.c.bf16 %v278, %v275
  %v297 = vunpack.c.l.b16 %v281
  %v298 = vunpack.c.h.b16 %v281
  %v299 = vunpack.c.l.b16 %v282
  %v300 = vunpack.c.h.b16 %v282
  %v301 = vunpack.c.l.b16 %v283
  %v302 = vunpack.c.h.b16 %v283
  %v303 = vunpack.c.l.b16 %v284
  %v304 = vunpack.c.h.b16 %v284
  %v305 = vunpack.c.l.b16 %v285
  %v306 = vunpack.c.h.b16 %v285
  %v307 = vunpack.c.l.b16 %v286
  %v308 = vunpack.c.h.b16 %v286
  %v309 = vunpack.c.l.b16 %v287
  %v310 = vunpack.c.h.b16 %v287
  %v311 = vunpack.c.l.b16 %v288
  %v312 = vunpack.c.h.b16 %v288
  %v313 = vpack.c.b16 %v297, %v297
  %v314 = vpack.c.b16 %v298, %v298
  %v315 = vpack.c.b16 %v299, %v299
  %v316 = vpack.c.b16 %v300, %v300
  %v317 = vpack.c.b16 %v301, %v301
  %v318 = vpack.c.b16 %v302, %v302
  %v319 = vpack.c.b16 %v303, %v303
  %v320 = vpack.c.b16 %v304, %v304
  %v321 = vpack.c.b16 %v305, %v305
  %v322 = vpack.c.b16 %v306, %v306
  %v323 = vpack.c.b16 %v307, %v307
  %v324 = vpack.c.b16 %v308, %v308
  %v325 = vpack.c.b16 %v309, %v309
  %v326 = vpack.c.b16 %v310, %v310
  %v327 = vpack.c.b16 %v311, %v311
  %v328 = vpack.c.b16 %v312, %v312
  %345 = vst [vmem:[%s4] sm:$0xf] %v313
  %346 = vst [vmem:[%s4 + $0x4] sm:$0xf] %v314
  %347 = vst [vmem:[%s4 + $0x8] sm:$0xf] %v315
  %348 = vst [vmem:[%s4 + $0xc] sm:$0xf] %v316
  %349 = vst [vmem:[%s4 + $0x10] sm:$0xf] %v317
  %350 = vst [vmem:[%s4 + $0x14] sm:$0xf] %v318
  %351 = vst [vmem:[%s4 + $0x18] sm:$0xf] %v319
  %352 = vst [vmem:[%s4 + $0x1c] sm:$0xf] %v320
  %353 = vst [vmem:[%s4 + $0x20] sm:$0xf] %v321
  %354 = vst [vmem:[%s4 + $0x24] sm:$0xf] %v322
  %355 = vst [vmem:[%s4 + $0x28] sm:$0xf] %v323
  %356 = vst [vmem:[%s4 + $0x2c] sm:$0xf] %v324
  %357 = vst [vmem:[%s4 + $0x30] sm:$0xf] %v325
  %358 = vst [vmem:[%s4 + $0x34] sm:$0xf] %v326
  %359 = vst [vmem:[%s4 + $0x38] sm:$0xf] %v327
  %360 = vst [vmem:[%s4 + $0x3c] sm:$0xf] %v328
  // Predicated region
  $region18: #{_lambda_.16} parent=0 // pred_check
    _
  $region19: #{_lambda_.16} parent=0 // pred_check_branch
    %362 = sbr.rel (0) target = $region21
  $region20: #{_lambda_.16} parent=0 // pred_region
    _
  $region21: #{_lambda_.16} parent=0 // pred_fallthru
    _
  // Predicated region
  $region22: #{_lambda_.16} parent=0 // pred_check
    _
  $region23: #{_lambda_.16} parent=0 // pred_check_branch
    %364 = sbr.rel (0) target = $region25
  $region24: #{_lambda_.16} parent=0 // pred_region
    _
  $region25: #{_lambda_.16} parent=0 // pred_fallthru
    _

// kernel: _lambda_.17
$region0: #{_lambda_.17}
  #allocation0 [shape = 'u32[]', space=smem, size = 0x4, offset = 0x4, fixed_abs, tag = 'smem constant byte address 0x4 - core index']
  #allocation1 [shape = 'u32[144,128]{1,0:T(1,128)}', space=vmem, size = 0x12000, scoped, tag = 'internal scratch']
  %s0 = inlined_call_operand.vmem [shape: bf16[1,32,256], index: 0, kind: input, shape index: {}]
  %s1 = inlined_call_operand.vmem [shape: f32[1,1,256], index: 1, kind: input, shape index: {}]
  %s2 = inlined_call_operand.vmem [shape: f32[1,1,256], index: 2, kind: input, shape index: {}]
  %s3 = inlined_call_operand.vmem [shape: bf16[1,256,128], index: 3, kind: input, shape index: {}]
  %s4 = inlined_call_operand.vmem [shape: bf16[1,32,128], index: 4, kind: output, shape index: {}]
  %s5 = sld [smem:[#allocation0]]
  $region26: #{_lambda_.17} parent=0
    _
  %s7 = ssub.s32 1, %s5
  %s8 = scalar_select 0, %s7, %s5
  // Predicated region
  $region2: #{_lambda_.17} parent=0 // pred_check
    _
  $region3: #{_lambda_.17} parent=0 // pred_check_branch
    %10 = sbr.rel (0) target = $region5
  $region4: #{_lambda_.17} parent=0 // pred_region
    _
  $region5: #{_lambda_.17} parent=0 // pred_fallthru
    _
  // Predicated region
  $region6: #{_lambda_.17} parent=0 // pred_check
    _
  $region7: #{_lambda_.17} parent=0 // pred_check_branch
    %12 = sbr.rel (0) target = $region9
  $region8: #{_lambda_.17} parent=0 // pred_region
    _
  $region9: #{_lambda_.17} parent=0 // pred_fallthru
    _
  // Predicated region
  $region10: #{_lambda_.17} parent=0 // pred_check
    _
  $region11: #{_lambda_.17} parent=0 // pred_check_branch
    %14 = sbr.rel (0) target = $region13
  $region12: #{_lambda_.17} parent=0 // pred_region
    _
  $region13: #{_lambda_.17} parent=0 // pred_fallthru
    _
  // Predicated region
  $region14: #{_lambda_.17} parent=0 // pred_check
    _
  $region15: #{_lambda_.17} parent=0 // pred_check_branch
    %16 = sbr.rel (0) target = $region17
  $region16: #{_lambda_.17} parent=0 // pred_region
    _
  $region17: #{_lambda_.17} parent=0 // pred_fallthru
    _
  %v18 = vld [vmem:[%s0] sm:$0xff]
  %v19 = vld [vmem:[%s0 + $0x8] sm:$0xff]
  %v20 = vld [vmem:[%s0 + $0x10] sm:$0xff]
  %v21 = vld [vmem:[%s0 + $0x18] sm:$0xff]
  %v22 = vunpack.c.l.bf16 %v18
  %v23 = vunpack.c.h.bf16 %v18
  %v24 = vunpack.c.l.bf16 %v19
  %v25 = vunpack.c.h.bf16 %v19
  %v26 = vunpack.c.l.bf16 %v20
  %v27 = vunpack.c.h.bf16 %v20
  %v28 = vunpack.c.l.bf16 %v21
  %v29 = vunpack.c.h.bf16 %v21
  %v30 = vld [vmem:[%s1] sm:$0x3]
  %v32 = vlaneseq
  %v33 = vshrl.u32 %v32, 7
  %v34 = vsub.s32 0, %v33
  %v35 = vrot.slane %v30, %v34
  %v36 = vlaneseq
  %v37 = vshrl.u32 %v36, 7
  %v38 = vsub.s32 1, %v37
  %v39 = vrot.slane %v30, %v38
  %v42 = vmul.f32 %v22, %v35
  %v43 = vmul.f32 %v23, %v39
  %v44 = vmul.f32 %v24, %v35
  %v45 = vmul.f32 %v25, %v39
  %v46 = vmul.f32 %v26, %v35
  %v47 = vmul.f32 %v27, %v39
  %v48 = vmul.f32 %v28, %v35
  %v49 = vmul.f32 %v29, %v39
  %v50 = vld [vmem:[%s2] sm:$0x3]
  %v52 = vlaneseq
  %v53 = vshrl.u32 %v52, 7
  %v54 = vsub.s32 0, %v53
  %v55 = vrot.slane %v50, %v54
  %v56 = vlaneseq
  %v57 = vshrl.u32 %v56, 7
  %v58 = vsub.s32 1, %v57
  %v59 = vrot.slane %v50, %v58
  %v62 = vadd.f32 %v42, %v55
  %v63 = vadd.f32 %v43, %v59
  %v64 = vadd.f32 %v44, %v55
  %v65 = vadd.f32 %v45, %v59
  %v66 = vadd.f32 %v46, %v55
  %v67 = vadd.f32 %v47, %v59
  %v68 = vadd.f32 %v48, %v55
  %v69 = vadd.f32 %v49, %v59
  %v70 = vmax.f32 %v62, 0.0
  %v71 = vmax.f32 %v63, 0.0
  %v72 = vmax.f32 %v64, 0.0
  %v73 = vmax.f32 %v65, 0.0
  %v74 = vmax.f32 %v66, 0.0
  %v75 = vmax.f32 %v67, 0.0
  %v76 = vmax.f32 %v68, 0.0
  %v77 = vmax.f32 %v69, 0.0
  %v78 = vpack.c.bf16 %v72, %v70
  %v79 = vpack.c.bf16 %v73, %v71
  %v80 = vpack.c.bf16 %v76, %v74
  %v81 = vpack.c.bf16 %v77, %v75
  %v82 = vld [vmem:[%s3] sm:$0xf]
  %v83 = vld [vmem:[%s3 + $0x4] sm:$0xf]
  %v84 = vld [vmem:[%s3 + $0x8] sm:$0xf]
  %v85 = vld [vmem:[%s3 + $0xc] sm:$0xf]
  %v86 = vld [vmem:[%s3 + $0x10] sm:$0xf]
  %v87 = vld [vmem:[%s3 + $0x14] sm:$0xf]
  %v88 = vld [vmem:[%s3 + $0x18] sm:$0xf]
  %v89 = vld [vmem:[%s3 + $0x1c] sm:$0xf]
  %v90 = vld [vmem:[%s3 + $0x20] sm:$0xf]
  %v91 = vld [vmem:[%s3 + $0x24] sm:$0xf]
  %v92 = vld [vmem:[%s3 + $0x28] sm:$0xf]
  %v93 = vld [vmem:[%s3 + $0x2c] sm:$0xf]
  %v94 = vld [vmem:[%s3 + $0x30] sm:$0xf]
  %v95 = vld [vmem:[%s3 + $0x34] sm:$0xf]
  %v96 = vld [vmem:[%s3 + $0x38] sm:$0xf]
  %v97 = vld [vmem:[%s3 + $0x3c] sm:$0xf]
  %v98 = vld [vmem:[%s3 + $0x40] sm:$0xf]
  %v99 = vld [vmem:[%s3 + $0x44] sm:$0xf]
  %v100 = vld [vmem:[%s3 + $0x48] sm:$0xf]
  %v101 = vld [vmem:[%s3 + $0x4c] sm:$0xf]
  %v102 = vld [vmem:[%s3 + $0x50] sm:$0xf]
  %v103 = vld [vmem:[%s3 + $0x54] sm:$0xf]
  %v104 = vld [vmem:[%s3 + $0x58] sm:$0xf]
  %v105 = vld [vmem:[%s3 + $0x5c] sm:$0xf]
  %v106 = vld [vmem:[%s3 + $0x60] sm:$0xf]
  %v107 = vld [vmem:[%s3 + $0x64] sm:$0xf]
  %v108 = vld [vmem:[%s3 + $0x68] sm:$0xf]
  %v109 = vld [vmem:[%s3 + $0x6c] sm:$0xf]
  %v110 = vld [vmem:[%s3 + $0x70] sm:$0xf]
  %v111 = vld [vmem:[%s3 + $0x74] sm:$0xf]
  %v112 = vld [vmem:[%s3 + $0x78] sm:$0xf]
  %v113 = vld [vmem:[%s3 + $0x7c] sm:$0xf]
  %v146 = vunpack.c.l.b16 %v82
  %v147 = vunpack.c.l.b16 %v83
  %v148 = vunpack.c.l.b16 %v84
  %v149 = vunpack.c.l.b16 %v85
  %v150 = vunpack.c.l.b16 %v86
  %v151 = vunpack.c.l.b16 %v87
  %v152 = vunpack.c.l.b16 %v88
  %v153 = vunpack.c.l.b16 %v89
  %v154 = vunpack.c.l.b16 %v90
  %v155 = vunpack.c.l.b16 %v91
  %v156 = vunpack.c.l.b16 %v92
  %v157 = vunpack.c.l.b16 %v93
  %v158 = vunpack.c.l.b16 %v94
  %v159 = vunpack.c.l.b16 %v95
  %v160 = vunpack.c.l.b16 %v96
  %v161 = vunpack.c.l.b16 %v97
  %v162 = vunpack.c.l.b16 %v98
  %v163 = vunpack.c.l.b16 %v99
  %v164 = vunpack.c.l.b16 %v100
  %v165 = vunpack.c.l.b16 %v101
  %v166 = vunpack.c.l.b16 %v102
  %v167 = vunpack.c.l.b16 %v103
  %v168 = vunpack.c.l.b16 %v104
  %v169 = vunpack.c.l.b16 %v105
  %v170 = vunpack.c.l.b16 %v106
  %v171 = vunpack.c.l.b16 %v107
  %v172 = vunpack.c.l.b16 %v108
  %v173 = vunpack.c.l.b16 %v109
  %v174 = vunpack.c.l.b16 %v110
  %v175 = vunpack.c.l.b16 %v111
  %v176 = vunpack.c.l.b16 %v112
  %v177 = vunpack.c.l.b16 %v113
  %v178 = vpack.c.b16 %v147, %v146
  %v179 = vpack.c.b16 %v149, %v148
  %v180 = vpack.c.b16 %v151, %v150
  %v181 = vpack.c.b16 %v153, %v152
  %v182 = vpack.c.b16 %v155, %v154
  %v183 = vpack.c.b16 %v157, %v156
  %v184 = vpack.c.b16 %v159, %v158
  %v185 = vpack.c.b16 %v161, %v160
  %v186 = vpack.c.b16 %v163, %v162
  %v187 = vpack.c.b16 %v165, %v164
  %v188 = vpack.c.b16 %v167, %v166
  %v189 = vpack.c.b16 %v169, %v168
  %v190 = vpack.c.b16 %v171, %v170
  %v191 = vpack.c.b16 %v173, %v172
  %v192 = vpack.c.b16 %v175, %v174
  %v193 = vpack.c.b16 %v177, %v176
  %210 = vmatprep.subr.bf16.mxu0 0
  %211 = vmatpush1.bf16.msra.mxu0 %v178
  %212 = vmatprep.subr.bf16.mxu0 0
  %213 = vmatpush1.bf16.msra.mxu0 %v179
  %214 = vmatprep.subr.bf16.mxu0 0
  %215 = vmatpush1.bf16.msra.mxu0 %v180
  %216 = vmatprep.subr.bf16.mxu0 0
  %217 = vmatpush1.bf16.msra.mxu0 %v181
  %218 = vmatprep.subr.bf16.mxu0 0
  %219 = vmatpush1.bf16.msra.mxu0 %v182
  %220 = vmatprep.subr.bf16.mxu0 0
  %221 = vmatpush1.bf16.msra.mxu0 %v183
  %222 = vmatprep.subr.bf16.mxu0 0
  %223 = vmatpush1.bf16.msra.mxu0 %v184
  %224 = vmatprep.subr.bf16.mxu0 0
  %225 = vmatpush1.bf16.msra.mxu0 %v185
  %226 = vmatprep.subr.bf16.mxu0 0
  %227 = vmatpush1.bf16.msra.mxu0 %v186
  %228 = vmatprep.subr.bf16.mxu0 0
  %229 = vmatpush1.bf16.msra.mxu0 %v187
  %230 = vmatprep.subr.bf16.mxu0 0
  %231 = vmatpush1.bf16.msra.mxu0 %v188
  %232 = vmatprep.subr.bf16.mxu0 0
  %233 = vmatpush1.bf16.msra.mxu0 %v189
  %234 = vmatprep.subr.bf16.mxu0 0
  %235 = vmatpush1.bf16.msra.mxu0 %v190
  %236 = vmatprep.subr.bf16.mxu0 0
  %237 = vmatpush1.bf16.msra.mxu0 %v191
  %238 = vmatprep.subr.bf16.mxu0 0
  %239 = vmatpush1.bf16.msra.mxu0 %v192
  %240 = vmatprep.subr.bf16.mxu0 0
  %241 = vmatpush1.bf16.msra.mxu0 %v193
  %242 = vmatprep.mubr.bf16.mxu0 %v79
  %243 = vmatmul.mubr.bf16.gmra.mrb[0].mxu0 %v78
  %v244 = vpop.f32.mrb[0].mxu0
  %v245 = vadd.f32 0.0, %v244
  %v246 = vpop.f32.mrb[0].mxu0
  %v247 = vpop.f32.mrb[0].mxu0
  %v248 = vadd.f32 0.0, %v247
  %v249 = vpop.f32.mrb[0].mxu0
  %250 = vmatprep.mubr.bf16.mxu0 %v81
  %251 = vmatmul.mubr.bf16.gmra.mrb[0].mxu0 %v80
  %v252 = vpop.f32.mrb[0].mxu0
  %v253 = vadd.f32 0.0, %v252
  %v254 = vpop.f32.mrb[0].mxu0
  %v255 = vpop.f32.mrb[0].mxu0
  %v256 = vadd.f32 0.0, %v255
  %v257 = vpop.f32.mrb[0].mxu0
  %258 = vdwg.mxu0
  %v259 = vpack.c.bf16 %v248, %v245
  %v260 = vpack.c.bf16 %v256, %v253
  %v263 = vunpack.c.l.b16 %v259
  %v264 = vunpack.c.h.b16 %v259
  %v265 = vunpack.c.l.b16 %v260
  %v266 = vunpack.c.h.b16 %v260
  %v267 = vpack.c.b16 %v263, %v263
  %v268 = vpack.c.b16 %v264, %v264
  %v269 = vpack.c.b16 %v265, %v265
  %v270 = vpack.c.b16 %v266, %v266
  %275 = vst [vmem:[%s4] sm:$0xf] %v267
  %276 = vst [vmem:[%s4 + $0x4] sm:$0xf] %v268
  %277 = vst [vmem:[%s4 + $0x8] sm:$0xf] %v269
  %278 = vst [vmem:[%s4 + $0xc] sm:$0xf] %v270
  // Predicated region
  $region18: #{_lambda_.17} parent=0 // pred_check
    _
  $region19: #{_lambda_.17} parent=0 // pred_check_branch
    %280 = sbr.rel (0) target = $region21
  $region20: #{_lambda_.17} parent=0 // pred_region
    _
  $region21: #{_lambda_.17} parent=0 // pred_fallthru
    _
  // Predicated region
  $region22: #{_lambda_.17} parent=0 // pred_check
    _
  $region23: #{_lambda_.17} parent=0 // pred_check_branch
    %282 = sbr.rel (0) target = $region25
  $region24: #{_lambda_.17} parent=0 // pred_region
    _
  $region25: #{_lambda_.17} parent=0 // pred_fallthru
    _

// kernel: _lambda_.20
$region0: #{_lambda_.20}
  #allocation0 [shape = 'u32[]', space=smem, size = 0x4, offset = 0x4, fixed_abs, tag = 'smem constant byte address 0x4 - core index']
  #allocation1 [shape = 'u32[144,128]{1,0:T(1,128)}', space=vmem, size = 0x12000, scoped, tag = 'internal scratch']
  %s0 = inlined_call_operand.vmem [shape: bf16[1,32,128], index: 0, kind: input, shape index: {}]
  %s1 = inlined_call_operand.vmem [shape: f32[1,1,128], index: 1, kind: input, shape index: {}]
  %s2 = inlined_call_operand.vmem [shape: f32[1,1,128], index: 2, kind: input, shape index: {}]
  %s3 = inlined_call_operand.vmem [shape: bf16[1,128,128], index: 3, kind: input, shape index: {}]
  %s4 = inlined_call_operand.vmem [shape: bf16[1,32,128], index: 4, kind: output, shape index: {}]
  %s5 = sld [smem:[#allocation0]]
  $region26: #{_lambda_.20} parent=0
    _
  %s7 = ssub.s32 1, %s5
  %s8 = scalar_select 0, %s7, %s5
  // Predicated region
  $region2: #{_lambda_.20} parent=0 // pred_check
    _
  $region3: #{_lambda_.20} parent=0 // pred_check_branch
    %10 = sbr.rel (0) target = $region5
  $region4: #{_lambda_.20} parent=0 // pred_region
    _
  $region5: #{_lambda_.20} parent=0 // pred_fallthru
    _
  // Predicated region
  $region6: #{_lambda_.20} parent=0 // pred_check
    _
  $region7: #{_lambda_.20} parent=0 // pred_check_branch
    %12 = sbr.rel (0) target = $region9
  $region8: #{_lambda_.20} parent=0 // pred_region
    _
  $region9: #{_lambda_.20} parent=0 // pred_fallthru
    _
  // Predicated region
  $region10: #{_lambda_.20} parent=0 // pred_check
    _
  $region11: #{_lambda_.20} parent=0 // pred_check_branch
    %14 = sbr.rel (0) target = $region13
  $region12: #{_lambda_.20} parent=0 // pred_region
    _
  $region13: #{_lambda_.20} parent=0 // pred_fallthru
    _
  // Predicated region
  $region14: #{_lambda_.20} parent=0 // pred_check
    _
  $region15: #{_lambda_.20} parent=0 // pred_check_branch
    %16 = sbr.rel (0) target = $region17
  $region16: #{_lambda_.20} parent=0 // pred_region
    _
  $region17: #{_lambda_.20} parent=0 // pred_fallthru
    _
  %v18 = vld [vmem:[%s0] sm:$0xf]
  %v19 = vld [vmem:[%s0 + $0x4] sm:$0xf]
  %v20 = vld [vmem:[%s0 + $0x8] sm:$0xf]
  %v21 = vld [vmem:[%s0 + $0xc] sm:$0xf]
  %v22 = vunpack.c.l.bf16 %v18
  %v23 = vunpack.c.l.bf16 %v19
  %v24 = vunpack.c.l.bf16 %v20
  %v25 = vunpack.c.l.bf16 %v21
  %v26 = vld [vmem:[%s1] sm:$0x1]
  %v28 = vlaneseq
  %v29 = vshrl.u32 %v28, 7
  %v30 = vsub.s32 0, %v29
  %v31 = vrot.slane %v26, %v30
  %v33 = vmul.f32 %v22, %v31
  %v34 = vmul.f32 %v23, %v31
  %v35 = vmul.f32 %v24, %v31
  %v36 = vmul.f32 %v25, %v31
  %v37 = vld [vmem:[%s2] sm:$0x1]
  %v39 = vlaneseq
  %v40 = vshrl.u32 %v39, 7
  %v41 = vsub.s32 0, %v40
  %v42 = vrot.slane %v37, %v41
  %v44 = vadd.f32 %v33, %v42
  %v45 = vadd.f32 %v34, %v42
  %v46 = vadd.f32 %v35, %v42
  %v47 = vadd.f32 %v36, %v42
  %v48 = vmax.f32 %v44, 0.0
  %v49 = vmax.f32 %v45, 0.0
  %v50 = vmax.f32 %v46, 0.0
  %v51 = vmax.f32 %v47, 0.0
  %v52 = vpack.c.bf16 %v49, %v48
  %v53 = vpack.c.bf16 %v51, %v50
  %v54 = vld [vmem:[%s3] sm:$0xf]
  %v55 = vld [vmem:[%s3 + $0x4] sm:$0xf]
  %v56 = vld [vmem:[%s3 + $0x8] sm:$0xf]
  %v57 = vld [vmem:[%s3 + $0xc] sm:$0xf]
  %v58 = vld [vmem:[%s3 + $0x10] sm:$0xf]
  %v59 = vld [vmem:[%s3 + $0x14] sm:$0xf]
  %v60 = vld [vmem:[%s3 + $0x18] sm:$0xf]
  %v61 = vld [vmem:[%s3 + $0x1c] sm:$0xf]
  %v62 = vld [vmem:[%s3 + $0x20] sm:$0xf]
  %v63 = vld [vmem:[%s3 + $0x24] sm:$0xf]
  %v64 = vld [vmem:[%s3 + $0x28] sm:$0xf]
  %v65 = vld [vmem:[%s3 + $0x2c] sm:$0xf]
  %v66 = vld [vmem:[%s3 + $0x30] sm:$0xf]
  %v67 = vld [vmem:[%s3 + $0x34] sm:$0xf]
  %v68 = vld [vmem:[%s3 + $0x38] sm:$0xf]
  %v69 = vld [vmem:[%s3 + $0x3c] sm:$0xf]
  %v86 = vunpack.c.l.b16 %v54
  %v87 = vunpack.c.l.b16 %v55
  %v88 = vunpack.c.l.b16 %v56
  %v89 = vunpack.c.l.b16 %v57
  %v90 = vunpack.c.l.b16 %v58
  %v91 = vunpack.c.l.b16 %v59
  %v92 = vunpack.c.l.b16 %v60
  %v93 = vunpack.c.l.b16 %v61
  %v94 = vunpack.c.l.b16 %v62
  %v95 = vunpack.c.l.b16 %v63
  %v96 = vunpack.c.l.b16 %v64
  %v97 = vunpack.c.l.b16 %v65
  %v98 = vunpack.c.l.b16 %v66
  %v99 = vunpack.c.l.b16 %v67
  %v100 = vunpack.c.l.b16 %v68
  %v101 = vunpack.c.l.b16 %v69
  %v102 = vpack.c.b16 %v87, %v86
  %v103 = vpack.c.b16 %v89, %v88
  %v104 = vpack.c.b16 %v91, %v90
  %v105 = vpack.c.b16 %v93, %v92
  %v106 = vpack.c.b16 %v95, %v94
  %v107 = vpack.c.b16 %v97, %v96
  %v108 = vpack.c.b16 %v99, %v98
  %v109 = vpack.c.b16 %v101, %v100
  %118 = vmatprep.subr.bf16.mxu0 0
  %119 = vmatpush1.bf16.msra.mxu0 %v102
  %120 = vmatprep.subr.bf16.mxu0 0
  %121 = vmatpush1.bf16.msra.mxu0 %v103
  %122 = vmatprep.subr.bf16.mxu0 0
  %123 = vmatpush1.bf16.msra.mxu0 %v104
  %124 = vmatprep.subr.bf16.mxu0 0
  %125 = vmatpush1.bf16.msra.mxu0 %v105
  %126 = vmatprep.subr.bf16.mxu0 0
  %127 = vmatpush1.bf16.msra.mxu0 %v106
  %128 = vmatprep.subr.bf16.mxu0 0
  %129 = vmatpush1.bf16.msra.mxu0 %v107
  %130 = vmatprep.subr.bf16.mxu0 0
  %131 = vmatpush1.bf16.msra.mxu0 %v108
  %132 = vmatprep.subr.bf16.mxu0 0
  %133 = vmatpush1.bf16.msra.mxu0 %v109
  %134 = vmatprep.subr.bf16.mxu0 0
  %135 = vmatpush1.bf16.msra.mxu0 0
  %136 = vmatprep.subr.bf16.mxu0 0
  %137 = vmatpush1.bf16.msra.mxu0 0
  %138 = vmatprep.subr.bf16.mxu0 0
  %139 = vmatpush1.bf16.msra.mxu0 0
  %140 = vmatprep.subr.bf16.mxu0 0
  %141 = vmatpush1.bf16.msra.mxu0 0
  %142 = vmatprep.subr.bf16.mxu0 0
  %143 = vmatpush1.bf16.msra.mxu0 0
  %144 = vmatprep.subr.bf16.mxu0 0
  %145 = vmatpush1.bf16.msra.mxu0 0
  %146 = vmatprep.subr.bf16.mxu0 0
  %147 = vmatpush1.bf16.msra.mxu0 0
  %148 = vmatprep.subr.bf16.mxu0 0
  %149 = vmatpush1.bf16.msra.mxu0 0
  %150 = vmatprep.mubr.bf16.mxu0 0
  %151 = vmatmul.mubr.bf16.gmra.mrb[0].mxu0 %v52
  %v152 = vpop.f32.mrb[0].mxu0
  %v153 = vadd.f32 0.0, %v152
  %v154 = vpop.f32.mrb[0].mxu0
  %v155 = vpop.f32.mrb[0].mxu0
  %v156 = vadd.f32 0.0, %v155
  %v157 = vpop.f32.mrb[0].mxu0
  %158 = vmatprep.mubr.bf16.mxu0 0
  %159 = vmatmul.mubr.bf16.gmra.mrb[0].mxu0 %v53
  %v160 = vpop.f32.mrb[0].mxu0
  %v161 = vadd.f32 0.0, %v160
  %v162 = vpop.f32.mrb[0].mxu0
  %v163 = vpop.f32.mrb[0].mxu0
  %v164 = vadd.f32 0.0, %v163
  %v165 = vpop.f32.mrb[0].mxu0
  %166 = vdwg.mxu0
  %v167 = vpack.c.bf16 %v156, %v153
  %v168 = vpack.c.bf16 %v164, %v161
  %v171 = vunpack.c.l.b16 %v167
  %v172 = vunpack.c.h.b16 %v167
  %v173 = vunpack.c.l.b16 %v168
  %v174 = vunpack.c.h.b16 %v168
  %v175 = vpack.c.b16 %v171, %v171
  %v176 = vpack.c.b16 %v172, %v172
  %v177 = vpack.c.b16 %v173, %v173
  %v178 = vpack.c.b16 %v174, %v174
  %183 = vst [vmem:[%s4] sm:$0xf] %v175
  %184 = vst [vmem:[%s4 + $0x4] sm:$0xf] %v176
  %185 = vst [vmem:[%s4 + $0x8] sm:$0xf] %v177
  %186 = vst [vmem:[%s4 + $0xc] sm:$0xf] %v178
  // Predicated region
  $region18: #{_lambda_.20} parent=0 // pred_check
    _
  $region19: #{_lambda_.20} parent=0 // pred_check_branch
    %188 = sbr.rel (0) target = $region21
  $region20: #{_lambda_.20} parent=0 // pred_region
    _
  $region21: #{_lambda_.20} parent=0 // pred_fallthru
    _
  // Predicated region
  $region22: #{_lambda_.20} parent=0 // pred_check
    _
  $region23: #{_lambda_.20} parent=0 // pred_check_branch
    %190 = sbr.rel (0) target = $region25
  $region24: #{_lambda_.20} parent=0 // pred_region
    _
  $region25: #{_lambda_.20} parent=0 // pred_fallthru
    _

// kernel: squeeze.28
$region0: #{squeeze.28}
  %s0 = inlined_call_operand.vmem [shape: bf16[1,24,16], index: 0, kind: input, shape index: {}]
  %s1 = inlined_call_operand.vmem [shape: bf16[2,4,3,16], index: 1, kind: output, shape index: {}]
  $region1: #{squeeze.28} parent=0
    #allocation0 [shape = 'u8[32768]{0}', space=vmem, size = 0x8000, scoped, tag = 'scoped mem for output reshape']
    #allocation1 [shape = 'u8[12288]{0}', space=vmem, size = 0x3000, scoped, tag = 'scoped mem for input reshape']
    %s3 = smul.u32 4, 2
    %s4 = sshllo.u32 0, %s3
    %s5 = smul.addr 4, 2
    %s6 = scalar_lea.vmem %s0, %s5
    %s7 = sshrl.u32 %s4, 1
    %s8 = sor.u32 %s4, %s7
    %s9 = sand.u32 %s8, 85
    %s10 = sshrl.u32 %s9, 1
    %s11 = sor.u32 %s9, %s10
    %s12 = sand.u32 51, %s11
    %s13 = sshrl.u32 %s12, 2
    %s14 = sor.u32 %s12, %s13
    %s15 = sand.u32 15, %s14
    %v16 = vld [vmem:[%s6] sm:%s15]
    %v17 = vunpack.c.l.bf16 %v16
    %v18 = vunpack.c.h.bf16 %v16
    %s19 = scalar_lea.vmem [#allocation1], 16
    %20 = vst [vmem:[%s19] sm:%s4] %v17
    %s21 = scalar_lea.vmem %s0, 4
    %s22 = sshrl.u32 %s4, 1
    %s23 = sor.u32 %s4, %s22
    %s24 = sand.u32 %s23, 85
    %s25 = sshrl.u32 %s24, 1
    %s26 = sor.u32 %s24, %s25
    %s27 = sand.u32 51, %s26
    %s28 = sshrl.u32 %s27, 2
    %s29 = sor.u32 %s27, %s28
    %s30 = sand.u32 15, %s29
    %v31 = vld [vmem:[%s21] sm:%s30]
    %v32 = vunpack.c.l.bf16 %v31
    %v33 = vunpack.c.h.bf16 %v31
    %s34 = scalar_lea.vmem [#allocation1], 8
    %35 = vst [vmem:[%s34] sm:%s4] %v32
    %s36 = sshrl.u32 %s4, 1
    %s37 = sor.u32 %s4, %s36
    %s38 = sand.u32 %s37, 85
    %s39 = sshrl.u32 %s38, 1
    %s40 = sor.u32 %s38, %s39
    %s41 = sand.u32 51, %s40
    %s42 = sshrl.u32 %s41, 2
    %s43 = sor.u32 %s41, %s42
    %s44 = sand.u32 15, %s43
    %v45 = vld [vmem:[%s0] sm:%s44]
    %v46 = vunpack.c.l.bf16 %v45
    %v47 = vunpack.c.h.bf16 %v45
    %48 = vst [vmem:[#allocation1] sm:%s4] %v46
    %v49 = vld [vmem:[#allocation1] sm:$0xff]
    %vm50 = vcmask 130048
    %51 = vst.msk [vmem:[#allocation0] sm:$0x7] %vm50, %v49
    %s52 = scalar_lea.vmem [#allocation0], 5
    %53 = vst.msk [vmem:[%s52] sm:$0x38] %vm50, %v49
    %s54 = scalar_lea.vmem [#allocation0], 10
    %55 = vst.msk [vmem:[%s54] sm:$0xc0] %vm50, %v49
    %s56 = scalar_lea.vmem [#allocation1], 8
    %v57 = vld [vmem:[%s56] sm:$0xff]
    %vm58 = vcmask 130048
    %s59 = scalar_lea.vmem [#allocation0], 18
    %60 = vst.msk [vmem:[%s59] ss:$6 sm:$0x3] %vm58, %v57
    %s61 = scalar_lea.vmem [#allocation0], 23
    %62 = vst.msk [vmem:[%s61] sm:$0xc] %vm58, %v57
    %s63 = scalar_lea.vmem [#allocation0], 28
    %64 = vst.msk [vmem:[%s63] sm:$0x70] %vm58, %v57
    %s65 = scalar_lea.vmem [#allocation0], 33
    %66 = vst.msk [vmem:[%s65] sm:$0x80] %vm58, %v57
    %s67 = scalar_lea.vmem [#allocation1], 16
    %v68 = vld [vmem:[%s67] sm:$0xff]
    %vm69 = vcmask 130048
    %s70 = scalar_lea.vmem [#allocation0], 41
    %71 = vst.msk [vmem:[%s70] sm:$0x3] %vm69, %v68
    %s72 = scalar_lea.vmem [#allocation0], 46
    %73 = vst.msk [vmem:[%s72] sm:$0x1c] %vm69, %v68
    %s74 = scalar_lea.vmem [#allocation0], 51
    %75 = vst.msk [vmem:[%s74] sm:$0xe0] %vm69, %v68
    %s77 = smul.u32 2, 2
    %s78 = sshllo.u32 0, %s77
    %s79 = sshrl.u32 %s77, 1
    %v80 = vld [vmem:[#allocation0] sm:%s78]
    %v81 = vpack.c.bf16 0.0, %v80
    %s82 = sshllo.u32 0, %s79
    %83 = vst [vmem:[%s1] sm:%s82] %v81
    %s84 = scalar_lea.vmem [#allocation0], 8
    %v85 = vld [vmem:[%s84] sm:%s78]
    %v86 = vpack.c.bf16 0.0, %v85
    %s87 = sshllo.u32 0, %s79
    %s88 = scalar_lea.vmem %s1, 2
    %89 = vst [vmem:[%s88] sm:%s87] %v86
    %s90 = scalar_lea.vmem [#allocation0], 16
    %v91 = vld [vmem:[%s90] sm:%s78]
    %v92 = vpack.c.bf16 0.0, %v91
    %s93 = sshllo.u32 0, %s79
    %s94 = smul.addr 2, 2
    %s95 = scalar_lea.vmem %s1, %s94
    %96 = vst [vmem:[%s95] sm:%s93] %v92
    %s97 = scalar_lea.vmem [#allocation0], 24
    %v98 = vld [vmem:[%s97] sm:%s78]
    %v99 = vpack.c.bf16 0.0, %v98
    %s100 = sshllo.u32 0, %s79
    %s101 = smul.addr 2, 3
    %s102 = scalar_lea.vmem %s1, %s101
    %103 = vst [vmem:[%s102] sm:%s100] %v99
    %s104 = scalar_lea.vmem [#allocation0], 32
    %v105 = vld [vmem:[%s104] sm:%s78]
    %v106 = vpack.c.bf16 0.0, %v105
    %s107 = sshllo.u32 0, %s79
    %s108 = smul.addr 2, 4
    %s109 = scalar_lea.vmem %s1, %s108
    %110 = vst [vmem:[%s109] sm:%s107] %v106
    %s111 = scalar_lea.vmem [#allocation0], 40
    %v112 = vld [vmem:[%s111] sm:%s78]
    %v113 = vpack.c.bf16 0.0, %v112
    %s114 = sshllo.u32 0, %s79
    %s115 = smul.addr 2, 5
    %s116 = scalar_lea.vmem %s1, %s115
    %117 = vst [vmem:[%s116] sm:%s114] %v113
    %s118 = scalar_lea.vmem [#allocation0], 48
    %v119 = vld [vmem:[%s118] sm:%s78]
    %v120 = vpack.c.bf16 0.0, %v119
    %s121 = sshllo.u32 0, %s79
    %s122 = smul.addr 2, 6
    %s123 = scalar_lea.vmem %s1, %s122
    %124 = vst [vmem:[%s123] sm:%s121] %v120
    %s125 = scalar_lea.vmem [#allocation0], 56
    %v126 = vld [vmem:[%s125] sm:%s78]
    %v127 = vpack.c.bf16 0.0, %v126
    %s128 = sshllo.u32 0, %s79
    %s129 = smul.addr 2, 7
    %s130 = scalar_lea.vmem %s1, %s129
    %131 = vst [vmem:[%s130] sm:%s128] %v127

// kernel: _lambda_.21
$region0: #{_lambda_.21}
  #allocation0 [shape = 'u32[]', space=smem, size = 0x4, offset = 0x4, fixed_abs, tag = 'smem constant byte address 0x4 - core index']
  #allocation1 [shape = 'u32[144,128]{1,0:T(1,128)}', space=vmem, size = 0x12000, scoped, tag = 'internal scratch']
  %s0 = inlined_call_operand.vmem [shape: bf16[4,32,128], index: 0, kind: input, shape index: {}]
  %s1 = inlined_call_operand.vmem [shape: f32[4,1,128], index: 1, kind: input, shape index: {}]
  %s2 = inlined_call_operand.vmem [shape: f32[4,1,128], index: 2, kind: input, shape index: {}]
  %s3 = inlined_call_operand.vmem [shape: bf16[4,128,128], index: 3, kind: input, shape index: {}]
  %s4 = inlined_call_operand.vmem [shape: bf16[4,32,128], index: 4, kind: output, shape index: {}]
  %s5 = sld [smem:[#allocation0]]
  $region49: #{_lambda_.21} parent=0
    _
  %s7 = ssub.s32 1, %s5
  %s8 = scalar_select 0, %s7, %s5
  loop: start=0, step=1, limit=6
  $region2: #{_lambda_.21} parent=0 // loop_pre_header
    _
  $region3: #{_lambda_.21} parent=0 // loop_header
    %s10 = sphi 0, %s14
    %p11 = scmp.ge.s32.totalorder %s10, 6
    %s17 = sphi 0, %s43
    %s18 = sphi 0, %s39
    %s19 = sphi 0, %s35
    %s20 = sphi 0, %s31
    %s21 = sphi 0, %s17
    %s22 = sphi 0, %s18
    %s23 = sphi 0, %s19
    %s24 = sphi 0, %s20
    %s25 = sphi 0, %s21
    %s26 = sphi 0, %s22
    %s27 = sphi 0, %s23
    %s28 = sphi 0, %s24
    %s50 = sphi 0, %s52
    %s53 = sphi 0, %s50
    %s54 = sphi 0, %s53
    %s70 = sphi 0, %s54
    %s78 = sphi 0, %s80
    %s81 = sphi 0, %s78
    %s82 = sphi 0, %s81
    %s98 = sphi 0, %s82
    %s106 = sphi 0, %s108
    %s109 = sphi 0, %s106
    %s110 = sphi 0, %s109
    %s126 = sphi 0, %s110
    %s136 = sphi 0, %s138
    %s139 = sphi 0, %s136
    %s140 = sphi 0, %s139
    %s156 = sphi 0, %s140
    %s166 = sphi 0, %s168
    %s169 = sphi 0, %s166
    %s170 = sphi 0, %s169
    %s186 = sphi 0, %s170
  $region4: #{_lambda_.21} parent=0 // loop_header_branch
    %13 = sbr.rel (%p11) target = $region8
  $region5: #{_lambda_.21} parent=0 // loop_body
    %s15 = ssub.s32 %s10, 1
    %s16 = ssub.s32 %s10, 2
    %s29 = sadd.s32 1, %s20
    %p30 = scmp.ge.s32.totalorder %s29, 1
    %s31 = scalar_select %p30, 0, %s29
    %s32 = sadd.s32 1, %s19
    %s33 = scalar_select %p30, %s32, %s19
    %p34 = scmp.ge.s32.totalorder %s33, 1
    %s35 = scalar_select %p34, 0, %s33
    %s36 = sadd.s32 1, %s18
    %s37 = scalar_select %p34, %s36, %s18
    %p38 = scmp.ge.s32.totalorder %s37, 1
    %s39 = scalar_select %p38, 0, %s37
    %s40 = sadd.s32 1, %s17
    %s41 = scalar_select %p38, %s40, %s17
    %p42 = scmp.ge.s32.totalorder %s41, 4
    %s43 = scalar_select %p42, 0, %s41
    %s44 = ssub.s32 %s17, %s43
    %s45 = ssub.s32 %s18, %s39
    %s46 = sor.u32 %s44, %s45
    %s47 = ssub.s32 %s20, %s31
    %s48 = sor.u32 %s46, %s47
    %p49 = scmp.eq.s32.totalorder %s48, 0
    %s51 = sadd.s32 %s50, 1
    %s52 = scalar_select %p49, %s50, %s51
    %p55 = pneg %p49
    %p56 = scmp.eq.s32.totalorder %s10, 3
    %p57 = por %p55, %p56
    %p58 = scmp.ne.s32.totalorder %s50, %s53
    %p59 = scmp.eq.s32.totalorder %s10, 0
    %p60 = por %p58, %p59
    %p61 = scmp.ne.s32.totalorder %s50, %s53
    %p62 = scmp.eq.s32.totalorder %s15, 3
    %p63 = por %p61, %p62
    %p64 = scmp.ne.s32.totalorder %s53, %s54
    %p65 = scmp.eq.s32.totalorder %s15, 0
    %p66 = por %p64, %p65
    %p67 = scmp.ne.s32.totalorder %s53, %s54
    %p68 = scmp.eq.s32.totalorder %s16, 3
    %p69 = por %p67, %p68
    %p71 = scmp.ne.s32.totalorder %s54, %s70
    %p72 = scmp.eq.s32.totalorder %s16, 0
    %p73 = por %p71, %p72
    %s74 = ssub.s32 %s17, %s43
    %s75 = ssub.s32 %s20, %s31
    %s76 = sor.u32 %s74, %s75
    %p77 = scmp.eq.s32.totalorder %s76, 0
    %s79 = sadd.s32 %s78, 1
    %s80 = scalar_select %p77, %s78, %s79
    %p83 = pneg %p77
    %p84 = scmp.eq.s32.totalorder %s10, 3
    %p85 = por %p83, %p84
    %p86 = scmp.ne.s32.totalorder %s78, %s81
    %p87 = scmp.eq.s32.totalorder %s10, 0
    %p88 = por %p86, %p87
    %p89 = scmp.ne.s32.totalorder %s78, %s81
    %p90 = scmp.eq.s32.totalorder %s15, 3
    %p91 = por %p89, %p90
    %p92 = scmp.ne.s32.totalorder %s81, %s82
    %p93 = scmp.eq.s32.totalorder %s15, 0
    %p94 = por %p92, %p93
    %p95 = scmp.ne.s32.totalorder %s81, %s82
    %p96 = scmp.eq.s32.totalorder %s16, 3
    %p97 = por %p95, %p96
    %p99 = scmp.ne.s32.totalorder %s82, %s98
    %p100 = scmp.eq.s32.totalorder %s16, 0
    %p101 = por %p99, %p100
    %s102 = ssub.s32 %s17, %s43
    %s103 = ssub.s32 %s20, %s31
    %s104 = sor.u32 %s102, %s103
    %p105 = scmp.eq.s32.totalorder %s104, 0
    %s107 = sadd.s32 %s106, 1
    %s108 = scalar_select %p105, %s106, %s107
    %p111 = pneg %p105
    %p112 = scmp.eq.s32.totalorder %s10, 3
    %p113 = por %p111, %p112
    %p114 = scmp.ne.s32.totalorder %s106, %s109
    %p115 = scmp.eq.s32.totalorder %s10, 0
    %p116 = por %p114, %p115
    %p117 = scmp.ne.s32.totalorder %s106, %s109
    %p118 = scmp.eq.s32.totalorder %s15, 3
    %p119 = por %p117, %p118
    %p120 = scmp.ne.s32.totalorder %s109, %s110
    %p121 = scmp.eq.s32.totalorder %s15, 0
    %p122 = por %p120, %p121
    %p123 = scmp.ne.s32.totalorder %s109, %s110
    %p124 = scmp.eq.s32.totalorder %s16, 3
    %p125 = por %p123, %p124
    %p127 = scmp.ne.s32.totalorder %s110, %s126
    %p128 = scmp.eq.s32.totalorder %s16, 0
    %p129 = por %p127, %p128
    %s130 = ssub.s32 %s17, %s43
    %s131 = ssub.s32 %s20, %s31
    %s132 = sor.u32 %s130, %s131
    %s133 = ssub.s32 %s19, %s35
    %s134 = sor.u32 %s132, %s133
    %p135 = scmp.eq.s32.totalorder %s134, 0
    %s137 = sadd.s32 %s136, 1
    %s138 = scalar_select %p135, %s136, %s137
    %p141 = pneg %p135
    %p142 = scmp.eq.s32.totalorder %s10, 3
    %p143 = por %p141, %p142
    %p144 = scmp.ne.s32.totalorder %s136, %s139
    %p145 = scmp.eq.s32.totalorder %s10, 0
    %p146 = por %p144, %p145
    %p147 = scmp.ne.s32.totalorder %s136, %s139
    %p148 = scmp.eq.s32.totalorder %s15, 3
    %p149 = por %p147, %p148
    %p150 = scmp.ne.s32.totalorder %s139, %s140
    %p151 = scmp.eq.s32.totalorder %s15, 0
    %p152 = por %p150, %p151
    %p153 = scmp.ne.s32.totalorder %s139, %s140
    %p154 = scmp.eq.s32.totalorder %s16, 3
    %p155 = por %p153, %p154
    %p157 = scmp.ne.s32.totalorder %s140, %s156
    %p158 = scmp.eq.s32.totalorder %s16, 0
    %p159 = por %p157, %p158
    %s160 = ssub.s32 %s17, %s43
    %s161 = ssub.s32 %s18, %s39
    %s162 = sor.u32 %s160, %s161
    %s163 = ssub.s32 %s19, %s35
    %s164 = sor.u32 %s162, %s163
    %p165 = scmp.eq.s32.totalorder %s164, 0
    %s167 = sadd.s32 %s166, 1
    %s168 = scalar_select %p165, %s166, %s167
    %p171 = pneg %p165
    %p172 = scmp.eq.s32.totalorder %s10, 3
    %p173 = por %p171, %p172
    %p174 = scmp.ne.s32.totalorder %s166, %s169
    %p175 = scmp.eq.s32.totalorder %s10, 0
    %p176 = por %p174, %p175
    %p177 = scmp.ne.s32.totalorder %s166, %s169
    %p178 = scmp.eq.s32.totalorder %s15, 3
    %p179 = por %p177, %p178
    %p180 = scmp.ne.s32.totalorder %s169, %s170
    %p181 = scmp.eq.s32.totalorder %s15, 0
    %p182 = por %p180, %p181
    %p183 = scmp.ne.s32.totalorder %s169, %s170
    %p184 = scmp.eq.s32.totalorder %s16, 3
    %p185 = por %p183, %p184
    %p187 = scmp.ne.s32.totalorder %s170, %s186
    %p188 = scmp.eq.s32.totalorder %s16, 0
    %p189 = por %p187, %p188
    %p190 = scmp.le.s32.totalorder 1, %s10
    %p191 = scmp.lt.s32.totalorder %s10, 5
    %p192 = pnand %p190, %p191
    %p193 = pneg %p192
    // Predicated region
    $region9: #{_lambda_.21} parent=5 // pred_check
      _
    $region10: #{_lambda_.21} parent=5 // pred_check_branch
      %195 = sbr.rel (%p192) target = $region12
    $region11: #{_lambda_.21} parent=5 // pred_region
      %s196 = ssub.s32 %s10, 1
    $region12: #{_lambda_.21} parent=5 // pred_fallthru
      _
    %p197 = scmp.lt.s32.totalorder %s10, 4
    // Predicated region
    $region13: #{_lambda_.21} parent=5 // pred_check
      %p198 = pneg %p197
    $region14: #{_lambda_.21} parent=5 // pred_check_branch
      %200 = sbr.rel (%p198) target = $region16
    $region15: #{_lambda_.21} parent=5 // pred_region
      // Predicated region
      $region17: #{_lambda_.21} parent=15 // pred_check
        %p201 = pneg %p60
      $region18: #{_lambda_.21} parent=15 // pred_check_branch
        %203 = sbr.rel (%p201) target = $region20
      $region19: #{_lambda_.21} parent=15 // pred_region
        %s204 = smul.u32 4, %s18
        %p205 = scmp.lt.s32.totalorder %s17, 3
        %s206 = scalar_select %p205, %s17, 3
        %p207 = scmp.lt.s32.totalorder %s204, 3
        %s208 = scalar_select %p207, %s204, 3
        %p209 = scmp.lt.s32.totalorder %s20, 0
        %s210 = scalar_select %p209, %s20, 0
        %s211 = sadd.s32 %s210, %s208
        %s212 = smul.addr %s206, 4
        %s213 = sadd.s32 %s211, %s212
        %s214 = smul.addr %s213, 4
        %s215 = scalar_lea.vmem %s0, %s214
        %s216 = smul.u32 4, %s18
      $region20: #{_lambda_.21} parent=15 // pred_fallthru
        _
      // Predicated region
      $region21: #{_lambda_.21} parent=15 // pred_check
        %p217 = pneg %p88
      $region22: #{_lambda_.21} parent=15 // pred_check_branch
        %219 = sbr.rel (%p217) target = $region24
      $region23: #{_lambda_.21} parent=15 // pred_region
        %p220 = scmp.lt.s32.totalorder %s17, 3
        %s221 = scalar_select %p220, %s17, 3
        %p222 = scmp.lt.s32.totalorder %s20, 0
        %s223 = scalar_select %p222, %s20, 0
        %s224 = sadd.s32 %s223, %s221
        %s225 = scalar_lea.vmem %s1, %s224
      $region24: #{_lambda_.21} parent=15 // pred_fallthru
        _
      // Predicated region
      $region25: #{_lambda_.21} parent=15 // pred_check
        %p226 = pneg %p116
      $region26: #{_lambda_.21} parent=15 // pred_check_branch
        %228 = sbr.rel (%p226) target = $region28
      $region27: #{_lambda_.21} parent=15 // pred_region
        %p229 = scmp.lt.s32.totalorder %s17, 3
        %s230 = scalar_select %p229, %s17, 3
        %p231 = scmp.lt.s32.totalorder %s20, 0
        %s232 = scalar_select %p231, %s20, 0
        %s233 = sadd.s32 %s232, %s230
        %s234 = scalar_lea.vmem %s2, %s233
      $region28: #{_lambda_.21} parent=15 // pred_fallthru
        _
      // Predicated region
      $region29: #{_lambda_.21} parent=15 // pred_check
        %p235 = pneg %p146
      $region30: #{_lambda_.21} parent=15 // pred_check_branch
        %237 = sbr.rel (%p235) target = $region32
      $region31: #{_lambda_.21} parent=15 // pred_region
        %s238 = smul.u32 16, %s20
        %p239 = scmp.lt.s32.totalorder %s17, 3
        %s240 = scalar_select %p239, %s17, 3
        %p241 = scmp.lt.s32.totalorder %s238, 15
        %s242 = scalar_select %p241, %s238, 15
        %p243 = scmp.lt.s32.totalorder %s19, 0
        %s244 = scalar_select %p243, %s19, 0
        %s245 = sadd.s32 %s244, %s242
        %s246 = smul.addr %s240, 16
        %s247 = sadd.s32 %s245, %s246
        %s248 = smul.addr %s247, 4
        %s249 = scalar_lea.vmem %s3, %s248
        %s250 = smul.u32 16, %s20
      $region32: #{_lambda_.21} parent=15 // pred_fallthru
        _
    $region16: #{_lambda_.21} parent=5 // pred_fallthru
      _
    %p251 = scmp.le.s32.totalorder 1, %s10
    %p252 = scmp.lt.s32.totalorder %s10, 5
    %p253 = pnand %p251, %p252
    %p254 = pneg %p253
    // Predicated region
    $region33: #{_lambda_.21} parent=5 // pred_check
      _
    $region34: #{_lambda_.21} parent=5 // pred_check_branch
      %256 = sbr.rel (%p253) target = $region36
    $region35: #{_lambda_.21} parent=5 // pred_region
      %s257 = ssub.s32 %s10, 1
      %s258 = smul.u32 4, %s22
      %p259 = scmp.lt.s32.totalorder %s21, 3
      %s260 = scalar_select %p259, %s21, 3
      %p261 = scmp.lt.s32.totalorder %s258, 3
      %s262 = scalar_select %p261, %s258, 3
      %p263 = scmp.lt.s32.totalorder %s24, 0
      %s264 = scalar_select %p263, %s24, 0
      %s265 = sadd.s32 %s264, %s262
      %s266 = smul.addr %s260, 4
      %s267 = sadd.s32 %s265, %s266
      %s268 = smul.addr %s267, 4
      %s269 = scalar_lea.vmem %s0, %s268
      %p270 = pneg %p66
      %p271 = pneg %p63
      %p272 = scmp.lt.s32.totalorder %s21, 3
      %s273 = scalar_select %p272, %s21, 3
      %p274 = scmp.lt.s32.totalorder %s24, 0
      %s275 = scalar_select %p274, %s24, 0
      %s276 = sadd.s32 %s275, %s273
      %s277 = scalar_lea.vmem %s1, %s276
      %p278 = pneg %p94
      %p279 = pneg %p91
      %p280 = scmp.lt.s32.totalorder %s21, 3
      %s281 = scalar_select %p280, %s21, 3
      %p282 = scmp.lt.s32.totalorder %s24, 0
      %s283 = scalar_select %p282, %s24, 0
      %s284 = sadd.s32 %s283, %s281
      %s285 = scalar_lea.vmem %s2, %s284
      %p286 = pneg %p122
      %p287 = pneg %p119
      %s288 = smul.u32 16, %s24
      %p289 = scmp.lt.s32.totalorder %s21, 3
      %s290 = scalar_select %p289, %s21, 3
      %p291 = scmp.lt.s32.totalorder %s288, 15
      %s292 = scalar_select %p291, %s288, 15
      %p293 = scmp.lt.s32.totalorder %s23, 0
      %s294 = scalar_select %p293, %s23, 0
      %s295 = sadd.s32 %s294, %s292
      %s296 = smul.addr %s290, 16
      %s297 = sadd.s32 %s295, %s296
      %s298 = smul.addr %s297, 4
      %s299 = scalar_lea.vmem %s3, %s298
      %p300 = pneg %p152
      %p301 = pneg %p149
      %p302 = pneg %p182
      %p303 = pneg %p179
      %s304 = smul.u32 4, %s22
      %p305 = scmp.lt.s32.totalorder %s21, 3
      %s306 = scalar_select %p305, %s21, 3
      %p307 = scmp.lt.s32.totalorder %s304, 3
      %s308 = scalar_select %p307, %s304, 3
      %p309 = scmp.lt.s32.totalorder %s23, 0
      %s310 = scalar_select %p309, %s23, 0
      %s311 = sadd.s32 %s310, %s308
      %s312 = smul.addr %s306, 4
      %s313 = sadd.s32 %s311, %s312
      %s314 = smul.addr %s313, 4
      %s315 = scalar_lea.vmem %s4, %s314
      %s316 = smul.u32 4, %s22
      %p317 = scmp.lt.s32.totalorder %s21, 3
      %s318 = scalar_select %p317, %s21, 3
      %p319 = scmp.lt.s32.totalorder %s316, 3
      %s320 = scalar_select %p319, %s316, 3
      %p321 = scmp.lt.s32.totalorder %s24, 0
      %s322 = scalar_select %p321, %s24, 0
      %s323 = sadd.s32 %s322, %s320
      %s324 = smul.addr %s318, 4
      %s325 = sadd.s32 %s323, %s324
      %s326 = smul.addr %s325, 4
      %s327 = scalar_lea.vmem %s0, %s326
      %s328 = smul.u32 4, %s22
      %p329 = scmp.lt.s32.totalorder %s21, 3
      %s330 = scalar_select %p329, %s21, 3
      %p331 = scmp.lt.s32.totalorder %s24, 0
      %s332 = scalar_select %p331, %s24, 0
      %s333 = sadd.s32 %s332, %s330
      %s334 = scalar_lea.vmem %s1, %s333
      %p335 = scmp.lt.s32.totalorder %s21, 3
      %s336 = scalar_select %p335, %s21, 3
      %p337 = scmp.lt.s32.totalorder %s24, 0
      %s338 = scalar_select %p337, %s24, 0
      %s339 = sadd.s32 %s338, %s336
      %s340 = scalar_lea.vmem %s2, %s339
      %s341 = smul.u32 16, %s24
      %p342 = scmp.lt.s32.totalorder %s21, 3
      %s343 = scalar_select %p342, %s21, 3
      %p344 = scmp.lt.s32.totalorder %s341, 15
      %s345 = scalar_select %p344, %s341, 15
      %p346 = scmp.lt.s32.totalorder %s23, 0
      %s347 = scalar_select %p346, %s23, 0
      %s348 = sadd.s32 %s347, %s345
      %s349 = smul.addr %s343, 16
      %s350 = sadd.s32 %s348, %s349
      %s351 = smul.addr %s350, 4
      %s352 = scalar_lea.vmem %s3, %s351
      %s353 = smul.u32 16, %s24
      %s354 = smul.u32 4, %s22
      %p355 = scmp.lt.s32.totalorder %s21, 3
      %s356 = scalar_select %p355, %s21, 3
      %p357 = scmp.lt.s32.totalorder %s354, 3
      %s358 = scalar_select %p357, %s354, 3
      %p359 = scmp.lt.s32.totalorder %s23, 0
      %s360 = scalar_select %p359, %s23, 0
      %s361 = sadd.s32 %s360, %s358
      %s362 = smul.addr %s356, 4
      %s363 = sadd.s32 %s361, %s362
      %s364 = smul.addr %s363, 4
      %s365 = scalar_lea.vmem %s4, %s364
      %s366 = smul.u32 4, %s22
      %v368 = vld [vmem:[%s327] sm:$0xf]
      %v369 = vld [vmem:[%s327 + $0x4] sm:$0xf]
      %v370 = vld [vmem:[%s327 + $0x8] sm:$0xf]
      %v371 = vld [vmem:[%s327 + $0xc] sm:$0xf]
      %v372 = vunpack.c.l.bf16 %v368
      %v373 = vunpack.c.l.bf16 %v369
      %v374 = vunpack.c.l.bf16 %v370
      %v375 = vunpack.c.l.bf16 %v371
      %v376 = vld [vmem:[%s334] sm:$0x1]
      %v378 = vlaneseq
      %v379 = vshrl.u32 %v378, 7
      %v380 = vsub.s32 0, %v379
      %v381 = vrot.slane %v376, %v380
      %v383 = vmul.f32 %v372, %v381
      %v384 = vmul.f32 %v373, %v381
      %v385 = vmul.f32 %v374, %v381
      %v386 = vmul.f32 %v375, %v381
      %v387 = vld [vmem:[%s340] sm:$0x1]
      %v389 = vlaneseq
      %v390 = vshrl.u32 %v389, 7
      %v391 = vsub.s32 0, %v390
      %v392 = vrot.slane %v387, %v391
      %v394 = vadd.f32 %v383, %v392
      %v395 = vadd.f32 %v384, %v392
      %v396 = vadd.f32 %v385, %v392
      %v397 = vadd.f32 %v386, %v392
      %v398 = vmax.f32 %v394, 0.0
      %v399 = vmax.f32 %v395, 0.0
      %v400 = vmax.f32 %v396, 0.0
      %v401 = vmax.f32 %v397, 0.0
      %v402 = vpack.c.bf16 %v399, %v398
      %v403 = vpack.c.bf16 %v401, %v400
      %v404 = vld [vmem:[%s352] sm:$0xf]
      %v405 = vld [vmem:[%s352 + $0x4] sm:$0xf]
      %v406 = vld [vmem:[%s352 + $0x8] sm:$0xf]
      %v407 = vld [vmem:[%s352 + $0xc] sm:$0xf]
      %v408 = vld [vmem:[%s352 + $0x10] sm:$0xf]
      %v409 = vld [vmem:[%s352 + $0x14] sm:$0xf]
      %v410 = vld [vmem:[%s352 + $0x18] sm:$0xf]
      %v411 = vld [vmem:[%s352 + $0x1c] sm:$0xf]
      %v412 = vld [vmem:[%s352 + $0x20] sm:$0xf]
      %v413 = vld [vmem:[%s352 + $0x24] sm:$0xf]
      %v414 = vld [vmem:[%s352 + $0x28] sm:$0xf]
      %v415 = vld [vmem:[%s352 + $0x2c] sm:$0xf]
      %v416 = vld [vmem:[%s352 + $0x30] sm:$0xf]
      %v417 = vld [vmem:[%s352 + $0x34] sm:$0xf]
      %v418 = vld [vmem:[%s352 + $0x38] sm:$0xf]
      %v419 = vld [vmem:[%s352 + $0x3c] sm:$0xf]
      %v436 = vunpack.c.l.b16 %v404
      %v437 = vunpack.c.l.b16 %v405
      %v438 = vunpack.c.l.b16 %v406
      %v439 = vunpack.c.l.b16 %v407
      %v440 = vunpack.c.l.b16 %v408
      %v441 = vunpack.c.l.b16 %v409
      %v442 = vunpack.c.l.b16 %v410
      %v443 = vunpack.c.l.b16 %v411
      %v444 = vunpack.c.l.b16 %v412
      %v445 = vunpack.c.l.b16 %v413
      %v446 = vunpack.c.l.b16 %v414
      %v447 = vunpack.c.l.b16 %v415
      %v448 = vunpack.c.l.b16 %v416
      %v449 = vunpack.c.l.b16 %v417
      %v450 = vunpack.c.l.b16 %v418
      %v451 = vunpack.c.l.b16 %v419
      %v452 = vpack.c.b16 %v437, %v436
      %v453 = vpack.c.b16 %v439, %v438
      %v454 = vpack.c.b16 %v441, %v440
      %v455 = vpack.c.b16 %v443, %v442
      %v456 = vpack.c.b16 %v445, %v444
      %v457 = vpack.c.b16 %v447, %v446
      %v458 = vpack.c.b16 %v449, %v448
      %v459 = vpack.c.b16 %v451, %v450
      %468 = vmatprep.subr.bf16.mxu0 0
      %469 = vmatpush1.bf16.msra.mxu0 %v452
      %470 = vmatprep.subr.bf16.mxu0 0
      %471 = vmatpush1.bf16.msra.mxu0 %v453
      %472 = vmatprep.subr.bf16.mxu0 0
      %473 = vmatpush1.bf16.msra.mxu0 %v454
      %474 = vmatprep.subr.bf16.mxu0 0
      %475 = vmatpush1.bf16.msra.mxu0 %v455
      %476 = vmatprep.subr.bf16.mxu0 0
      %477 = vmatpush1.bf16.msra.mxu0 %v456
      %478 = vmatprep.subr.bf16.mxu0 0
      %479 = vmatpush1.bf16.msra.mxu0 %v457
      %480 = vmatprep.subr.bf16.mxu0 0
      %481 = vmatpush1.bf16.msra.mxu0 %v458
      %482 = vmatprep.subr.bf16.mxu0 0
      %483 = vmatpush1.bf16.msra.mxu0 %v459
      %484 = vmatprep.subr.bf16.mxu0 0
      %485 = vmatpush1.bf16.msra.mxu0 0
      %486 = vmatprep.subr.bf16.mxu0 0
      %487 = vmatpush1.bf16.msra.mxu0 0
      %488 = vmatprep.subr.bf16.mxu0 0
      %489 = vmatpush1.bf16.msra.mxu0 0
      %490 = vmatprep.subr.bf16.mxu0 0
      %491 = vmatpush1.bf16.msra.mxu0 0
      %492 = vmatprep.subr.bf16.mxu0 0
      %493 = vmatpush1.bf16.msra.mxu0 0
      %494 = vmatprep.subr.bf16.mxu0 0
      %495 = vmatpush1.bf16.msra.mxu0 0
      %496 = vmatprep.subr.bf16.mxu0 0
      %497 = vmatpush1.bf16.msra.mxu0 0
      %498 = vmatprep.subr.bf16.mxu0 0
      %499 = vmatpush1.bf16.msra.mxu0 0
      %500 = vmatprep.mubr.bf16.mxu0 0
      %501 = vmatmul.mubr.bf16.gmra.mrb[0].mxu0 %v402
      %v502 = vpop.f32.mrb[0].mxu0
      %v503 = vadd.f32 0.0, %v502
      %v504 = vpop.f32.mrb[0].mxu0
      %v505 = vpop.f32.mrb[0].mxu0
      %v506 = vadd.f32 0.0, %v505
      %v507 = vpop.f32.mrb[0].mxu0
      %508 = vmatprep.mubr.bf16.mxu0 0
      %509 = vmatmul.mubr.bf16.gmra.mrb[0].mxu0 %v403
      %v510 = vpop.f32.mrb[0].mxu0
      %v511 = vadd.f32 0.0, %v510
      %v512 = vpop.f32.mrb[0].mxu0
      %v513 = vpop.f32.mrb[0].mxu0
      %v514 = vadd.f32 0.0, %v513
      %v515 = vpop.f32.mrb[0].mxu0
      %516 = vdwg.mxu0
      %v517 = vpack.c.bf16 %v506, %v503
      %v518 = vpack.c.bf16 %v514, %v511
      %v521 = vunpack.c.l.b16 %v517
      %v522 = vunpack.c.h.b16 %v517
      %v523 = vunpack.c.l.b16 %v518
      %v524 = vunpack.c.h.b16 %v518
      %v525 = vpack.c.b16 %v521, %v521
      %v526 = vpack.c.b16 %v522, %v522
      %v527 = vpack.c.b16 %v523, %v523
      %v528 = vpack.c.b16 %v524, %v524
      %533 = vst [vmem:[%s365] sm:$0xf] %v525
      %534 = vst [vmem:[%s365 + $0x4] sm:$0xf] %v526
      %535 = vst [vmem:[%s365 + $0x8] sm:$0xf] %v527
      %536 = vst [vmem:[%s365 + $0xc] sm:$0xf] %v528
      %s537 = smul.u32 4, %s22
      %p538 = scmp.lt.s32.totalorder %s21, 3
      %s539 = scalar_select %p538, %s21, 3
      %p540 = scmp.lt.s32.totalorder %s537, 3
      %s541 = scalar_select %p540, %s537, 3
      %p542 = scmp.lt.s32.totalorder %s23, 0
      %s543 = scalar_select %p542, %s23, 0
      %s544 = sadd.s32 %s543, %s541
      %s545 = smul.addr %s539, 4
      %s546 = sadd.s32 %s544, %s545
      %s547 = smul.addr %s546, 4
      %s548 = scalar_lea.vmem %s4, %s547
      // Predicated region
      $region37: #{_lambda_.21} parent=35 // pred_check
        %p549 = pneg %p179
      $region38: #{_lambda_.21} parent=35 // pred_check_branch
        %551 = sbr.rel (%p549) target = $region40
      $region39: #{_lambda_.21} parent=35 // pred_region
        %s552 = smul.u32 4, %s22
      $region40: #{_lambda_.21} parent=35 // pred_fallthru
        _
    $region36: #{_lambda_.21} parent=5 // pred_fallthru
      _
    %p553 = scmp.le.s32.totalorder 2, %s10
    // Predicated region
    $region41: #{_lambda_.21} parent=5 // pred_check
      %p554 = pneg %p553
    $region42: #{_lambda_.21} parent=5 // pred_check_branch
      %556 = sbr.rel (%p554) target = $region44
    $region43: #{_lambda_.21} parent=5 // pred_region
      %s557 = ssub.s32 %s10, 2
      // Predicated region
      $region45: #{_lambda_.21} parent=43 // pred_check
        %p558 = pneg %p185
      $region46: #{_lambda_.21} parent=43 // pred_check_branch
        %560 = sbr.rel (%p558) target = $region48
      $region47: #{_lambda_.21} parent=43 // pred_region
        %s561 = smul.u32 4, %s26
        %p562 = scmp.lt.s32.totalorder %s25, 3
        %s563 = scalar_select %p562, %s25, 3
        %p564 = scmp.lt.s32.totalorder %s561, 3
        %s565 = scalar_select %p564, %s561, 3
        %p566 = scmp.lt.s32.totalorder %s27, 0
        %s567 = scalar_select %p566, %s27, 0
        %s568 = sadd.s32 %s567, %s565
        %s569 = smul.addr %s563, 4
        %s570 = sadd.s32 %s568, %s569
        %s571 = smul.addr %s570, 4
        %s572 = scalar_lea.vmem %s4, %s571
      $region48: #{_lambda_.21} parent=43 // pred_fallthru
        _
    $region44: #{_lambda_.21} parent=5 // pred_fallthru
      _
  $region6: #{_lambda_.21} parent=0 // loop_footer
    %s14 = sadd.s32 1, %s10
  $region7: #{_lambda_.21} parent=0 // loop_footer_branch
    %9 = sbr.rel target = $region3
  $region8: #{_lambda_.21} parent=0 // loop_exit
    _

// kernel: squeeze.30
$region0: #{squeeze.30}
  %s0 = inlined_call_operand.vmem [shape: bf16[1,18,16], index: 0, kind: input, shape index: {}]
  %s1 = inlined_call_operand.vmem [shape: bf16[2,3,3,16], index: 1, kind: output, shape index: {}]
  $region1: #{squeeze.30} parent=0
    #allocation0 [shape = 'u8[24576]{0}', space=vmem, size = 0x6000, scoped, tag = 'scoped mem for output reshape']
    #allocation1 [shape = 'u8[12288]{0}', space=vmem, size = 0x3000, scoped, tag = 'scoped mem for input reshape']
    %s3 = smul.u32 4, 2
    %s4 = sshllo.u32 0, %s3
    %s5 = smul.addr 4, 2
    %s6 = scalar_lea.vmem %s0, %s5
    %s7 = sshrl.u32 %s4, 1
    %s8 = sor.u32 %s4, %s7
    %s9 = sand.u32 %s8, 85
    %s10 = sshrl.u32 %s9, 1
    %s11 = sor.u32 %s9, %s10
    %s12 = sand.u32 51, %s11
    %s13 = sshrl.u32 %s12, 2
    %s14 = sor.u32 %s12, %s13
    %s15 = sand.u32 15, %s14
    %v16 = vld [vmem:[%s6] sm:%s15]
    %v17 = vunpack.c.l.bf16 %v16
    %v18 = vunpack.c.h.bf16 %v16
    %s19 = scalar_lea.vmem [#allocation1], 16
    %20 = vst [vmem:[%s19] sm:%s4] %v17
    %s21 = scalar_lea.vmem %s0, 4
    %s22 = sshrl.u32 %s4, 1
    %s23 = sor.u32 %s4, %s22
    %s24 = sand.u32 %s23, 85
    %s25 = sshrl.u32 %s24, 1
    %s26 = sor.u32 %s24, %s25
    %s27 = sand.u32 51, %s26
    %s28 = sshrl.u32 %s27, 2
    %s29 = sor.u32 %s27, %s28
    %s30 = sand.u32 15, %s29
    %v31 = vld [vmem:[%s21] sm:%s30]
    %v32 = vunpack.c.l.bf16 %v31
    %v33 = vunpack.c.h.bf16 %v31
    %s34 = scalar_lea.vmem [#allocation1], 8
    %35 = vst [vmem:[%s34] sm:%s4] %v32
    %s36 = sshrl.u32 %s4, 1
    %s37 = sor.u32 %s4, %s36
    %s38 = sand.u32 %s37, 85
    %s39 = sshrl.u32 %s38, 1
    %s40 = sor.u32 %s38, %s39
    %s41 = sand.u32 51, %s40
    %s42 = sshrl.u32 %s41, 2
    %s43 = sor.u32 %s41, %s42
    %s44 = sand.u32 15, %s43
    %v45 = vld [vmem:[%s0] sm:%s44]
    %v46 = vunpack.c.l.bf16 %v45
    %v47 = vunpack.c.h.bf16 %v45
    %48 = vst [vmem:[#allocation1] sm:%s4] %v46
    %v49 = vld [vmem:[#allocation1] sm:$0xff]
    %vm50 = vcmask 130048
    %51 = vst.msk [vmem:[#allocation0] sm:$0x7] %vm50, %v49
    %s52 = scalar_lea.vmem [#allocation0], 5
    %53 = vst.msk [vmem:[%s52] sm:$0x38] %vm50, %v49
    %s54 = scalar_lea.vmem [#allocation0], 10
    %55 = vst.msk [vmem:[%s54] sm:$0xc0] %vm50, %v49
    %s56 = scalar_lea.vmem [#allocation1], 8
    %v57 = vld [vmem:[%s56] sm:$0xff]
    %vm58 = vcmask 130048
    %s59 = scalar_lea.vmem [#allocation0], 18
    %60 = vst.msk [vmem:[%s59] ss:$6 sm:$0x3] %vm58, %v57
    %s61 = scalar_lea.vmem [#allocation0], 23
    %62 = vst.msk [vmem:[%s61] sm:$0xc] %vm58, %v57
    %s63 = scalar_lea.vmem [#allocation0], 28
    %64 = vst.msk [vmem:[%s63] sm:$0x70] %vm58, %v57
    %s65 = scalar_lea.vmem [#allocation0], 33
    %66 = vst.msk [vmem:[%s65] sm:$0x80] %vm58, %v57
    %s67 = scalar_lea.vmem [#allocation1], 16
    %v68 = vld [vmem:[%s67] sm:$0x3]
    %vm69 = vcmask 130048
    %s70 = scalar_lea.vmem [#allocation0], 41
    %71 = vst.msk [vmem:[%s70] sm:$0x3] %vm69, %v68
    %s73 = smul.u32 2, 2
    %s74 = sshllo.u32 0, %s73
    %s75 = sshrl.u32 %s73, 1
    %v76 = vld [vmem:[#allocation0] sm:%s74]
    %v77 = vpack.c.bf16 0.0, %v76
    %s78 = sshllo.u32 0, %s75
    %79 = vst [vmem:[%s1] sm:%s78] %v77
    %s80 = scalar_lea.vmem [#allocation0], 8
    %v81 = vld [vmem:[%s80] sm:%s74]
    %v82 = vpack.c.bf16 0.0, %v81
    %s83 = sshllo.u32 0, %s75
    %s84 = scalar_lea.vmem %s1, 2
    %85 = vst [vmem:[%s84] sm:%s83] %v82
    %s86 = scalar_lea.vmem [#allocation0], 16
    %v87 = vld [vmem:[%s86] sm:%s74]
    %v88 = vpack.c.bf16 0.0, %v87
    %s89 = sshllo.u32 0, %s75
    %s90 = smul.addr 2, 2
    %s91 = scalar_lea.vmem %s1, %s90
    %92 = vst [vmem:[%s91] sm:%s89] %v88
    %s93 = scalar_lea.vmem [#allocation0], 24
    %v94 = vld [vmem:[%s93] sm:%s74]
    %v95 = vpack.c.bf16 0.0, %v94
    %s96 = sshllo.u32 0, %s75
    %s97 = smul.addr 2, 3
    %s98 = scalar_lea.vmem %s1, %s97
    %99 = vst [vmem:[%s98] sm:%s96] %v95
    %s100 = scalar_lea.vmem [#allocation0], 32
    %v101 = vld [vmem:[%s100] sm:%s74]
    %v102 = vpack.c.bf16 0.0, %v101
    %s103 = sshllo.u32 0, %s75
    %s104 = smul.addr 2, 4
    %s105 = scalar_lea.vmem %s1, %s104
    %106 = vst [vmem:[%s105] sm:%s103] %v102
    %s107 = scalar_lea.vmem [#allocation0], 40
    %v108 = vld [vmem:[%s107] sm:%s74]
    %v109 = vpack.c.bf16 0.0, %v108
    %s110 = sshllo.u32 0, %s75
    %s111 = smul.addr 2, 5
    %s112 = scalar_lea.vmem %s1, %s111
    %113 = vst [vmem:[%s112] sm:%s110] %v109

// kernel: _lambda_.22
$region0: #{_lambda_.22}
  #allocation0 [shape = 'u32[]', space=smem, size = 0x4, offset = 0x4, fixed_abs, tag = 'smem constant byte address 0x4 - core index']
  #allocation1 [shape = 'u32[144,128]{1,0:T(1,128)}', space=vmem, size = 0x12000, scoped, tag = 'internal scratch']
  %s0 = inlined_call_operand.vmem [shape: bf16[1,112,256], index: 0, kind: input, shape index: {}]
  %s1 = inlined_call_operand.vmem [shape: f32[1,1,256], index: 1, kind: input, shape index: {}]
  %s2 = inlined_call_operand.vmem [shape: f32[1,1,256], index: 2, kind: input, shape index: {}]
  %s3 = inlined_call_operand.vmem [shape: bf16[1,256,128], index: 3, kind: input, shape index: {}]
  %s4 = inlined_call_operand.vmem [shape: bf16[1,112,128], index: 4, kind: output, shape index: {}]
  %s5 = sld [smem:[#allocation0]]
  $region26: #{_lambda_.22} parent=0
    _
  %s7 = ssub.s32 1, %s5
  %s8 = scalar_select 0, %s7, %s5
  // Predicated region
  $region2: #{_lambda_.22} parent=0 // pred_check
    _
  $region3: #{_lambda_.22} parent=0 // pred_check_branch
    %10 = sbr.rel (0) target = $region5
  $region4: #{_lambda_.22} parent=0 // pred_region
    _
  $region5: #{_lambda_.22} parent=0 // pred_fallthru
    _
  // Predicated region
  $region6: #{_lambda_.22} parent=0 // pred_check
    _
  $region7: #{_lambda_.22} parent=0 // pred_check_branch
    %12 = sbr.rel (0) target = $region9
  $region8: #{_lambda_.22} parent=0 // pred_region
    _
  $region9: #{_lambda_.22} parent=0 // pred_fallthru
    _
  // Predicated region
  $region10: #{_lambda_.22} parent=0 // pred_check
    _
  $region11: #{_lambda_.22} parent=0 // pred_check_branch
    %14 = sbr.rel (0) target = $region13
  $region12: #{_lambda_.22} parent=0 // pred_region
    _
  $region13: #{_lambda_.22} parent=0 // pred_fallthru
    _
  // Predicated region
  $region14: #{_lambda_.22} parent=0 // pred_check
    _
  $region15: #{_lambda_.22} parent=0 // pred_check_branch
    %16 = sbr.rel (0) target = $region17
  $region16: #{_lambda_.22} parent=0 // pred_region
    _
  $region17: #{_lambda_.22} parent=0 // pred_fallthru
    _
  %v18 = vld [vmem:[%s0] sm:$0xff]
  %v19 = vld [vmem:[%s0 + $0x8] sm:$0xff]
  %v20 = vld [vmem:[%s0 + $0x10] sm:$0xff]
  %v21 = vld [vmem:[%s0 + $0x18] sm:$0xff]
  %v22 = vld [vmem:[%s0 + $0x20] sm:$0xff]
  %v23 = vld [vmem:[%s0 + $0x28] sm:$0xff]
  %v24 = vld [vmem:[%s0 + $0x30] sm:$0xff]
  %v25 = vld [vmem:[%s0 + $0x38] sm:$0xff]
  %v26 = vld [vmem:[%s0 + $0x40] sm:$0xff]
  %v27 = vld [vmem:[%s0 + $0x48] sm:$0xff]
  %v28 = vld [vmem:[%s0 + $0x50] sm:$0xff]
  %v29 = vld [vmem:[%s0 + $0x58] sm:$0xff]
  %v30 = vld [vmem:[%s0 + $0x60] sm:$0xff]
  %v31 = vld [vmem:[%s0 + $0x68] sm:$0xff]
  %v32 = vunpack.c.l.bf16 %v18
  %v33 = vunpack.c.h.bf16 %v18
  %v34 = vunpack.c.l.bf16 %v19
  %v35 = vunpack.c.h.bf16 %v19
  %v36 = vunpack.c.l.bf16 %v20
  %v37 = vunpack.c.h.bf16 %v20
  %v38 = vunpack.c.l.bf16 %v21
  %v39 = vunpack.c.h.bf16 %v21
  %v40 = vunpack.c.l.bf16 %v22
  %v41 = vunpack.c.h.bf16 %v22
  %v42 = vunpack.c.l.bf16 %v23
  %v43 = vunpack.c.h.bf16 %v23
  %v44 = vunpack.c.l.bf16 %v24
  %v45 = vunpack.c.h.bf16 %v24
  %v46 = vunpack.c.l.bf16 %v25
  %v47 = vunpack.c.h.bf16 %v25
  %v48 = vunpack.c.l.bf16 %v26
  %v49 = vunpack.c.h.bf16 %v26
  %v50 = vunpack.c.l.bf16 %v27
  %v51 = vunpack.c.h.bf16 %v27
  %v52 = vunpack.c.l.bf16 %v28
  %v53 = vunpack.c.h.bf16 %v28
  %v54 = vunpack.c.l.bf16 %v29
  %v55 = vunpack.c.h.bf16 %v29
  %v56 = vunpack.c.l.bf16 %v30
  %v57 = vunpack.c.h.bf16 %v30
  %v58 = vunpack.c.l.bf16 %v31
  %v59 = vunpack.c.h.bf16 %v31
  %v60 = vld [vmem:[%s1] sm:$0x3]
  %v62 = vlaneseq
  %v63 = vshrl.u32 %v62, 7
  %v64 = vsub.s32 0, %v63
  %v65 = vrot.slane %v60, %v64
  %v66 = vlaneseq
  %v67 = vshrl.u32 %v66, 7
  %v68 = vsub.s32 1, %v67
  %v69 = vrot.slane %v60, %v68
  %v72 = vmul.f32 %v32, %v65
  %v73 = vmul.f32 %v33, %v69
  %v74 = vmul.f32 %v34, %v65
  %v75 = vmul.f32 %v35, %v69
  %v76 = vmul.f32 %v36, %v65
  %v77 = vmul.f32 %v37, %v69
  %v78 = vmul.f32 %v38, %v65
  %v79 = vmul.f32 %v39, %v69
  %v80 = vmul.f32 %v40, %v65
  %v81 = vmul.f32 %v41, %v69
  %v82 = vmul.f32 %v42, %v65
  %v83 = vmul.f32 %v43, %v69
  %v84 = vmul.f32 %v44, %v65
  %v85 = vmul.f32 %v45, %v69
  %v86 = vmul.f32 %v46, %v65
  %v87 = vmul.f32 %v47, %v69
  %v88 = vmul.f32 %v48, %v65
  %v89 = vmul.f32 %v49, %v69
  %v90 = vmul.f32 %v50, %v65
  %v91 = vmul.f32 %v51, %v69
  %v92 = vmul.f32 %v52, %v65
  %v93 = vmul.f32 %v53, %v69
  %v94 = vmul.f32 %v54, %v65
  %v95 = vmul.f32 %v55, %v69
  %v96 = vmul.f32 %v56, %v65
  %v97 = vmul.f32 %v57, %v69
  %v98 = vmul.f32 %v58, %v65
  %v99 = vmul.f32 %v59, %v69
  %v100 = vld [vmem:[%s2] sm:$0x3]
  %v102 = vlaneseq
  %v103 = vshrl.u32 %v102, 7
  %v104 = vsub.s32 0, %v103
  %v105 = vrot.slane %v100, %v104
  %v106 = vlaneseq
  %v107 = vshrl.u32 %v106, 7
  %v108 = vsub.s32 1, %v107
  %v109 = vrot.slane %v100, %v108
  %v112 = vadd.f32 %v72, %v105
  %v113 = vadd.f32 %v73, %v109
  %v114 = vadd.f32 %v74, %v105
  %v115 = vadd.f32 %v75, %v109
  %v116 = vadd.f32 %v76, %v105
  %v117 = vadd.f32 %v77, %v109
  %v118 = vadd.f32 %v78, %v105
  %v119 = vadd.f32 %v79, %v109
  %v120 = vadd.f32 %v80, %v105
  %v121 = vadd.f32 %v81, %v109
  %v122 = vadd.f32 %v82, %v105
  %v123 = vadd.f32 %v83, %v109
  %v124 = vadd.f32 %v84, %v105
  %v125 = vadd.f32 %v85, %v109
  %v126 = vadd.f32 %v86, %v105
  %v127 = vadd.f32 %v87, %v109
  %v128 = vadd.f32 %v88, %v105
  %v129 = vadd.f32 %v89, %v109
  %v130 = vadd.f32 %v90, %v105
  %v131 = vadd.f32 %v91, %v109
  %v132 = vadd.f32 %v92, %v105
  %v133 = vadd.f32 %v93, %v109
  %v134 = vadd.f32 %v94, %v105
  %v135 = vadd.f32 %v95, %v109
  %v136 = vadd.f32 %v96, %v105
  %v137 = vadd.f32 %v97, %v109
  %v138 = vadd.f32 %v98, %v105
  %v139 = vadd.f32 %v99, %v109
  %v140 = vmax.f32 %v112, 0.0
  %v141 = vmax.f32 %v113, 0.0
  %v142 = vmax.f32 %v114, 0.0
  %v143 = vmax.f32 %v115, 0.0
  %v144 = vmax.f32 %v116, 0.0
  %v145 = vmax.f32 %v117, 0.0
  %v146 = vmax.f32 %v118, 0.0
  %v147 = vmax.f32 %v119, 0.0
  %v148 = vmax.f32 %v120, 0.0
  %v149 = vmax.f32 %v121, 0.0
  %v150 = vmax.f32 %v122, 0.0
  %v151 = vmax.f32 %v123, 0.0
  %v152 = vmax.f32 %v124, 0.0
  %v153 = vmax.f32 %v125, 0.0
  %v154 = vmax.f32 %v126, 0.0
  %v155 = vmax.f32 %v127, 0.0
  %v156 = vmax.f32 %v128, 0.0
  %v157 = vmax.f32 %v129, 0.0
  %v158 = vmax.f32 %v130, 0.0
  %v159 = vmax.f32 %v131, 0.0
  %v160 = vmax.f32 %v132, 0.0
  %v161 = vmax.f32 %v133, 0.0
  %v162 = vmax.f32 %v134, 0.0
  %v163 = vmax.f32 %v135, 0.0
  %v164 = vmax.f32 %v136, 0.0
  %v165 = vmax.f32 %v137, 0.0
  %v166 = vmax.f32 %v138, 0.0
  %v167 = vmax.f32 %v139, 0.0
  %v168 = vpack.c.bf16 %v142, %v140
  %v169 = vpack.c.bf16 %v143, %v141
  %v170 = vpack.c.bf16 %v146, %v144
  %v171 = vpack.c.bf16 %v147, %v145
  %v172 = vpack.c.bf16 %v150, %v148
  %v173 = vpack.c.bf16 %v151, %v149
  %v174 = vpack.c.bf16 %v154, %v152
  %v175 = vpack.c.bf16 %v155, %v153
  %v176 = vpack.c.bf16 %v158, %v156
  %v177 = vpack.c.bf16 %v159, %v157
  %v178 = vpack.c.bf16 %v162, %v160
  %v179 = vpack.c.bf16 %v163, %v161
  %v180 = vpack.c.bf16 %v166, %v164
  %v181 = vpack.c.bf16 %v167, %v165
  %v182 = vld [vmem:[%s3] sm:$0xf]
  %v183 = vld [vmem:[%s3 + $0x4] sm:$0xf]
  %v184 = vld [vmem:[%s3 + $0x8] sm:$0xf]
  %v185 = vld [vmem:[%s3 + $0xc] sm:$0xf]
  %v186 = vld [vmem:[%s3 + $0x10] sm:$0xf]
  %v187 = vld [vmem:[%s3 + $0x14] sm:$0xf]
  %v188 = vld [vmem:[%s3 + $0x18] sm:$0xf]
  %v189 = vld [vmem:[%s3 + $0x1c] sm:$0xf]
  %v190 = vld [vmem:[%s3 + $0x20] sm:$0xf]
  %v191 = vld [vmem:[%s3 + $0x24] sm:$0xf]
  %v192 = vld [vmem:[%s3 + $0x28] sm:$0xf]
  %v193 = vld [vmem:[%s3 + $0x2c] sm:$0xf]
  %v194 = vld [vmem:[%s3 + $0x30] sm:$0xf]
  %v195 = vld [vmem:[%s3 + $0x34] sm:$0xf]
  %v196 = vld [vmem:[%s3 + $0x38] sm:$0xf]
  %v197 = vld [vmem:[%s3 + $0x3c] sm:$0xf]
  %v198 = vld [vmem:[%s3 + $0x40] sm:$0xf]
  %v199 = vld [vmem:[%s3 + $0x44] sm:$0xf]
  %v200 = vld [vmem:[%s3 + $0x48] sm:$0xf]
  %v201 = vld [vmem:[%s3 + $0x4c] sm:$0xf]
  %v202 = vld [vmem:[%s3 + $0x50] sm:$0xf]
  %v203 = vld [vmem:[%s3 + $0x54] sm:$0xf]
  %v204 = vld [vmem:[%s3 + $0x58] sm:$0xf]
  %v205 = vld [vmem:[%s3 + $0x5c] sm:$0xf]
  %v206 = vld [vmem:[%s3 + $0x60] sm:$0xf]
  %v207 = vld [vmem:[%s3 + $0x64] sm:$0xf]
  %v208 = vld [vmem:[%s3 + $0x68] sm:$0xf]
  %v209 = vld [vmem:[%s3 + $0x6c] sm:$0xf]
  %v210 = vld [vmem:[%s3 + $0x70] sm:$0xf]
  %v211 = vld [vmem:[%s3 + $0x74] sm:$0xf]
  %v212 = vld [vmem:[%s3 + $0x78] sm:$0xf]
  %v213 = vld [vmem:[%s3 + $0x7c] sm:$0xf]
  %v246 = vunpack.c.l.b16 %v182
  %v247 = vunpack.c.l.b16 %v183
  %v248 = vunpack.c.l.b16 %v184
  %v249 = vunpack.c.l.b16 %v185
  %v250 = vunpack.c.l.b16 %v186
  %v251 = vunpack.c.l.b16 %v187
  %v252 = vunpack.c.l.b16 %v188
  %v253 = vunpack.c.l.b16 %v189
  %v254 = vunpack.c.l.b16 %v190
  %v255 = vunpack.c.l.b16 %v191
  %v256 = vunpack.c.l.b16 %v192
  %v257 = vunpack.c.l.b16 %v193
  %v258 = vunpack.c.l.b16 %v194
  %v259 = vunpack.c.l.b16 %v195
  %v260 = vunpack.c.l.b16 %v196
  %v261 = vunpack.c.l.b16 %v197
  %v262 = vunpack.c.l.b16 %v198
  %v263 = vunpack.c.l.b16 %v199
  %v264 = vunpack.c.l.b16 %v200
  %v265 = vunpack.c.l.b16 %v201
  %v266 = vunpack.c.l.b16 %v202
  %v267 = vunpack.c.l.b16 %v203
  %v268 = vunpack.c.l.b16 %v204
  %v269 = vunpack.c.l.b16 %v205
  %v270 = vunpack.c.l.b16 %v206
  %v271 = vunpack.c.l.b16 %v207
  %v272 = vunpack.c.l.b16 %v208
  %v273 = vunpack.c.l.b16 %v209
  %v274 = vunpack.c.l.b16 %v210
  %v275 = vunpack.c.l.b16 %v211
  %v276 = vunpack.c.l.b16 %v212
  %v277 = vunpack.c.l.b16 %v213
  %v278 = vpack.c.b16 %v247, %v246
  %v279 = vpack.c.b16 %v249, %v248
  %v280 = vpack.c.b16 %v251, %v250
  %v281 = vpack.c.b16 %v253, %v252
  %v282 = vpack.c.b16 %v255, %v254
  %v283 = vpack.c.b16 %v257, %v256
  %v284 = vpack.c.b16 %v259, %v258
  %v285 = vpack.c.b16 %v261, %v260
  %v286 = vpack.c.b16 %v263, %v262
  %v287 = vpack.c.b16 %v265, %v264
  %v288 = vpack.c.b16 %v267, %v266
  %v289 = vpack.c.b16 %v269, %v268
  %v290 = vpack.c.b16 %v271, %v270
  %v291 = vpack.c.b16 %v273, %v272
  %v292 = vpack.c.b16 %v275, %v274
  %v293 = vpack.c.b16 %v277, %v276
  %310 = vmatprep.subr.bf16.mxu0 0
  %311 = vmatpush1.bf16.msra.mxu0 %v278
  %312 = vmatprep.subr.bf16.mxu0 0
  %313 = vmatpush1.bf16.msra.mxu0 %v279
  %314 = vmatprep.subr.bf16.mxu0 0
  %315 = vmatpush1.bf16.msra.mxu0 %v280
  %316 = vmatprep.subr.bf16.mxu0 0
  %317 = vmatpush1.bf16.msra.mxu0 %v281
  %318 = vmatprep.subr.bf16.mxu0 0
  %319 = vmatpush1.bf16.msra.mxu0 %v282
  %320 = vmatprep.subr.bf16.mxu0 0
  %321 = vmatpush1.bf16.msra.mxu0 %v283
  %322 = vmatprep.subr.bf16.mxu0 0
  %323 = vmatpush1.bf16.msra.mxu0 %v284
  %324 = vmatprep.subr.bf16.mxu0 0
  %325 = vmatpush1.bf16.msra.mxu0 %v285
  %326 = vmatprep.subr.bf16.mxu0 0
  %327 = vmatpush1.bf16.msra.mxu0 %v286
  %328 = vmatprep.subr.bf16.mxu0 0
  %329 = vmatpush1.bf16.msra.mxu0 %v287
  %330 = vmatprep.subr.bf16.mxu0 0
  %331 = vmatpush1.bf16.msra.mxu0 %v288
  %332 = vmatprep.subr.bf16.mxu0 0
  %333 = vmatpush1.bf16.msra.mxu0 %v289
  %334 = vmatprep.subr.bf16.mxu0 0
  %335 = vmatpush1.bf16.msra.mxu0 %v290
  %336 = vmatprep.subr.bf16.mxu0 0
  %337 = vmatpush1.bf16.msra.mxu0 %v291
  %338 = vmatprep.subr.bf16.mxu0 0
  %339 = vmatpush1.bf16.msra.mxu0 %v292
  %340 = vmatprep.subr.bf16.mxu0 0
  %341 = vmatpush1.bf16.msra.mxu0 %v293
  %342 = vmatprep.mubr.bf16.mxu0 %v169
  %343 = vmatmul.mubr.bf16.gmra.mrb[0].mxu0 %v168
  %v344 = vpop.f32.mrb[0].mxu0
  %v345 = vadd.f32 0.0, %v344
  %v346 = vpop.f32.mrb[0].mxu0
  %v347 = vpop.f32.mrb[0].mxu0
  %v348 = vadd.f32 0.0, %v347
  %v349 = vpop.f32.mrb[0].mxu0
  %350 = vmatprep.mubr.bf16.mxu0 %v171
  %351 = vmatmul.mubr.bf16.gmra.mrb[0].mxu0 %v170
  %v352 = vpop.f32.mrb[0].mxu0
  %v353 = vadd.f32 0.0, %v352
  %v354 = vpop.f32.mrb[0].mxu0
  %v355 = vpop.f32.mrb[0].mxu0
  %v356 = vadd.f32 0.0, %v355
  %v357 = vpop.f32.mrb[0].mxu0
  %358 = vmatprep.mubr.bf16.mxu0 %v173
  %359 = vmatmul.mubr.bf16.gmra.mrb[0].mxu0 %v172
  %v360 = vpop.f32.mrb[0].mxu0
  %v361 = vadd.f32 0.0, %v360
  %v362 = vpop.f32.mrb[0].mxu0
  %v363 = vpop.f32.mrb[0].mxu0
  %v364 = vadd.f32 0.0, %v363
  %v365 = vpop.f32.mrb[0].mxu0
  %366 = vmatprep.mubr.bf16.mxu0 %v175
  %367 = vmatmul.mubr.bf16.gmra.mrb[0].mxu0 %v174
  %v368 = vpop.f32.mrb[0].mxu0
  %v369 = vadd.f32 0.0, %v368
  %v370 = vpop.f32.mrb[0].mxu0
  %v371 = vpop.f32.mrb[0].mxu0
  %v372 = vadd.f32 0.0, %v371
  %v373 = vpop.f32.mrb[0].mxu0
  %374 = vmatprep.mubr.bf16.mxu0 %v177
  %375 = vmatmul.mubr.bf16.gmra.mrb[0].mxu0 %v176
  %v376 = vpop.f32.mrb[0].mxu0
  %v377 = vadd.f32 0.0, %v376
  %v378 = vpop.f32.mrb[0].mxu0
  %v379 = vpop.f32.mrb[0].mxu0
  %v380 = vadd.f32 0.0, %v379
  %v381 = vpop.f32.mrb[0].mxu0
  %382 = vmatprep.mubr.bf16.mxu0 %v179
  %383 = vmatmul.mubr.bf16.gmra.mrb[0].mxu0 %v178
  %v384 = vpop.f32.mrb[0].mxu0
  %v385 = vadd.f32 0.0, %v384
  %v386 = vpop.f32.mrb[0].mxu0
  %v387 = vpop.f32.mrb[0].mxu0
  %v388 = vadd.f32 0.0, %v387
  %v389 = vpop.f32.mrb[0].mxu0
  %390 = vmatprep.mubr.bf16.mxu0 %v181
  %391 = vmatmul.mubr.bf16.gmra.mrb[0].mxu0 %v180
  %v392 = vpop.f32.mrb[0].mxu0
  %v393 = vadd.f32 0.0, %v392
  %v394 = vpop.f32.mrb[0].mxu0
  %v395 = vpop.f32.mrb[0].mxu0
  %v396 = vadd.f32 0.0, %v395
  %v397 = vpop.f32.mrb[0].mxu0
  %398 = vdwg.mxu0
  %v399 = vpack.c.bf16 %v348, %v345
  %v400 = vpack.c.bf16 %v356, %v353
  %v401 = vpack.c.bf16 %v364, %v361
  %v402 = vpack.c.bf16 %v372, %v369
  %v403 = vpack.c.bf16 %v380, %v377
  %v404 = vpack.c.bf16 %v388, %v385
  %v405 = vpack.c.bf16 %v396, %v393
  %v413 = vunpack.c.l.b16 %v399
  %v414 = vunpack.c.h.b16 %v399
  %v415 = vunpack.c.l.b16 %v400
  %v416 = vunpack.c.h.b16 %v400
  %v417 = vunpack.c.l.b16 %v401
  %v418 = vunpack.c.h.b16 %v401
  %v419 = vunpack.c.l.b16 %v402
  %v420 = vunpack.c.h.b16 %v402
  %v421 = vunpack.c.l.b16 %v403
  %v422 = vunpack.c.h.b16 %v403
  %v423 = vunpack.c.l.b16 %v404
  %v424 = vunpack.c.h.b16 %v404
  %v425 = vunpack.c.l.b16 %v405
  %v426 = vunpack.c.h.b16 %v405
  %v427 = vpack.c.b16 %v413, %v413
  %v428 = vpack.c.b16 %v414, %v414
  %v429 = vpack.c.b16 %v415, %v415
  %v430 = vpack.c.b16 %v416, %v416
  %v431 = vpack.c.b16 %v417, %v417
  %v432 = vpack.c.b16 %v418, %v418
  %v433 = vpack.c.b16 %v419, %v419
  %v434 = vpack.c.b16 %v420, %v420
  %v435 = vpack.c.b16 %v421, %v421
  %v436 = vpack.c.b16 %v422, %v422
  %v437 = vpack.c.b16 %v423, %v423
  %v438 = vpack.c.b16 %v424, %v424
  %v439 = vpack.c.b16 %v425, %v425
  %v440 = vpack.c.b16 %v426, %v426
  %455 = vst [vmem:[%s4] sm:$0xf] %v427
  %456 = vst [vmem:[%s4 + $0x4] sm:$0xf] %v428
  %457 = vst [vmem:[%s4 + $0x8] sm:$0xf] %v429
  %458 = vst [vmem:[%s4 + $0xc] sm:$0xf] %v430
  %459 = vst [vmem:[%s4 + $0x10] sm:$0xf] %v431
  %460 = vst [vmem:[%s4 + $0x14] sm:$0xf] %v432
  %461 = vst [vmem:[%s4 + $0x18] sm:$0xf] %v433
  %462 = vst [vmem:[%s4 + $0x1c] sm:$0xf] %v434
  %463 = vst [vmem:[%s4 + $0x20] sm:$0xf] %v435
  %464 = vst [vmem:[%s4 + $0x24] sm:$0xf] %v436
  %465 = vst [vmem:[%s4 + $0x28] sm:$0xf] %v437
  %466 = vst [vmem:[%s4 + $0x2c] sm:$0xf] %v438
  %467 = vst [vmem:[%s4 + $0x30] sm:$0xf] %v439
  %468 = vst [vmem:[%s4 + $0x34] sm:$0xf] %v440
  // Predicated region
  $region18: #{_lambda_.22} parent=0 // pred_check
    _
  $region19: #{_lambda_.22} parent=0 // pred_check_branch
    %470 = sbr.rel (0) target = $region21
  $region20: #{_lambda_.22} parent=0 // pred_region
    _
  $region21: #{_lambda_.22} parent=0 // pred_fallthru
    _
  // Predicated region
  $region22: #{_lambda_.22} parent=0 // pred_check
    _
  $region23: #{_lambda_.22} parent=0 // pred_check_branch
    %472 = sbr.rel (0) target = $region25
  $region24: #{_lambda_.22} parent=0 // pred_region
    _
  $region25: #{_lambda_.22} parent=0 // pred_fallthru
    _

// kernel: _lambda_.24
$region0: #{_lambda_.24}
  #allocation0 [shape = 'u32[]', space=smem, size = 0x4, offset = 0x4, fixed_abs, tag = 'smem constant byte address 0x4 - core index']
  #allocation1 [shape = 'u32[144,128]{1,0:T(1,128)}', space=vmem, size = 0x12000, scoped, tag = 'internal scratch']
  %s0 = inlined_call_operand.vmem [shape: bf16[1,112,128], index: 0, kind: input, shape index: {}]
  %s1 = inlined_call_operand.vmem [shape: f32[1,1,128], index: 1, kind: input, shape index: {}]
  %s2 = inlined_call_operand.vmem [shape: f32[1,1,128], index: 2, kind: input, shape index: {}]
  %s3 = inlined_call_operand.vmem [shape: bf16[1,128,128], index: 3, kind: input, shape index: {}]
  %s4 = inlined_call_operand.vmem [shape: bf16[1,112,128], index: 4, kind: output, shape index: {}]
  %s5 = sld [smem:[#allocation0]]
  $region26: #{_lambda_.24} parent=0
    _
  %s7 = ssub.s32 1, %s5
  %s8 = scalar_select 0, %s7, %s5
  // Predicated region
  $region2: #{_lambda_.24} parent=0 // pred_check
    _
  $region3: #{_lambda_.24} parent=0 // pred_check_branch
    %10 = sbr.rel (0) target = $region5
  $region4: #{_lambda_.24} parent=0 // pred_region
    _
  $region5: #{_lambda_.24} parent=0 // pred_fallthru
    _
  // Predicated region
  $region6: #{_lambda_.24} parent=0 // pred_check
    _
  $region7: #{_lambda_.24} parent=0 // pred_check_branch
    %12 = sbr.rel (0) target = $region9
  $region8: #{_lambda_.24} parent=0 // pred_region
    _
  $region9: #{_lambda_.24} parent=0 // pred_fallthru
    _
  // Predicated region
  $region10: #{_lambda_.24} parent=0 // pred_check
    _
  $region11: #{_lambda_.24} parent=0 // pred_check_branch
    %14 = sbr.rel (0) target = $region13
  $region12: #{_lambda_.24} parent=0 // pred_region
    _
  $region13: #{_lambda_.24} parent=0 // pred_fallthru
    _
  // Predicated region
  $region14: #{_lambda_.24} parent=0 // pred_check
    _
  $region15: #{_lambda_.24} parent=0 // pred_check_branch
    %16 = sbr.rel (0) target = $region17
  $region16: #{_lambda_.24} parent=0 // pred_region
    _
  $region17: #{_lambda_.24} parent=0 // pred_fallthru
    _
  %v18 = vld [vmem:[%s0] sm:$0xf]
  %v19 = vld [vmem:[%s0 + $0x4] sm:$0xf]
  %v20 = vld [vmem:[%s0 + $0x8] sm:$0xf]
  %v21 = vld [vmem:[%s0 + $0xc] sm:$0xf]
  %v22 = vld [vmem:[%s0 + $0x10] sm:$0xf]
  %v23 = vld [vmem:[%s0 + $0x14] sm:$0xf]
  %v24 = vld [vmem:[%s0 + $0x18] sm:$0xf]
  %v25 = vld [vmem:[%s0 + $0x1c] sm:$0xf]
  %v26 = vld [vmem:[%s0 + $0x20] sm:$0xf]
  %v27 = vld [vmem:[%s0 + $0x24] sm:$0xf]
  %v28 = vld [vmem:[%s0 + $0x28] sm:$0xf]
  %v29 = vld [vmem:[%s0 + $0x2c] sm:$0xf]
  %v30 = vld [vmem:[%s0 + $0x30] sm:$0xf]
  %v31 = vld [vmem:[%s0 + $0x34] sm:$0xf]
  %v32 = vunpack.c.l.bf16 %v18
  %v33 = vunpack.c.l.bf16 %v19
  %v34 = vunpack.c.l.bf16 %v20
  %v35 = vunpack.c.l.bf16 %v21
  %v36 = vunpack.c.l.bf16 %v22
  %v37 = vunpack.c.l.bf16 %v23
  %v38 = vunpack.c.l.bf16 %v24
  %v39 = vunpack.c.l.bf16 %v25
  %v40 = vunpack.c.l.bf16 %v26
  %v41 = vunpack.c.l.bf16 %v27
  %v42 = vunpack.c.l.bf16 %v28
  %v43 = vunpack.c.l.bf16 %v29
  %v44 = vunpack.c.l.bf16 %v30
  %v45 = vunpack.c.l.bf16 %v31
  %v46 = vld [vmem:[%s1] sm:$0x1]
  %v48 = vlaneseq
  %v49 = vshrl.u32 %v48, 7
  %v50 = vsub.s32 0, %v49
  %v51 = vrot.slane %v46, %v50
  %v53 = vmul.f32 %v32, %v51
  %v54 = vmul.f32 %v33, %v51
  %v55 = vmul.f32 %v34, %v51
  %v56 = vmul.f32 %v35, %v51
  %v57 = vmul.f32 %v36, %v51
  %v58 = vmul.f32 %v37, %v51
  %v59 = vmul.f32 %v38, %v51
  %v60 = vmul.f32 %v39, %v51
  %v61 = vmul.f32 %v40, %v51
  %v62 = vmul.f32 %v41, %v51
  %v63 = vmul.f32 %v42, %v51
  %v64 = vmul.f32 %v43, %v51
  %v65 = vmul.f32 %v44, %v51
  %v66 = vmul.f32 %v45, %v51
  %v67 = vld [vmem:[%s2] sm:$0x1]
  %v69 = vlaneseq
  %v70 = vshrl.u32 %v69, 7
  %v71 = vsub.s32 0, %v70
  %v72 = vrot.slane %v67, %v71
  %v74 = vadd.f32 %v53, %v72
  %v75 = vadd.f32 %v54, %v72
  %v76 = vadd.f32 %v55, %v72
  %v77 = vadd.f32 %v56, %v72
  %v78 = vadd.f32 %v57, %v72
  %v79 = vadd.f32 %v58, %v72
  %v80 = vadd.f32 %v59, %v72
  %v81 = vadd.f32 %v60, %v72
  %v82 = vadd.f32 %v61, %v72
  %v83 = vadd.f32 %v62, %v72
  %v84 = vadd.f32 %v63, %v72
  %v85 = vadd.f32 %v64, %v72
  %v86 = vadd.f32 %v65, %v72
  %v87 = vadd.f32 %v66, %v72
  %v88 = vmax.f32 %v74, 0.0
  %v89 = vmax.f32 %v75, 0.0
  %v90 = vmax.f32 %v76, 0.0
  %v91 = vmax.f32 %v77, 0.0
  %v92 = vmax.f32 %v78, 0.0
  %v93 = vmax.f32 %v79, 0.0
  %v94 = vmax.f32 %v80, 0.0
  %v95 = vmax.f32 %v81, 0.0
  %v96 = vmax.f32 %v82, 0.0
  %v97 = vmax.f32 %v83, 0.0
  %v98 = vmax.f32 %v84, 0.0
  %v99 = vmax.f32 %v85, 0.0
  %v100 = vmax.f32 %v86, 0.0
  %v101 = vmax.f32 %v87, 0.0
  %v102 = vpack.c.bf16 %v89, %v88
  %v103 = vpack.c.bf16 %v91, %v90
  %v104 = vpack.c.bf16 %v93, %v92
  %v105 = vpack.c.bf16 %v95, %v94
  %v106 = vpack.c.bf16 %v97, %v96
  %v107 = vpack.c.bf16 %v99, %v98
  %v108 = vpack.c.bf16 %v101, %v100
  %v109 = vld [vmem:[%s3] sm:$0xf]
  %v110 = vld [vmem:[%s3 + $0x4] sm:$0xf]
  %v111 = vld [vmem:[%s3 + $0x8] sm:$0xf]
  %v112 = vld [vmem:[%s3 + $0xc] sm:$0xf]
  %v113 = vld [vmem:[%s3 + $0x10] sm:$0xf]
  %v114 = vld [vmem:[%s3 + $0x14] sm:$0xf]
  %v115 = vld [vmem:[%s3 + $0x18] sm:$0xf]
  %v116 = vld [vmem:[%s3 + $0x1c] sm:$0xf]
  %v117 = vld [vmem:[%s3 + $0x20] sm:$0xf]
  %v118 = vld [vmem:[%s3 + $0x24] sm:$0xf]
  %v119 = vld [vmem:[%s3 + $0x28] sm:$0xf]
  %v120 = vld [vmem:[%s3 + $0x2c] sm:$0xf]
  %v121 = vld [vmem:[%s3 + $0x30] sm:$0xf]
  %v122 = vld [vmem:[%s3 + $0x34] sm:$0xf]
  %v123 = vld [vmem:[%s3 + $0x38] sm:$0xf]
  %v124 = vld [vmem:[%s3 + $0x3c] sm:$0xf]
  %v141 = vunpack.c.l.b16 %v109
  %v142 = vunpack.c.l.b16 %v110
  %v143 = vunpack.c.l.b16 %v111
  %v144 = vunpack.c.l.b16 %v112
  %v145 = vunpack.c.l.b16 %v113
  %v146 = vunpack.c.l.b16 %v114
  %v147 = vunpack.c.l.b16 %v115
  %v148 = vunpack.c.l.b16 %v116
  %v149 = vunpack.c.l.b16 %v117
  %v150 = vunpack.c.l.b16 %v118
  %v151 = vunpack.c.l.b16 %v119
  %v152 = vunpack.c.l.b16 %v120
  %v153 = vunpack.c.l.b16 %v121
  %v154 = vunpack.c.l.b16 %v122
  %v155 = vunpack.c.l.b16 %v123
  %v156 = vunpack.c.l.b16 %v124
  %v157 = vpack.c.b16 %v142, %v141
  %v158 = vpack.c.b16 %v144, %v143
  %v159 = vpack.c.b16 %v146, %v145
  %v160 = vpack.c.b16 %v148, %v147
  %v161 = vpack.c.b16 %v150, %v149
  %v162 = vpack.c.b16 %v152, %v151
  %v163 = vpack.c.b16 %v154, %v153
  %v164 = vpack.c.b16 %v156, %v155
  %173 = vmatprep.subr.bf16.mxu0 0
  %174 = vmatpush1.bf16.msra.mxu0 %v157
  %175 = vmatprep.subr.bf16.mxu0 0
  %176 = vmatpush1.bf16.msra.mxu0 %v158
  %177 = vmatprep.subr.bf16.mxu0 0
  %178 = vmatpush1.bf16.msra.mxu0 %v159
  %179 = vmatprep.subr.bf16.mxu0 0
  %180 = vmatpush1.bf16.msra.mxu0 %v160
  %181 = vmatprep.subr.bf16.mxu0 0
  %182 = vmatpush1.bf16.msra.mxu0 %v161
  %183 = vmatprep.subr.bf16.mxu0 0
  %184 = vmatpush1.bf16.msra.mxu0 %v162
  %185 = vmatprep.subr.bf16.mxu0 0
  %186 = vmatpush1.bf16.msra.mxu0 %v163
  %187 = vmatprep.subr.bf16.mxu0 0
  %188 = vmatpush1.bf16.msra.mxu0 %v164
  %189 = vmatprep.subr.bf16.mxu0 0
  %190 = vmatpush1.bf16.msra.mxu0 0
  %191 = vmatprep.subr.bf16.mxu0 0
  %192 = vmatpush1.bf16.msra.mxu0 0
  %193 = vmatprep.subr.bf16.mxu0 0
  %194 = vmatpush1.bf16.msra.mxu0 0
  %195 = vmatprep.subr.bf16.mxu0 0
  %196 = vmatpush1.bf16.msra.mxu0 0
  %197 = vmatprep.subr.bf16.mxu0 0
  %198 = vmatpush1.bf16.msra.mxu0 0
  %199 = vmatprep.subr.bf16.mxu0 0
  %200 = vmatpush1.bf16.msra.mxu0 0
  %201 = vmatprep.subr.bf16.mxu0 0
  %202 = vmatpush1.bf16.msra.mxu0 0
  %203 = vmatprep.subr.bf16.mxu0 0
  %204 = vmatpush1.bf16.msra.mxu0 0
  %205 = vmatprep.mubr.bf16.mxu0 0
  %206 = vmatmul.mubr.bf16.gmra.mrb[0].mxu0 %v102
  %v207 = vpop.f32.mrb[0].mxu0
  %v208 = vadd.f32 0.0, %v207
  %v209 = vpop.f32.mrb[0].mxu0
  %v210 = vpop.f32.mrb[0].mxu0
  %v211 = vadd.f32 0.0, %v210
  %v212 = vpop.f32.mrb[0].mxu0
  %213 = vmatprep.mubr.bf16.mxu0 0
  %214 = vmatmul.mubr.bf16.gmra.mrb[0].mxu0 %v103
  %v215 = vpop.f32.mrb[0].mxu0
  %v216 = vadd.f32 0.0, %v215
  %v217 = vpop.f32.mrb[0].mxu0
  %v218 = vpop.f32.mrb[0].mxu0
  %v219 = vadd.f32 0.0, %v218
  %v220 = vpop.f32.mrb[0].mxu0
  %221 = vmatprep.mubr.bf16.mxu0 0
  %222 = vmatmul.mubr.bf16.gmra.mrb[0].mxu0 %v104
  %v223 = vpop.f32.mrb[0].mxu0
  %v224 = vadd.f32 0.0, %v223
  %v225 = vpop.f32.mrb[0].mxu0
  %v226 = vpop.f32.mrb[0].mxu0
  %v227 = vadd.f32 0.0, %v226
  %v228 = vpop.f32.mrb[0].mxu0
  %229 = vmatprep.mubr.bf16.mxu0 0
  %230 = vmatmul.mubr.bf16.gmra.mrb[0].mxu0 %v105
  %v231 = vpop.f32.mrb[0].mxu0
  %v232 = vadd.f32 0.0, %v231
  %v233 = vpop.f32.mrb[0].mxu0
  %v234 = vpop.f32.mrb[0].mxu0
  %v235 = vadd.f32 0.0, %v234
  %v236 = vpop.f32.mrb[0].mxu0
  %237 = vmatprep.mubr.bf16.mxu0 0
  %238 = vmatmul.mubr.bf16.gmra.mrb[0].mxu0 %v106
  %v239 = vpop.f32.mrb[0].mxu0
  %v240 = vadd.f32 0.0, %v239
  %v241 = vpop.f32.mrb[0].mxu0
  %v242 = vpop.f32.mrb[0].mxu0
  %v243 = vadd.f32 0.0, %v242
  %v244 = vpop.f32.mrb[0].mxu0
  %245 = vmatprep.mubr.bf16.mxu0 0
  %246 = vmatmul.mubr.bf16.gmra.mrb[0].mxu0 %v107
  %v247 = vpop.f32.mrb[0].mxu0
  %v248 = vadd.f32 0.0, %v247
  %v249 = vpop.f32.mrb[0].mxu0
  %v250 = vpop.f32.mrb[0].mxu0
  %v251 = vadd.f32 0.0, %v250
  %v252 = vpop.f32.mrb[0].mxu0
  %253 = vmatprep.mubr.bf16.mxu0 0
  %254 = vmatmul.mubr.bf16.gmra.mrb[0].mxu0 %v108
  %v255 = vpop.f32.mrb[0].mxu0
  %v256 = vadd.f32 0.0, %v255
  %v257 = vpop.f32.mrb[0].mxu0
  %v258 = vpop.f32.mrb[0].mxu0
  %v259 = vadd.f32 0.0, %v258
  %v260 = vpop.f32.mrb[0].mxu0
  %261 = vdwg.mxu0
  %v262 = vpack.c.bf16 %v211, %v208
  %v263 = vpack.c.bf16 %v219, %v216
  %v264 = vpack.c.bf16 %v227, %v224
  %v265 = vpack.c.bf16 %v235, %v232
  %v266 = vpack.c.bf16 %v243, %v240
  %v267 = vpack.c.bf16 %v251, %v248
  %v268 = vpack.c.bf16 %v259, %v256
  %v276 = vunpack.c.l.b16 %v262
  %v277 = vunpack.c.h.b16 %v262
  %v278 = vunpack.c.l.b16 %v263
  %v279 = vunpack.c.h.b16 %v263
  %v280 = vunpack.c.l.b16 %v264
  %v281 = vunpack.c.h.b16 %v264
  %v282 = vunpack.c.l.b16 %v265
  %v283 = vunpack.c.h.b16 %v265
  %v284 = vunpack.c.l.b16 %v266
  %v285 = vunpack.c.h.b16 %v266
  %v286 = vunpack.c.l.b16 %v267
  %v287 = vunpack.c.h.b16 %v267
  %v288 = vunpack.c.l.b16 %v268
  %v289 = vunpack.c.h.b16 %v268
  %v290 = vpack.c.b16 %v276, %v276
  %v291 = vpack.c.b16 %v277, %v277
  %v292 = vpack.c.b16 %v278, %v278
  %v293 = vpack.c.b16 %v279, %v279
  %v294 = vpack.c.b16 %v280, %v280
  %v295 = vpack.c.b16 %v281, %v281
  %v296 = vpack.c.b16 %v282, %v282
  %v297 = vpack.c.b16 %v283, %v283
  %v298 = vpack.c.b16 %v284, %v284
  %v299 = vpack.c.b16 %v285, %v285
  %v300 = vpack.c.b16 %v286, %v286
  %v301 = vpack.c.b16 %v287, %v287
  %v302 = vpack.c.b16 %v288, %v288
  %v303 = vpack.c.b16 %v289, %v289
  %318 = vst [vmem:[%s4] sm:$0xf] %v290
  %319 = vst [vmem:[%s4 + $0x4] sm:$0xf] %v291
  %320 = vst [vmem:[%s4 + $0x8] sm:$0xf] %v292
  %321 = vst [vmem:[%s4 + $0xc] sm:$0xf] %v293
  %322 = vst [vmem:[%s4 + $0x10] sm:$0xf] %v294
  %323 = vst [vmem:[%s4 + $0x14] sm:$0xf] %v295
  %324 = vst [vmem:[%s4 + $0x18] sm:$0xf] %v296
  %325 = vst [vmem:[%s4 + $0x1c] sm:$0xf] %v297
  %326 = vst [vmem:[%s4 + $0x20] sm:$0xf] %v298
  %327 = vst [vmem:[%s4 + $0x24] sm:$0xf] %v299
  %328 = vst [vmem:[%s4 + $0x28] sm:$0xf] %v300
  %329 = vst [vmem:[%s4 + $0x2c] sm:$0xf] %v301
  %330 = vst [vmem:[%s4 + $0x30] sm:$0xf] %v302
  %331 = vst [vmem:[%s4 + $0x34] sm:$0xf] %v303
  // Predicated region
  $region18: #{_lambda_.24} parent=0 // pred_check
    _
  $region19: #{_lambda_.24} parent=0 // pred_check_branch
    %333 = sbr.rel (0) target = $region21
  $region20: #{_lambda_.24} parent=0 // pred_region
    _
  $region21: #{_lambda_.24} parent=0 // pred_fallthru
    _
  // Predicated region
  $region22: #{_lambda_.24} parent=0 // pred_check
    _
  $region23: #{_lambda_.24} parent=0 // pred_check_branch
    %335 = sbr.rel (0) target = $region25
  $region24: #{_lambda_.24} parent=0 // pred_region
    _
  $region25: #{_lambda_.24} parent=0 // pred_fallthru
    _

// kernel: _lambda_.25
$region0: #{_lambda_.25}
  #allocation0 [shape = 'u32[]', space=smem, size = 0x4, offset = 0x4, fixed_abs, tag = 'smem constant byte address 0x4 - core index']
  #allocation1 [shape = 'u32[144,128]{1,0:T(1,128)}', space=vmem, size = 0x12000, scoped, tag = 'internal scratch']
  %s0 = inlined_call_operand.vmem [shape: bf16[4,128,256], index: 0, kind: input, shape index: {}]
  %s1 = inlined_call_operand.vmem [shape: f32[4,1,256], index: 1, kind: input, shape index: {}]
  %s2 = inlined_call_operand.vmem [shape: f32[4,1,256], index: 2, kind: input, shape index: {}]
  %s3 = inlined_call_operand.vmem [shape: bf16[4,256,128], index: 3, kind: input, shape index: {}]
  %s4 = inlined_call_operand.vmem [shape: f32[4,128,128], index: 4, kind: output, shape index: {}]
  %s5 = sld [smem:[#allocation0]]
  $region57: #{_lambda_.25} parent=0
    _
  %s7 = ssub.s32 1, %s5
  %s8 = scalar_select 0, %s7, %s5
  loop: start=0, step=1, limit=6
  $region2: #{_lambda_.25} parent=0 // loop_pre_header
    _
  $region3: #{_lambda_.25} parent=0 // loop_header
    %s10 = sphi 0, %s14
    %p11 = scmp.ge.s32.totalorder %s10, 6
    %s17 = sphi 0, %s43
    %s18 = sphi 0, %s39
    %s19 = sphi 0, %s35
    %s20 = sphi 0, %s31
    %s21 = sphi 0, %s17
    %s22 = sphi 0, %s18
    %s23 = sphi 0, %s19
    %s24 = sphi 0, %s20
    %s25 = sphi 0, %s21
    %s26 = sphi 0, %s22
    %s27 = sphi 0, %s23
    %s28 = sphi 0, %s24
    %s50 = sphi 0, %s52
    %s53 = sphi 0, %s50
    %s54 = sphi 0, %s53
    %s70 = sphi 0, %s54
    %s78 = sphi 0, %s80
    %s81 = sphi 0, %s78
    %s82 = sphi 0, %s81
    %s98 = sphi 0, %s82
    %s106 = sphi 0, %s108
    %s109 = sphi 0, %s106
    %s110 = sphi 0, %s109
    %s126 = sphi 0, %s110
    %s136 = sphi 0, %s138
    %s139 = sphi 0, %s136
    %s140 = sphi 0, %s139
    %s156 = sphi 0, %s140
    %s166 = sphi 0, %s168
    %s169 = sphi 0, %s166
    %s170 = sphi 0, %s169
    %s186 = sphi 0, %s170
  $region4: #{_lambda_.25} parent=0 // loop_header_branch
    %13 = sbr.rel (%p11) target = $region8
  $region5: #{_lambda_.25} parent=0 // loop_body
    %s15 = ssub.s32 %s10, 1
    %s16 = ssub.s32 %s10, 2
    %s29 = sadd.s32 1, %s20
    %p30 = scmp.ge.s32.totalorder %s29, 1
    %s31 = scalar_select %p30, 0, %s29
    %s32 = sadd.s32 1, %s19
    %s33 = scalar_select %p30, %s32, %s19
    %p34 = scmp.ge.s32.totalorder %s33, 1
    %s35 = scalar_select %p34, 0, %s33
    %s36 = sadd.s32 1, %s18
    %s37 = scalar_select %p34, %s36, %s18
    %p38 = scmp.ge.s32.totalorder %s37, 1
    %s39 = scalar_select %p38, 0, %s37
    %s40 = sadd.s32 1, %s17
    %s41 = scalar_select %p38, %s40, %s17
    %p42 = scmp.ge.s32.totalorder %s41, 4
    %s43 = scalar_select %p42, 0, %s41
    %s44 = ssub.s32 %s17, %s43
    %s45 = ssub.s32 %s18, %s39
    %s46 = sor.u32 %s44, %s45
    %s47 = ssub.s32 %s20, %s31
    %s48 = sor.u32 %s46, %s47
    %p49 = scmp.eq.s32.totalorder %s48, 0
    %s51 = sadd.s32 %s50, 1
    %s52 = scalar_select %p49, %s50, %s51
    %p55 = pneg %p49
    %p56 = scmp.eq.s32.totalorder %s10, 3
    %p57 = por %p55, %p56
    %p58 = scmp.ne.s32.totalorder %s50, %s53
    %p59 = scmp.eq.s32.totalorder %s10, 0
    %p60 = por %p58, %p59
    %p61 = scmp.ne.s32.totalorder %s50, %s53
    %p62 = scmp.eq.s32.totalorder %s15, 3
    %p63 = por %p61, %p62
    %p64 = scmp.ne.s32.totalorder %s53, %s54
    %p65 = scmp.eq.s32.totalorder %s15, 0
    %p66 = por %p64, %p65
    %p67 = scmp.ne.s32.totalorder %s53, %s54
    %p68 = scmp.eq.s32.totalorder %s16, 3
    %p69 = por %p67, %p68
    %p71 = scmp.ne.s32.totalorder %s54, %s70
    %p72 = scmp.eq.s32.totalorder %s16, 0
    %p73 = por %p71, %p72
    %s74 = ssub.s32 %s17, %s43
    %s75 = ssub.s32 %s20, %s31
    %s76 = sor.u32 %s74, %s75
    %p77 = scmp.eq.s32.totalorder %s76, 0
    %s79 = sadd.s32 %s78, 1
    %s80 = scalar_select %p77, %s78, %s79
    %p83 = pneg %p77
    %p84 = scmp.eq.s32.totalorder %s10, 3
    %p85 = por %p83, %p84
    %p86 = scmp.ne.s32.totalorder %s78, %s81
    %p87 = scmp.eq.s32.totalorder %s10, 0
    %p88 = por %p86, %p87
    %p89 = scmp.ne.s32.totalorder %s78, %s81
    %p90 = scmp.eq.s32.totalorder %s15, 3
    %p91 = por %p89, %p90
    %p92 = scmp.ne.s32.totalorder %s81, %s82
    %p93 = scmp.eq.s32.totalorder %s15, 0
    %p94 = por %p92, %p93
    %p95 = scmp.ne.s32.totalorder %s81, %s82
    %p96 = scmp.eq.s32.totalorder %s16, 3
    %p97 = por %p95, %p96
    %p99 = scmp.ne.s32.totalorder %s82, %s98
    %p100 = scmp.eq.s32.totalorder %s16, 0
    %p101 = por %p99, %p100
    %s102 = ssub.s32 %s17, %s43
    %s103 = ssub.s32 %s20, %s31
    %s104 = sor.u32 %s102, %s103
    %p105 = scmp.eq.s32.totalorder %s104, 0
    %s107 = sadd.s32 %s106, 1
    %s108 = scalar_select %p105, %s106, %s107
    %p111 = pneg %p105
    %p112 = scmp.eq.s32.totalorder %s10, 3
    %p113 = por %p111, %p112
    %p114 = scmp.ne.s32.totalorder %s106, %s109
    %p115 = scmp.eq.s32.totalorder %s10, 0
    %p116 = por %p114, %p115
    %p117 = scmp.ne.s32.totalorder %s106, %s109
    %p118 = scmp.eq.s32.totalorder %s15, 3
    %p119 = por %p117, %p118
    %p120 = scmp.ne.s32.totalorder %s109, %s110
    %p121 = scmp.eq.s32.totalorder %s15, 0
    %p122 = por %p120, %p121
    %p123 = scmp.ne.s32.totalorder %s109, %s110
    %p124 = scmp.eq.s32.totalorder %s16, 3
    %p125 = por %p123, %p124
    %p127 = scmp.ne.s32.totalorder %s110, %s126
    %p128 = scmp.eq.s32.totalorder %s16, 0
    %p129 = por %p127, %p128
    %s130 = ssub.s32 %s17, %s43
    %s131 = ssub.s32 %s20, %s31
    %s132 = sor.u32 %s130, %s131
    %s133 = ssub.s32 %s19, %s35
    %s134 = sor.u32 %s132, %s133
    %p135 = scmp.eq.s32.totalorder %s134, 0
    %s137 = sadd.s32 %s136, 1
    %s138 = scalar_select %p135, %s136, %s137
    %p141 = pneg %p135
    %p142 = scmp.eq.s32.totalorder %s10, 3
    %p143 = por %p141, %p142
    %p144 = scmp.ne.s32.totalorder %s136, %s139
    %p145 = scmp.eq.s32.totalorder %s10, 0
    %p146 = por %p144, %p145
    %p147 = scmp.ne.s32.totalorder %s136, %s139
    %p148 = scmp.eq.s32.totalorder %s15, 3
    %p149 = por %p147, %p148
    %p150 = scmp.ne.s32.totalorder %s139, %s140
    %p151 = scmp.eq.s32.totalorder %s15, 0
    %p152 = por %p150, %p151
    %p153 = scmp.ne.s32.totalorder %s139, %s140
    %p154 = scmp.eq.s32.totalorder %s16, 3
    %p155 = por %p153, %p154
    %p157 = scmp.ne.s32.totalorder %s140, %s156
    %p158 = scmp.eq.s32.totalorder %s16, 0
    %p159 = por %p157, %p158
    %s160 = ssub.s32 %s17, %s43
    %s161 = ssub.s32 %s18, %s39
    %s162 = sor.u32 %s160, %s161
    %s163 = ssub.s32 %s19, %s35
    %s164 = sor.u32 %s162, %s163
    %p165 = scmp.eq.s32.totalorder %s164, 0
    %s167 = sadd.s32 %s166, 1
    %s168 = scalar_select %p165, %s166, %s167
    %p171 = pneg %p165
    %p172 = scmp.eq.s32.totalorder %s10, 3
    %p173 = por %p171, %p172
    %p174 = scmp.ne.s32.totalorder %s166, %s169
    %p175 = scmp.eq.s32.totalorder %s10, 0
    %p176 = por %p174, %p175
    %p177 = scmp.ne.s32.totalorder %s166, %s169
    %p178 = scmp.eq.s32.totalorder %s15, 3
    %p179 = por %p177, %p178
    %p180 = scmp.ne.s32.totalorder %s169, %s170
    %p181 = scmp.eq.s32.totalorder %s15, 0
    %p182 = por %p180, %p181
    %p183 = scmp.ne.s32.totalorder %s169, %s170
    %p184 = scmp.eq.s32.totalorder %s16, 3
    %p185 = por %p183, %p184
    %p187 = scmp.ne.s32.totalorder %s170, %s186
    %p188 = scmp.eq.s32.totalorder %s16, 0
    %p189 = por %p187, %p188
    %p190 = scmp.le.s32.totalorder 1, %s10
    %p191 = scmp.lt.s32.totalorder %s10, 5
    %p192 = pnand %p190, %p191
    %p193 = pneg %p192
    // Predicated region
    $region9: #{_lambda_.25} parent=5 // pred_check
      _
    $region10: #{_lambda_.25} parent=5 // pred_check_branch
      %195 = sbr.rel (%p192) target = $region12
    $region11: #{_lambda_.25} parent=5 // pred_region
      %s196 = ssub.s32 %s10, 1
    $region12: #{_lambda_.25} parent=5 // pred_fallthru
      _
    %p197 = scmp.lt.s32.totalorder %s10, 4
    // Predicated region
    $region13: #{_lambda_.25} parent=5 // pred_check
      %p198 = pneg %p197
    $region14: #{_lambda_.25} parent=5 // pred_check_branch
      %200 = sbr.rel (%p198) target = $region16
    $region15: #{_lambda_.25} parent=5 // pred_region
      // Predicated region
      $region17: #{_lambda_.25} parent=15 // pred_check
        %p201 = pneg %p60
      $region18: #{_lambda_.25} parent=15 // pred_check_branch
        %203 = sbr.rel (%p201) target = $region20
      $region19: #{_lambda_.25} parent=15 // pred_region
        %s204 = smul.u32 16, %s18
        %s205 = smul.u32 2, %s20
        %p206 = scmp.lt.s32.totalorder %s17, 3
        %s207 = scalar_select %p206, %s17, 3
        %p208 = scmp.lt.s32.totalorder %s204, 15
        %s209 = scalar_select %p208, %s204, 15
        %p210 = scmp.lt.s32.totalorder %s205, 1
        %s211 = scalar_select %p210, %s205, 1
        %s212 = smul.addr %s209, 2
        %s213 = sadd.s32 %s211, %s212
        %s214 = smul.addr %s207, 32
        %s215 = sadd.s32 %s213, %s214
        %s216 = smul.addr %s215, 4
        %s217 = scalar_lea.vmem %s0, %s216
        %s218 = smul.u32 16, %s18
        %s219 = smul.u32 2, %s20
      $region20: #{_lambda_.25} parent=15 // pred_fallthru
        _
      // Predicated region
      $region21: #{_lambda_.25} parent=15 // pred_check
        %p220 = pneg %p88
      $region22: #{_lambda_.25} parent=15 // pred_check_branch
        %222 = sbr.rel (%p220) target = $region24
      $region23: #{_lambda_.25} parent=15 // pred_region
        %s223 = smul.u32 2, %s20
        %p224 = scmp.lt.s32.totalorder %s17, 3
        %s225 = scalar_select %p224, %s17, 3
        %p226 = scmp.lt.s32.totalorder %s223, 1
        %s227 = scalar_select %p226, %s223, 1
        %s228 = smul.addr %s225, 2
        %s229 = sadd.s32 %s227, %s228
        %s230 = scalar_lea.vmem %s1, %s229
        %s231 = smul.u32 2, %s20
      $region24: #{_lambda_.25} parent=15 // pred_fallthru
        _
      // Predicated region
      $region25: #{_lambda_.25} parent=15 // pred_check
        %p232 = pneg %p116
      $region26: #{_lambda_.25} parent=15 // pred_check_branch
        %234 = sbr.rel (%p232) target = $region28
      $region27: #{_lambda_.25} parent=15 // pred_region
        %s235 = smul.u32 2, %s20
        %p236 = scmp.lt.s32.totalorder %s17, 3
        %s237 = scalar_select %p236, %s17, 3
        %p238 = scmp.lt.s32.totalorder %s235, 1
        %s239 = scalar_select %p238, %s235, 1
        %s240 = smul.addr %s237, 2
        %s241 = sadd.s32 %s239, %s240
        %s242 = scalar_lea.vmem %s2, %s241
        %s243 = smul.u32 2, %s20
      $region28: #{_lambda_.25} parent=15 // pred_fallthru
        _
      // Predicated region
      $region29: #{_lambda_.25} parent=15 // pred_check
        %p244 = pneg %p146
      $region30: #{_lambda_.25} parent=15 // pred_check_branch
        %246 = sbr.rel (%p244) target = $region32
      $region31: #{_lambda_.25} parent=15 // pred_region
        %s247 = smul.u32 32, %s20
        %p248 = scmp.lt.s32.totalorder %s17, 3
        %s249 = scalar_select %p248, %s17, 3
        %p250 = scmp.lt.s32.totalorder %s247, 31
        %s251 = scalar_select %p250, %s247, 31
        %p252 = scmp.lt.s32.totalorder %s19, 0
        %s253 = scalar_select %p252, %s19, 0
        %s254 = sadd.s32 %s253, %s251
        %s255 = smul.addr %s249, 32
        %s256 = sadd.s32 %s254, %s255
        %s257 = smul.addr %s256, 4
        %s258 = scalar_lea.vmem %s3, %s257
        %s259 = smul.u32 32, %s20
      $region32: #{_lambda_.25} parent=15 // pred_fallthru
        _
    $region16: #{_lambda_.25} parent=5 // pred_fallthru
      _
    %p260 = scmp.le.s32.totalorder 1, %s10
    %p261 = scmp.lt.s32.totalorder %s10, 5
    %p262 = pnand %p260, %p261
    %p263 = pneg %p262
    // Predicated region
    $region33: #{_lambda_.25} parent=5 // pred_check
      _
    $region34: #{_lambda_.25} parent=5 // pred_check_branch
      %265 = sbr.rel (%p262) target = $region36
    $region35: #{_lambda_.25} parent=5 // pred_region
      %s266 = ssub.s32 %s10, 1
      %s267 = smul.u32 16, %s22
      %s268 = smul.u32 2, %s24
      %p269 = scmp.lt.s32.totalorder %s21, 3
      %s270 = scalar_select %p269, %s21, 3
      %p271 = scmp.lt.s32.totalorder %s267, 15
      %s272 = scalar_select %p271, %s267, 15
      %p273 = scmp.lt.s32.totalorder %s268, 1
      %s274 = scalar_select %p273, %s268, 1
      %s275 = smul.addr %s272, 2
      %s276 = sadd.s32 %s274, %s275
      %s277 = smul.addr %s270, 32
      %s278 = sadd.s32 %s276, %s277
      %s279 = smul.addr %s278, 4
      %s280 = scalar_lea.vmem %s0, %s279
      %p281 = pneg %p66
      %p282 = pneg %p63
      %s283 = smul.u32 2, %s24
      %p284 = scmp.lt.s32.totalorder %s21, 3
      %s285 = scalar_select %p284, %s21, 3
      %p286 = scmp.lt.s32.totalorder %s283, 1
      %s287 = scalar_select %p286, %s283, 1
      %s288 = smul.addr %s285, 2
      %s289 = sadd.s32 %s287, %s288
      %s290 = scalar_lea.vmem %s1, %s289
      %p291 = pneg %p94
      %p292 = pneg %p91
      %s293 = smul.u32 2, %s24
      %p294 = scmp.lt.s32.totalorder %s21, 3
      %s295 = scalar_select %p294, %s21, 3
      %p296 = scmp.lt.s32.totalorder %s293, 1
      %s297 = scalar_select %p296, %s293, 1
      %s298 = smul.addr %s295, 2
      %s299 = sadd.s32 %s297, %s298
      %s300 = scalar_lea.vmem %s2, %s299
      %p301 = pneg %p122
      %p302 = pneg %p119
      %s303 = smul.u32 32, %s24
      %p304 = scmp.lt.s32.totalorder %s21, 3
      %s305 = scalar_select %p304, %s21, 3
      %p306 = scmp.lt.s32.totalorder %s303, 31
      %s307 = scalar_select %p306, %s303, 31
      %p308 = scmp.lt.s32.totalorder %s23, 0
      %s309 = scalar_select %p308, %s23, 0
      %s310 = sadd.s32 %s309, %s307
      %s311 = smul.addr %s305, 32
      %s312 = sadd.s32 %s310, %s311
      %s313 = smul.addr %s312, 4
      %s314 = scalar_lea.vmem %s3, %s313
      %p315 = pneg %p152
      %p316 = pneg %p149
      %p317 = pneg %p182
      %p318 = pneg %p179
      %s319 = smul.u32 16, %s22
      %p320 = scmp.lt.s32.totalorder %s21, 3
      %s321 = scalar_select %p320, %s21, 3
      %p322 = scmp.lt.s32.totalorder %s319, 15
      %s323 = scalar_select %p322, %s319, 15
      %p324 = scmp.lt.s32.totalorder %s23, 0
      %s325 = scalar_select %p324, %s23, 0
      %s326 = sadd.s32 %s325, %s323
      %s327 = smul.addr %s321, 16
      %s328 = sadd.s32 %s326, %s327
      %s329 = smul.addr %s328, 8
      %s330 = scalar_lea.vmem %s4, %s329
      %s331 = smul.u32 16, %s22
      %s332 = smul.u32 2, %s24
      %p333 = scmp.lt.s32.totalorder %s21, 3
      %s334 = scalar_select %p333, %s21, 3
      %p335 = scmp.lt.s32.totalorder %s331, 15
      %s336 = scalar_select %p335, %s331, 15
      %p337 = scmp.lt.s32.totalorder %s332, 1
      %s338 = scalar_select %p337, %s332, 1
      %s339 = smul.addr %s336, 2
      %s340 = sadd.s32 %s338, %s339
      %s341 = smul.addr %s334, 32
      %s342 = sadd.s32 %s340, %s341
      %s343 = smul.addr %s342, 4
      %s344 = scalar_lea.vmem %s0, %s343
      %s345 = smul.u32 16, %s22
      %s346 = smul.u32 2, %s24
      %s347 = smul.u32 2, %s24
      %p348 = scmp.lt.s32.totalorder %s21, 3
      %s349 = scalar_select %p348, %s21, 3
      %p350 = scmp.lt.s32.totalorder %s347, 1
      %s351 = scalar_select %p350, %s347, 1
      %s352 = smul.addr %s349, 2
      %s353 = sadd.s32 %s351, %s352
      %s354 = scalar_lea.vmem %s1, %s353
      %s355 = smul.u32 2, %s24
      %s356 = smul.u32 2, %s24
      %p357 = scmp.lt.s32.totalorder %s21, 3
      %s358 = scalar_select %p357, %s21, 3
      %p359 = scmp.lt.s32.totalorder %s356, 1
      %s360 = scalar_select %p359, %s356, 1
      %s361 = smul.addr %s358, 2
      %s362 = sadd.s32 %s360, %s361
      %s363 = scalar_lea.vmem %s2, %s362
      %s364 = smul.u32 2, %s24
      %s365 = smul.u32 32, %s24
      %p366 = scmp.lt.s32.totalorder %s21, 3
      %s367 = scalar_select %p366, %s21, 3
      %p368 = scmp.lt.s32.totalorder %s365, 31
      %s369 = scalar_select %p368, %s365, 31
      %p370 = scmp.lt.s32.totalorder %s23, 0
      %s371 = scalar_select %p370, %s23, 0
      %s372 = sadd.s32 %s371, %s369
      %s373 = smul.addr %s367, 32
      %s374 = sadd.s32 %s372, %s373
      %s375 = smul.addr %s374, 4
      %s376 = scalar_lea.vmem %s3, %s375
      %s377 = smul.u32 32, %s24
      %s378 = smul.u32 16, %s22
      %p379 = scmp.lt.s32.totalorder %s21, 3
      %s380 = scalar_select %p379, %s21, 3
      %p381 = scmp.lt.s32.totalorder %s378, 15
      %s382 = scalar_select %p381, %s378, 15
      %p383 = scmp.lt.s32.totalorder %s23, 0
      %s384 = scalar_select %p383, %s23, 0
      %s385 = sadd.s32 %s384, %s382
      %s386 = smul.addr %s380, 16
      %s387 = sadd.s32 %s385, %s386
      %s388 = smul.addr %s387, 8
      %s389 = scalar_lea.vmem %s4, %s388
      %s390 = smul.u32 16, %s22
      %v392 = vld [vmem:[%s344] sm:$0xff]
      %v393 = vld [vmem:[%s344 + $0x8] sm:$0xff]
      %v394 = vld [vmem:[%s344 + $0x10] sm:$0xff]
      %v395 = vld [vmem:[%s344 + $0x18] sm:$0xff]
      %v396 = vld [vmem:[%s344 + $0x20] sm:$0xff]
      %v397 = vld [vmem:[%s344 + $0x28] sm:$0xff]
      %v398 = vld [vmem:[%s344 + $0x30] sm:$0xff]
      %v399 = vld [vmem:[%s344 + $0x38] sm:$0xff]
      %v400 = vld [vmem:[%s344 + $0x40] sm:$0xff]
      %v401 = vld [vmem:[%s344 + $0x48] sm:$0xff]
      %v402 = vld [vmem:[%s344 + $0x50] sm:$0xff]
      %v403 = vld [vmem:[%s344 + $0x58] sm:$0xff]
      %v404 = vld [vmem:[%s344 + $0x60] sm:$0xff]
      %v405 = vld [vmem:[%s344 + $0x68] sm:$0xff]
      %v406 = vld [vmem:[%s344 + $0x70] sm:$0xff]
      %v407 = vld [vmem:[%s344 + $0x78] sm:$0xff]
      %v408 = vunpack.c.l.bf16 %v392
      %v409 = vunpack.c.h.bf16 %v392
      %v410 = vunpack.c.l.bf16 %v393
      %v411 = vunpack.c.h.bf16 %v393
      %v412 = vunpack.c.l.bf16 %v394
      %v413 = vunpack.c.h.bf16 %v394
      %v414 = vunpack.c.l.bf16 %v395
      %v415 = vunpack.c.h.bf16 %v395
      %v416 = vunpack.c.l.bf16 %v396
      %v417 = vunpack.c.h.bf16 %v396
      %v418 = vunpack.c.l.bf16 %v397
      %v419 = vunpack.c.h.bf16 %v397
      %v420 = vunpack.c.l.bf16 %v398
      %v421 = vunpack.c.h.bf16 %v398
      %v422 = vunpack.c.l.bf16 %v399
      %v423 = vunpack.c.h.bf16 %v399
      %v424 = vunpack.c.l.bf16 %v400
      %v425 = vunpack.c.h.bf16 %v400
      %v426 = vunpack.c.l.bf16 %v401
      %v427 = vunpack.c.h.bf16 %v401
      %v428 = vunpack.c.l.bf16 %v402
      %v429 = vunpack.c.h.bf16 %v402
      %v430 = vunpack.c.l.bf16 %v403
      %v431 = vunpack.c.h.bf16 %v403
      %v432 = vunpack.c.l.bf16 %v404
      %v433 = vunpack.c.h.bf16 %v404
      %v434 = vunpack.c.l.bf16 %v405
      %v435 = vunpack.c.h.bf16 %v405
      %v436 = vunpack.c.l.bf16 %v406
      %v437 = vunpack.c.h.bf16 %v406
      %v438 = vunpack.c.l.bf16 %v407
      %v439 = vunpack.c.h.bf16 %v407
      %v440 = vld [vmem:[%s354] sm:$0x3]
      %v442 = vlaneseq
      %v443 = vshrl.u32 %v442, 7
      %v444 = vsub.s32 0, %v443
      %v445 = vrot.slane %v440, %v444
      %v446 = vlaneseq
      %v447 = vshrl.u32 %v446, 7
      %v448 = vsub.s32 1, %v447
      %v449 = vrot.slane %v440, %v448
      %v452 = vmul.f32 %v408, %v445
      %v453 = vmul.f32 %v409, %v449
      %v454 = vmul.f32 %v410, %v445
      %v455 = vmul.f32 %v411, %v449
      %v456 = vmul.f32 %v412, %v445
      %v457 = vmul.f32 %v413, %v449
      %v458 = vmul.f32 %v414, %v445
      %v459 = vmul.f32 %v415, %v449
      %v460 = vmul.f32 %v416, %v445
      %v461 = vmul.f32 %v417, %v449
      %v462 = vmul.f32 %v418, %v445
      %v463 = vmul.f32 %v419, %v449
      %v464 = vmul.f32 %v420, %v445
      %v465 = vmul.f32 %v421, %v449
      %v466 = vmul.f32 %v422, %v445
      %v467 = vmul.f32 %v423, %v449
      %v468 = vmul.f32 %v424, %v445
      %v469 = vmul.f32 %v425, %v449
      %v470 = vmul.f32 %v426, %v445
      %v471 = vmul.f32 %v427, %v449
      %v472 = vmul.f32 %v428, %v445
      %v473 = vmul.f32 %v429, %v449
      %v474 = vmul.f32 %v430, %v445
      %v475 = vmul.f32 %v431, %v449
      %v476 = vmul.f32 %v432, %v445
      %v477 = vmul.f32 %v433, %v449
      %v478 = vmul.f32 %v434, %v445
      %v479 = vmul.f32 %v435, %v449
      %v480 = vmul.f32 %v436, %v445
      %v481 = vmul.f32 %v437, %v449
      %v482 = vmul.f32 %v438, %v445
      %v483 = vmul.f32 %v439, %v449
      %v484 = vld [vmem:[%s363] sm:$0x3]
      %v486 = vlaneseq
      %v487 = vshrl.u32 %v486, 7
      %v488 = vsub.s32 0, %v487
      %v489 = vrot.slane %v484, %v488
      %v490 = vlaneseq
      %v491 = vshrl.u32 %v490, 7
      %v492 = vsub.s32 1, %v491
      %v493 = vrot.slane %v484, %v492
      %v496 = vadd.f32 %v452, %v489
      %v497 = vadd.f32 %v453, %v493
      %v498 = vadd.f32 %v454, %v489
      %v499 = vadd.f32 %v455, %v493
      %v500 = vadd.f32 %v456, %v489
      %v501 = vadd.f32 %v457, %v493
      %v502 = vadd.f32 %v458, %v489
      %v503 = vadd.f32 %v459, %v493
      %v504 = vadd.f32 %v460, %v489
      %v505 = vadd.f32 %v461, %v493
      %v506 = vadd.f32 %v462, %v489
      %v507 = vadd.f32 %v463, %v493
      %v508 = vadd.f32 %v464, %v489
      %v509 = vadd.f32 %v465, %v493
      %v510 = vadd.f32 %v466, %v489
      %v511 = vadd.f32 %v467, %v493
      %v512 = vadd.f32 %v468, %v489
      %v513 = vadd.f32 %v469, %v493
      %v514 = vadd.f32 %v470, %v489
      %v515 = vadd.f32 %v471, %v493
      %v516 = vadd.f32 %v472, %v489
      %v517 = vadd.f32 %v473, %v493
      %v518 = vadd.f32 %v474, %v489
      %v519 = vadd.f32 %v475, %v493
      %v520 = vadd.f32 %v476, %v489
      %v521 = vadd.f32 %v477, %v493
      %v522 = vadd.f32 %v478, %v489
      %v523 = vadd.f32 %v479, %v493
      %v524 = vadd.f32 %v480, %v489
      %v525 = vadd.f32 %v481, %v493
      %v526 = vadd.f32 %v482, %v489
      %v527 = vadd.f32 %v483, %v493
      %v528 = vmax.f32 %v496, 0.0
      %v529 = vmax.f32 %v497, 0.0
      %v530 = vmax.f32 %v498, 0.0
      %v531 = vmax.f32 %v499, 0.0
      %v532 = vmax.f32 %v500, 0.0
      %v533 = vmax.f32 %v501, 0.0
      %v534 = vmax.f32 %v502, 0.0
      %v535 = vmax.f32 %v503, 0.0
      %v536 = vmax.f32 %v504, 0.0
      %v537 = vmax.f32 %v505, 0.0
      %v538 = vmax.f32 %v506, 0.0
      %v539 = vmax.f32 %v507, 0.0
      %v540 = vmax.f32 %v508, 0.0
      %v541 = vmax.f32 %v509, 0.0
      %v542 = vmax.f32 %v510, 0.0
      %v543 = vmax.f32 %v511, 0.0
      %v544 = vmax.f32 %v512, 0.0
      %v545 = vmax.f32 %v513, 0.0
      %v546 = vmax.f32 %v514, 0.0
      %v547 = vmax.f32 %v515, 0.0
      %v548 = vmax.f32 %v516, 0.0
      %v549 = vmax.f32 %v517, 0.0
      %v550 = vmax.f32 %v518, 0.0
      %v551 = vmax.f32 %v519, 0.0
      %v552 = vmax.f32 %v520, 0.0
      %v553 = vmax.f32 %v521, 0.0
      %v554 = vmax.f32 %v522, 0.0
      %v555 = vmax.f32 %v523, 0.0
      %v556 = vmax.f32 %v524, 0.0
      %v557 = vmax.f32 %v525, 0.0
      %v558 = vmax.f32 %v526, 0.0
      %v559 = vmax.f32 %v527, 0.0
      %v560 = vpack.c.bf16 %v530, %v528
      %v561 = vpack.c.bf16 %v531, %v529
      %v562 = vpack.c.bf16 %v534, %v532
      %v563 = vpack.c.bf16 %v535, %v533
      %v564 = vpack.c.bf16 %v538, %v536
      %v565 = vpack.c.bf16 %v539, %v537
      %v566 = vpack.c.bf16 %v542, %v540
      %v567 = vpack.c.bf16 %v543, %v541
      %v568 = vpack.c.bf16 %v546, %v544
      %v569 = vpack.c.bf16 %v547, %v545
      %v570 = vpack.c.bf16 %v550, %v548
      %v571 = vpack.c.bf16 %v551, %v549
      %v572 = vpack.c.bf16 %v554, %v552
      %v573 = vpack.c.bf16 %v555, %v553
      %v574 = vpack.c.bf16 %v558, %v556
      %v575 = vpack.c.bf16 %v559, %v557
      %v576 = vld [vmem:[%s376] sm:$0xf]
      %v577 = vld [vmem:[%s376 + $0x4] sm:$0xf]
      %v578 = vld [vmem:[%s376 + $0x8] sm:$0xf]
      %v579 = vld [vmem:[%s376 + $0xc] sm:$0xf]
      %v580 = vld [vmem:[%s376 + $0x10] sm:$0xf]
      %v581 = vld [vmem:[%s376 + $0x14] sm:$0xf]
      %v582 = vld [vmem:[%s376 + $0x18] sm:$0xf]
      %v583 = vld [vmem:[%s376 + $0x1c] sm:$0xf]
      %v584 = vld [vmem:[%s376 + $0x20] sm:$0xf]
      %v585 = vld [vmem:[%s376 + $0x24] sm:$0xf]
      %v586 = vld [vmem:[%s376 + $0x28] sm:$0xf]
      %v587 = vld [vmem:[%s376 + $0x2c] sm:$0xf]
      %v588 = vld [vmem:[%s376 + $0x30] sm:$0xf]
      %v589 = vld [vmem:[%s376 + $0x34] sm:$0xf]
      %v590 = vld [vmem:[%s376 + $0x38] sm:$0xf]
      %v591 = vld [vmem:[%s376 + $0x3c] sm:$0xf]
      %v592 = vld [vmem:[%s376 + $0x40] sm:$0xf]
      %v593 = vld [vmem:[%s376 + $0x44] sm:$0xf]
      %v594 = vld [vmem:[%s376 + $0x48] sm:$0xf]
      %v595 = vld [vmem:[%s376 + $0x4c] sm:$0xf]
      %v596 = vld [vmem:[%s376 + $0x50] sm:$0xf]
      %v597 = vld [vmem:[%s376 + $0x54] sm:$0xf]
      %v598 = vld [vmem:[%s376 + $0x58] sm:$0xf]
      %v599 = vld [vmem:[%s376 + $0x5c] sm:$0xf]
      %v600 = vld [vmem:[%s376 + $0x60] sm:$0xf]
      %v601 = vld [vmem:[%s376 + $0x64] sm:$0xf]
      %v602 = vld [vmem:[%s376 + $0x68] sm:$0xf]
      %v603 = vld [vmem:[%s376 + $0x6c] sm:$0xf]
      %v604 = vld [vmem:[%s376 + $0x70] sm:$0xf]
      %v605 = vld [vmem:[%s376 + $0x74] sm:$0xf]
      %v606 = vld [vmem:[%s376 + $0x78] sm:$0xf]
      %v607 = vld [vmem:[%s376 + $0x7c] sm:$0xf]
      %v640 = vunpack.c.l.b16 %v576
      %v641 = vunpack.c.l.b16 %v577
      %v642 = vunpack.c.l.b16 %v578
      %v643 = vunpack.c.l.b16 %v579
      %v644 = vunpack.c.l.b16 %v580
      %v645 = vunpack.c.l.b16 %v581
      %v646 = vunpack.c.l.b16 %v582
      %v647 = vunpack.c.l.b16 %v583
      %v648 = vunpack.c.l.b16 %v584
      %v649 = vunpack.c.l.b16 %v585
      %v650 = vunpack.c.l.b16 %v586
      %v651 = vunpack.c.l.b16 %v587
      %v652 = vunpack.c.l.b16 %v588
      %v653 = vunpack.c.l.b16 %v589
      %v654 = vunpack.c.l.b16 %v590
      %v655 = vunpack.c.l.b16 %v591
      %v656 = vunpack.c.l.b16 %v592
      %v657 = vunpack.c.l.b16 %v593
      %v658 = vunpack.c.l.b16 %v594
      %v659 = vunpack.c.l.b16 %v595
      %v660 = vunpack.c.l.b16 %v596
      %v661 = vunpack.c.l.b16 %v597
      %v662 = vunpack.c.l.b16 %v598
      %v663 = vunpack.c.l.b16 %v599
      %v664 = vunpack.c.l.b16 %v600
      %v665 = vunpack.c.l.b16 %v601
      %v666 = vunpack.c.l.b16 %v602
      %v667 = vunpack.c.l.b16 %v603
      %v668 = vunpack.c.l.b16 %v604
      %v669 = vunpack.c.l.b16 %v605
      %v670 = vunpack.c.l.b16 %v606
      %v671 = vunpack.c.l.b16 %v607
      %v672 = vpack.c.b16 %v641, %v640
      %v673 = vpack.c.b16 %v643, %v642
      %v674 = vpack.c.b16 %v645, %v644
      %v675 = vpack.c.b16 %v647, %v646
      %v676 = vpack.c.b16 %v649, %v648
      %v677 = vpack.c.b16 %v651, %v650
      %v678 = vpack.c.b16 %v653, %v652
      %v679 = vpack.c.b16 %v655, %v654
      %v680 = vpack.c.b16 %v657, %v656
      %v681 = vpack.c.b16 %v659, %v658
      %v682 = vpack.c.b16 %v661, %v660
      %v683 = vpack.c.b16 %v663, %v662
      %v684 = vpack.c.b16 %v665, %v664
      %v685 = vpack.c.b16 %v667, %v666
      %v686 = vpack.c.b16 %v669, %v668
      %v687 = vpack.c.b16 %v671, %v670
      %704 = vmatprep.subr.bf16.mxu0 0
      %705 = vmatpush1.bf16.msra.mxu0 %v672
      %706 = vmatprep.subr.bf16.mxu0 0
      %707 = vmatpush1.bf16.msra.mxu0 %v673
      %708 = vmatprep.subr.bf16.mxu0 0
      %709 = vmatpush1.bf16.msra.mxu0 %v674
      %710 = vmatprep.subr.bf16.mxu0 0
      %711 = vmatpush1.bf16.msra.mxu0 %v675
      %712 = vmatprep.subr.bf16.mxu0 0
      %713 = vmatpush1.bf16.msra.mxu0 %v676
      %714 = vmatprep.subr.bf16.mxu0 0
      %715 = vmatpush1.bf16.msra.mxu0 %v677
      %716 = vmatprep.subr.bf16.mxu0 0
      %717 = vmatpush1.bf16.msra.mxu0 %v678
      %718 = vmatprep.subr.bf16.mxu0 0
      %719 = vmatpush1.bf16.msra.mxu0 %v679
      %720 = vmatprep.subr.bf16.mxu0 0
      %721 = vmatpush1.bf16.msra.mxu0 %v680
      %722 = vmatprep.subr.bf16.mxu0 0
      %723 = vmatpush1.bf16.msra.mxu0 %v681
      %724 = vmatprep.subr.bf16.mxu0 0
      %725 = vmatpush1.bf16.msra.mxu0 %v682
      %726 = vmatprep.subr.bf16.mxu0 0
      %727 = vmatpush1.bf16.msra.mxu0 %v683
      %728 = vmatprep.subr.bf16.mxu0 0
      %729 = vmatpush1.bf16.msra.mxu0 %v684
      %730 = vmatprep.subr.bf16.mxu0 0
      %731 = vmatpush1.bf16.msra.mxu0 %v685
      %732 = vmatprep.subr.bf16.mxu0 0
      %733 = vmatpush1.bf16.msra.mxu0 %v686
      %734 = vmatprep.subr.bf16.mxu0 0
      %735 = vmatpush1.bf16.msra.mxu0 %v687
      %736 = vmatprep.mubr.bf16.mxu0 %v561
      %737 = vmatmul.mubr.bf16.gmra.mrb[0].mxu0 %v560
      %v738 = vpop.f32.mrb[0].mxu0
      %v739 = vadd.f32 0.0, %v738
      %v740 = vpop.f32.mrb[0].mxu0
      %v741 = vpop.f32.mrb[0].mxu0
      %v742 = vadd.f32 0.0, %v741
      %v743 = vpop.f32.mrb[0].mxu0
      %744 = vmatprep.mubr.bf16.mxu0 %v563
      %745 = vmatmul.mubr.bf16.gmra.mrb[0].mxu0 %v562
      %v746 = vpop.f32.mrb[0].mxu0
      %v747 = vadd.f32 0.0, %v746
      %v748 = vpop.f32.mrb[0].mxu0
      %v749 = vpop.f32.mrb[0].mxu0
      %v750 = vadd.f32 0.0, %v749
      %v751 = vpop.f32.mrb[0].mxu0
      %752 = vmatprep.mubr.bf16.mxu0 %v565
      %753 = vmatmul.mubr.bf16.gmra.mrb[0].mxu0 %v564
      %v754 = vpop.f32.mrb[0].mxu0
      %v755 = vadd.f32 0.0, %v754
      %v756 = vpop.f32.mrb[0].mxu0
      %v757 = vpop.f32.mrb[0].mxu0
      %v758 = vadd.f32 0.0, %v757
      %v759 = vpop.f32.mrb[0].mxu0
      %760 = vmatprep.mubr.bf16.mxu0 %v567
      %761 = vmatmul.mubr.bf16.gmra.mrb[0].mxu0 %v566
      %v762 = vpop.f32.mrb[0].mxu0
      %v763 = vadd.f32 0.0, %v762
      %v764 = vpop.f32.mrb[0].mxu0
      %v765 = vpop.f32.mrb[0].mxu0
      %v766 = vadd.f32 0.0, %v765
      %v767 = vpop.f32.mrb[0].mxu0
      %768 = vmatprep.mubr.bf16.mxu0 %v569
      %769 = vmatmul.mubr.bf16.gmra.mrb[0].mxu0 %v568
      %v770 = vpop.f32.mrb[0].mxu0
      %v771 = vadd.f32 0.0, %v770
      %v772 = vpop.f32.mrb[0].mxu0
      %v773 = vpop.f32.mrb[0].mxu0
      %v774 = vadd.f32 0.0, %v773
      %v775 = vpop.f32.mrb[0].mxu0
      %776 = vmatprep.mubr.bf16.mxu0 %v571
      %777 = vmatmul.mubr.bf16.gmra.mrb[0].mxu0 %v570
      %v778 = vpop.f32.mrb[0].mxu0
      %v779 = vadd.f32 0.0, %v778
      %v780 = vpop.f32.mrb[0].mxu0
      %v781 = vpop.f32.mrb[0].mxu0
      %v782 = vadd.f32 0.0, %v781
      %v783 = vpop.f32.mrb[0].mxu0
      %784 = vmatprep.mubr.bf16.mxu0 %v573
      %785 = vmatmul.mubr.bf16.gmra.mrb[0].mxu0 %v572
      %v786 = vpop.f32.mrb[0].mxu0
      %v787 = vadd.f32 0.0, %v786
      %v788 = vpop.f32.mrb[0].mxu0
      %v789 = vpop.f32.mrb[0].mxu0
      %v790 = vadd.f32 0.0, %v789
      %v791 = vpop.f32.mrb[0].mxu0
      %792 = vmatprep.mubr.bf16.mxu0 %v575
      %793 = vmatmul.mubr.bf16.gmra.mrb[0].mxu0 %v574
      %v794 = vpop.f32.mrb[0].mxu0
      %v795 = vadd.f32 0.0, %v794
      %v796 = vpop.f32.mrb[0].mxu0
      %v797 = vpop.f32.mrb[0].mxu0
      %v798 = vadd.f32 0.0, %v797
      %v799 = vpop.f32.mrb[0].mxu0
      %800 = vdwg.mxu0
      %v801 = vlaneseq
      %v802 = vand.u32 %v801, 127
      %vm803 = vcmp.eq.s32.totalorder %v802, 0
      %p804 = scmp.eq.s32.totalorder %s23, 0
      // Predicated region
      $region37: #{_lambda_.25} parent=35 // pred_check
        %p805 = pneg %p804
      $region38: #{_lambda_.25} parent=35 // pred_check_branch
        %807 = sbr.rel (%p805) target = $region40
      $region39: #{_lambda_.25} parent=35 // pred_region
        %v808 = vmax.f32 %v739, 0.0
        %v809 = vmax.f32 %v742, 0.0
        %v810 = vmax.f32 %v747, 0.0
        %v811 = vmax.f32 %v750, 0.0
        %v812 = vmax.f32 %v755, 0.0
        %v813 = vmax.f32 %v758, 0.0
        %v814 = vmax.f32 %v763, 0.0
        %v815 = vmax.f32 %v766, 0.0
        %v816 = vmax.f32 %v771, 0.0
        %v817 = vmax.f32 %v774, 0.0
        %v818 = vmax.f32 %v779, 0.0
        %v819 = vmax.f32 %v782, 0.0
        %v820 = vmax.f32 %v787, 0.0
        %v821 = vmax.f32 %v790, 0.0
        %v822 = vmax.f32 %v795, 0.0
        %v823 = vmax.f32 %v798, 0.0
        %v824 = vand.u32 2147483647, %v739
        %v825 = vand.u32 2147483647, %v742
        %v826 = vand.u32 2147483647, %v747
        %v827 = vand.u32 2147483647, %v750
        %v828 = vand.u32 2147483647, %v755
        %v829 = vand.u32 2147483647, %v758
        %v830 = vand.u32 2147483647, %v763
        %v831 = vand.u32 2147483647, %v766
        %v832 = vand.u32 2147483647, %v771
        %v833 = vand.u32 2147483647, %v774
        %v834 = vand.u32 2147483647, %v779
        %v835 = vand.u32 2147483647, %v782
        %v836 = vand.u32 2147483647, %v787
        %v837 = vand.u32 2147483647, %v790
        %v838 = vand.u32 2147483647, %v795
        %v839 = vand.u32 2147483647, %v798
        %v840 = vsub.f32 0.0, %v824
        %v841 = vsub.f32 0.0, %v825
        %v842 = vsub.f32 0.0, %v826
        %v843 = vsub.f32 0.0, %v827
        %v844 = vsub.f32 0.0, %v828
        %v845 = vsub.f32 0.0, %v829
        %v846 = vsub.f32 0.0, %v830
        %v847 = vsub.f32 0.0, %v831
        %v848 = vsub.f32 0.0, %v832
        %v849 = vsub.f32 0.0, %v833
        %v850 = vsub.f32 0.0, %v834
        %v851 = vsub.f32 0.0, %v835
        %v852 = vsub.f32 0.0, %v836
        %v853 = vsub.f32 0.0, %v837
        %v854 = vsub.f32 0.0, %v838
        %v855 = vsub.f32 0.0, %v839
        %v856 = vmul.f32 %v840, 1.442695
        %v857 = vpow.pop %v856
        %v858 = vmul.f32 %v841, 1.442695
        %v859 = vpow.pop %v858
        %v860 = vmul.f32 %v842, 1.442695
        %v861 = vpow.pop %v860
        %v862 = vmul.f32 %v843, 1.442695
        %v863 = vpow.pop %v862
        %v864 = vmul.f32 %v844, 1.442695
        %v865 = vpow.pop %v864
        %v866 = vmul.f32 %v845, 1.442695
        %v867 = vpow.pop %v866
        %v868 = vmul.f32 %v846, 1.442695
        %v869 = vpow.pop %v868
        %v870 = vmul.f32 %v847, 1.442695
        %v871 = vpow.pop %v870
        %v872 = vmul.f32 %v848, 1.442695
        %v873 = vpow.pop %v872
        %v874 = vmul.f32 %v849, 1.442695
        %v875 = vpow.pop %v874
        %v876 = vmul.f32 %v850, 1.442695
        %v877 = vpow.pop %v876
        %v878 = vmul.f32 %v851, 1.442695
        %v879 = vpow.pop %v878
        %v880 = vmul.f32 %v852, 1.442695
        %v881 = vpow.pop %v880
        %v882 = vmul.f32 %v853, 1.442695
        %v883 = vpow.pop %v882
        %v884 = vmul.f32 %v854, 1.442695
        %v885 = vpow.pop %v884
        %v886 = vmul.f32 %v855, 1.442695
        %v887 = vpow.pop %v886
        %v888 = vadd.f32 %v857, 1.0
        %v889 = vlog2.pop %v888
        %v890 = vmul.f32 %v889, 0.6931472
        %v891 = vmul.f32 -0.5, %v857
        %v892 = vadd.f32 %v891, 1.0
        %v893 = vmul.f32 %v892, %v857
        %v894 = vand.u32 2147483647, %v857
        %vm895 = vcmp.lt.f32.partialorder %v894, 0.0004427343
        %v896 = vsel %vm895, %v893, %v890
        %v897 = vadd.f32 %v859, 1.0
        %v898 = vlog2.pop %v897
        %v899 = vmul.f32 %v898, 0.6931472
        %v900 = vmul.f32 -0.5, %v859
        %v901 = vadd.f32 %v900, 1.0
        %v902 = vmul.f32 %v901, %v859
        %v903 = vand.u32 2147483647, %v859
        %vm904 = vcmp.lt.f32.partialorder %v903, 0.0004427343
        %v905 = vsel %vm904, %v902, %v899
        %v906 = vadd.f32 %v861, 1.0
        %v907 = vlog2.pop %v906
        %v908 = vmul.f32 %v907, 0.6931472
        %v909 = vmul.f32 -0.5, %v861
        %v910 = vadd.f32 %v909, 1.0
        %v911 = vmul.f32 %v910, %v861
        %v912 = vand.u32 2147483647, %v861
        %vm913 = vcmp.lt.f32.partialorder %v912, 0.0004427343
        %v914 = vsel %vm913, %v911, %v908
        %v915 = vadd.f32 %v863, 1.0
        %v916 = vlog2.pop %v915
        %v917 = vmul.f32 %v916, 0.6931472
        %v918 = vmul.f32 -0.5, %v863
        %v919 = vadd.f32 %v918, 1.0
        %v920 = vmul.f32 %v919, %v863
        %v921 = vand.u32 2147483647, %v863
        %vm922 = vcmp.lt.f32.partialorder %v921, 0.0004427343
        %v923 = vsel %vm922, %v920, %v917
        %v924 = vadd.f32 %v865, 1.0
        %v925 = vlog2.pop %v924
        %v926 = vmul.f32 %v925, 0.6931472
        %v927 = vmul.f32 -0.5, %v865
        %v928 = vadd.f32 %v927, 1.0
        %v929 = vmul.f32 %v928, %v865
        %v930 = vand.u32 2147483647, %v865
        %vm931 = vcmp.lt.f32.partialorder %v930, 0.0004427343
        %v932 = vsel %vm931, %v929, %v926
        %v933 = vadd.f32 %v867, 1.0
        %v934 = vlog2.pop %v933
        %v935 = vmul.f32 %v934, 0.6931472
        %v936 = vmul.f32 -0.5, %v867
        %v937 = vadd.f32 %v936, 1.0
        %v938 = vmul.f32 %v937, %v867
        %v939 = vand.u32 2147483647, %v867
        %vm940 = vcmp.lt.f32.partialorder %v939, 0.0004427343
        %v941 = vsel %vm940, %v938, %v935
        %v942 = vadd.f32 %v869, 1.0
        %v943 = vlog2.pop %v942
        %v944 = vmul.f32 %v943, 0.6931472
        %v945 = vmul.f32 -0.5, %v869
        %v946 = vadd.f32 %v945, 1.0
        %v947 = vmul.f32 %v946, %v869
        %v948 = vand.u32 2147483647, %v869
        %vm949 = vcmp.lt.f32.partialorder %v948, 0.0004427343
        %v950 = vsel %vm949, %v947, %v944
        %v951 = vadd.f32 %v871, 1.0
        %v952 = vlog2.pop %v951
        %v953 = vmul.f32 %v952, 0.6931472
        %v954 = vmul.f32 -0.5, %v871
        %v955 = vadd.f32 %v954, 1.0
        %v956 = vmul.f32 %v955, %v871
        %v957 = vand.u32 2147483647, %v871
        %vm958 = vcmp.lt.f32.partialorder %v957, 0.0004427343
        %v959 = vsel %vm958, %v956, %v953
        %v960 = vadd.f32 %v873, 1.0
        %v961 = vlog2.pop %v960
        %v962 = vmul.f32 %v961, 0.6931472
        %v963 = vmul.f32 -0.5, %v873
        %v964 = vadd.f32 %v963, 1.0
        %v965 = vmul.f32 %v964, %v873
        %v966 = vand.u32 2147483647, %v873
        %vm967 = vcmp.lt.f32.partialorder %v966, 0.0004427343
        %v968 = vsel %vm967, %v965, %v962
        %v969 = vadd.f32 %v875, 1.0
        %v970 = vlog2.pop %v969
        %v971 = vmul.f32 %v970, 0.6931472
        %v972 = vmul.f32 -0.5, %v875
        %v973 = vadd.f32 %v972, 1.0
        %v974 = vmul.f32 %v973, %v875
        %v975 = vand.u32 2147483647, %v875
        %vm976 = vcmp.lt.f32.partialorder %v975, 0.0004427343
        %v977 = vsel %vm976, %v974, %v971
        %v978 = vadd.f32 %v877, 1.0
        %v979 = vlog2.pop %v978
        %v980 = vmul.f32 %v979, 0.6931472
        %v981 = vmul.f32 -0.5, %v877
        %v982 = vadd.f32 %v981, 1.0
        %v983 = vmul.f32 %v982, %v877
        %v984 = vand.u32 2147483647, %v877
        %vm985 = vcmp.lt.f32.partialorder %v984, 0.0004427343
        %v986 = vsel %vm985, %v983, %v980
        %v987 = vadd.f32 %v879, 1.0
        %v988 = vlog2.pop %v987
        %v989 = vmul.f32 %v988, 0.6931472
        %v990 = vmul.f32 -0.5, %v879
        %v991 = vadd.f32 %v990, 1.0
        %v992 = vmul.f32 %v991, %v879
        %v993 = vand.u32 2147483647, %v879
        %vm994 = vcmp.lt.f32.partialorder %v993, 0.0004427343
        %v995 = vsel %vm994, %v992, %v989
        %v996 = vadd.f32 %v881, 1.0
        %v997 = vlog2.pop %v996
        %v998 = vmul.f32 %v997, 0.6931472
        %v999 = vmul.f32 -0.5, %v881
        %v1000 = vadd.f32 %v999, 1.0
        %v1001 = vmul.f32 %v1000, %v881
        %v1002 = vand.u32 2147483647, %v881
        %vm1003 = vcmp.lt.f32.partialorder %v1002, 0.0004427343
        %v1004 = vsel %vm1003, %v1001, %v998
        %v1005 = vadd.f32 %v883, 1.0
        %v1006 = vlog2.pop %v1005
        %v1007 = vmul.f32 %v1006, 0.6931472
        %v1008 = vmul.f32 -0.5, %v883
        %v1009 = vadd.f32 %v1008, 1.0
        %v1010 = vmul.f32 %v1009, %v883
        %v1011 = vand.u32 2147483647, %v883
        %vm1012 = vcmp.lt.f32.partialorder %v1011, 0.0004427343
        %v1013 = vsel %vm1012, %v1010, %v1007
        %v1014 = vadd.f32 %v885, 1.0
        %v1015 = vlog2.pop %v1014
        %v1016 = vmul.f32 %v1015, 0.6931472
        %v1017 = vmul.f32 -0.5, %v885
        %v1018 = vadd.f32 %v1017, 1.0
        %v1019 = vmul.f32 %v1018, %v885
        %v1020 = vand.u32 2147483647, %v885
        %vm1021 = vcmp.lt.f32.partialorder %v1020, 0.0004427343
        %v1022 = vsel %vm1021, %v1019, %v1016
        %v1023 = vadd.f32 %v887, 1.0
        %v1024 = vlog2.pop %v1023
        %v1025 = vmul.f32 %v1024, 0.6931472
        %v1026 = vmul.f32 -0.5, %v887
        %v1027 = vadd.f32 %v1026, 1.0
        %v1028 = vmul.f32 %v1027, %v887
        %v1029 = vand.u32 2147483647, %v887
        %vm1030 = vcmp.lt.f32.partialorder %v1029, 0.0004427343
        %v1031 = vsel %vm1030, %v1028, %v1025
        %v1032 = vadd.f32 %v808, %v896
        %v1033 = vadd.f32 %v809, %v905
        %v1034 = vadd.f32 %v810, %v914
        %v1035 = vadd.f32 %v811, %v923
        %v1036 = vadd.f32 %v812, %v932
        %v1037 = vadd.f32 %v813, %v941
        %v1038 = vadd.f32 %v814, %v950
        %v1039 = vadd.f32 %v815, %v959
        %v1040 = vadd.f32 %v816, %v968
        %v1041 = vadd.f32 %v817, %v977
        %v1042 = vadd.f32 %v818, %v986
        %v1043 = vadd.f32 %v819, %v995
        %v1044 = vadd.f32 %v820, %v1004
        %v1045 = vadd.f32 %v821, %v1013
        %v1046 = vadd.f32 %v822, %v1022
        %v1047 = vadd.f32 %v823, %v1031
        %v1048 = vsel %vm803, %v1032, %v739
        %v1049 = vsel %vm803, %v1033, %v742
        %v1050 = vsel %vm803, %v1034, %v747
        %v1051 = vsel %vm803, %v1035, %v750
        %v1052 = vsel %vm803, %v1036, %v755
        %v1053 = vsel %vm803, %v1037, %v758
        %v1054 = vsel %vm803, %v1038, %v763
        %v1055 = vsel %vm803, %v1039, %v766
        %v1056 = vsel %vm803, %v1040, %v771
        %v1057 = vsel %vm803, %v1041, %v774
        %v1058 = vsel %vm803, %v1042, %v779
        %v1059 = vsel %vm803, %v1043, %v782
        %v1060 = vsel %vm803, %v1044, %v787
        %v1061 = vsel %vm803, %v1045, %v790
        %v1062 = vsel %vm803, %v1046, %v795
        %v1063 = vsel %vm803, %v1047, %v798
        %1064 = vst [vmem:[%s389] sm:$0xff] %v1048
        %1065 = vst [vmem:[%s389 + $0x8] sm:$0xff] %v1049
        %1066 = vst [vmem:[%s389 + $0x10] sm:$0xff] %v1050
        %1067 = vst [vmem:[%s389 + $0x18] sm:$0xff] %v1051
        %1068 = vst [vmem:[%s389 + $0x20] sm:$0xff] %v1052
        %1069 = vst [vmem:[%s389 + $0x28] sm:$0xff] %v1053
        %1070 = vst [vmem:[%s389 + $0x30] sm:$0xff] %v1054
        %1071 = vst [vmem:[%s389 + $0x38] sm:$0xff] %v1055
        %1072 = vst [vmem:[%s389 + $0x40] sm:$0xff] %v1056
        %1073 = vst [vmem:[%s389 + $0x48] sm:$0xff] %v1057
        %1074 = vst [vmem:[%s389 + $0x50] sm:$0xff] %v1058
        %1075 = vst [vmem:[%s389 + $0x58] sm:$0xff] %v1059
        %1076 = vst [vmem:[%s389 + $0x60] sm:$0xff] %v1060
        %1077 = vst [vmem:[%s389 + $0x68] sm:$0xff] %v1061
        %1078 = vst [vmem:[%s389 + $0x70] sm:$0xff] %v1062
        %1079 = vst [vmem:[%s389 + $0x78] sm:$0xff] %v1063
      $region40: #{_lambda_.25} parent=35 // pred_fallthru
        _
      %p1080 = scmp.ne.s32.totalorder %s23, 0
      // Predicated region
      $region41: #{_lambda_.25} parent=35 // pred_check
        %p1081 = pneg %p1080
      $region42: #{_lambda_.25} parent=35 // pred_check_branch
        %1083 = sbr.rel (%p1081) target = $region44
      $region43: #{_lambda_.25} parent=35 // pred_region
        %1084 = vst [vmem:[%s389] sm:$0xff] %v739
        %1085 = vst [vmem:[%s389 + $0x8] sm:$0xff] %v742
        %1086 = vst [vmem:[%s389 + $0x10] sm:$0xff] %v747
        %1087 = vst [vmem:[%s389 + $0x18] sm:$0xff] %v750
        %1088 = vst [vmem:[%s389 + $0x20] sm:$0xff] %v755
        %1089 = vst [vmem:[%s389 + $0x28] sm:$0xff] %v758
        %1090 = vst [vmem:[%s389 + $0x30] sm:$0xff] %v763
        %1091 = vst [vmem:[%s389 + $0x38] sm:$0xff] %v766
        %1092 = vst [vmem:[%s389 + $0x40] sm:$0xff] %v771
        %1093 = vst [vmem:[%s389 + $0x48] sm:$0xff] %v774
        %1094 = vst [vmem:[%s389 + $0x50] sm:$0xff] %v779
        %1095 = vst [vmem:[%s389 + $0x58] sm:$0xff] %v782
        %1096 = vst [vmem:[%s389 + $0x60] sm:$0xff] %v787
        %1097 = vst [vmem:[%s389 + $0x68] sm:$0xff] %v790
        %1098 = vst [vmem:[%s389 + $0x70] sm:$0xff] %v795
        %1099 = vst [vmem:[%s389 + $0x78] sm:$0xff] %v798
      $region44: #{_lambda_.25} parent=35 // pred_fallthru
        _
      %s1100 = smul.u32 16, %s22
      %p1101 = scmp.lt.s32.totalorder %s21, 3
      %s1102 = scalar_select %p1101, %s21, 3
      %p1103 = scmp.lt.s32.totalorder %s1100, 15
      %s1104 = scalar_select %p1103, %s1100, 15
      %p1105 = scmp.lt.s32.totalorder %s23, 0
      %s1106 = scalar_select %p1105, %s23, 0
      %s1107 = sadd.s32 %s1106, %s1104
      %s1108 = smul.addr %s1102, 16
      %s1109 = sadd.s32 %s1107, %s1108
      %s1110 = smul.addr %s1109, 8
      %s1111 = scalar_lea.vmem %s4, %s1110
      // Predicated region
      $region45: #{_lambda_.25} parent=35 // pred_check
        %p1112 = pneg %p179
      $region46: #{_lambda_.25} parent=35 // pred_check_branch
        %1114 = sbr.rel (%p1112) target = $region48
      $region47: #{_lambda_.25} parent=35 // pred_region
        %s1115 = smul.u32 16, %s22
      $region48: #{_lambda_.25} parent=35 // pred_fallthru
        _
    $region36: #{_lambda_.25} parent=5 // pred_fallthru
      _
    %p1116 = scmp.le.s32.totalorder 2, %s10
    // Predicated region
    $region49: #{_lambda_.25} parent=5 // pred_check
      %p1117 = pneg %p1116
    $region50: #{_lambda_.25} parent=5 // pred_check_branch
      %1119 = sbr.rel (%p1117) target = $region52
    $region51: #{_lambda_.25} parent=5 // pred_region
      %s1120 = ssub.s32 %s10, 2
      // Predicated region
      $region53: #{_lambda_.25} parent=51 // pred_check
        %p1121 = pneg %p185
      $region54: #{_lambda_.25} parent=51 // pred_check_branch
        %1123 = sbr.rel (%p1121) target = $region56
      $region55: #{_lambda_.25} parent=51 // pred_region
        %s1124 = smul.u32 16, %s26
        %p1125 = scmp.lt.s32.totalorder %s25, 3
        %s1126 = scalar_select %p1125, %s25, 3
        %p1127 = scmp.lt.s32.totalorder %s1124, 15
        %s1128 = scalar_select %p1127, %s1124, 15
        %p1129 = scmp.lt.s32.totalorder %s27, 0
        %s1130 = scalar_select %p1129, %s27, 0
        %s1131 = sadd.s32 %s1130, %s1128
        %s1132 = smul.addr %s1126, 16
        %s1133 = sadd.s32 %s1131, %s1132
        %s1134 = smul.addr %s1133, 8
        %s1135 = scalar_lea.vmem %s4, %s1134
      $region56: #{_lambda_.25} parent=51 // pred_fallthru
        _
    $region52: #{_lambda_.25} parent=5 // pred_fallthru
      _
  $region6: #{_lambda_.25} parent=0 // loop_footer
    %s14 = sadd.s32 1, %s10
  $region7: #{_lambda_.25} parent=0 // loop_footer_branch
    %9 = sbr.rel target = $region3
  $region8: #{_lambda_.25} parent=0 // loop_exit
    _

</llo_original>
